<compile_context>
chip_gen: v5e
topology: v5e:2x2
jax: 0.10.0
libtpu: 0.0.40
codegen_flags: <defaults>
</compile_context>

<pallas_src>
import functools

import numpy as np
import jax
import jax.numpy as jnp
from jax.experimental import pallas as pl
from jax.experimental.pallas import tpu as pltpu


# ----------------------------------------------------------------------------
# Pallas kernel: one voxel tile per grid step (batch-invariant).
# ----------------------------------------------------------------------------
def _sinpe3d_kernel(Y, Z, TN, p_ref, o_ref):
    # ---- lane-only coordinate decode (hoisted off the channel axis) --------
    tile = pl.program_id(0)
    v = (jax.lax.broadcasted_iota(jnp.int32, (1, TN), 1) + tile * TN
         ).astype(jnp.float32)

    yz = float(Y * Z)
    zf = float(Z)
    inv_yz = float(1.0 / (Y * Z))
    inv_z = float(1.0 / Z)

    # Reciprocal-multiply decode + one-op floor correction.  Exact for any
    # integer-valued v (volumes < 2**24 voxels).
    # TODO(synk): switch to an i32 decode for volumes >= 2**24 voxels.
    xi = jnp.floor(v * inv_yz)
    rem = v - xi * yz
    adj = jnp.where(rem >= yz, 1.0, jnp.where(rem < 0.0, -1.0, 0.0))
    xi = xi + adj
    rem = rem - adj * yz

    yj = jnp.floor(rem * inv_z)
    zk = rem - yj * zf
    adj = jnp.where(zk >= zf, 1.0, jnp.where(zk < 0.0, -1.0, 0.0))
    yj = yj + adj
    zk = zk - adj * zf

    # ---- per-channel params, broadcast along lanes (cheap VPU direction) ---
    p = p_ref[...]                 # (C, 4) = [fx, fy, fz, phase]
    fx = p[:, 0:1]
    fy = p[:, 1:2]
    fz = p[:, 2:3]
    phase = p[:, 3:4]

    # Exactly one of fx/fy/fz is non-zero per channel -> one FMA chain both
    # selects the coordinate axis and applies the frequency; the +pi/2 phase
    # turns cos channels into sin, so ONE transcendental per element.
    arg = fx * xi + fy * yj + fz * zk + phase
    o_ref[...] = jnp.sin(arg).astype(o_ref.dtype)


# ----------------------------------------------------------------------------
# Per-channel parameter table: (C, 4) = [freq_x, freq_y, freq_z, phase].
# ----------------------------------------------------------------------------
def _channel_params(channels, C):
    ch = int(np.ceil(channels / 6) * 2)
    if ch % 2:
        ch += 1
    half = ch // 2
    if C > 3 * ch:
        raise ValueError(
            f"input has {C} channels but the encoding only provides {3 * ch}")
    inv_freq = (1.0 / (10000.0 **
                       (np.arange(0, ch, 2, dtype=np.float32) /
                        np.float32(ch)))).astype(np.float32)
    c = np.arange(C)
    seg = c // ch                      # 0 -> x axis, 1 -> y axis, 2 -> z axis
    r = c % ch
    is_cos = r >= half
    freq = inv_freq[np.where(r < half, r, r - half)]
    fx = np.where(seg == 0, freq, 0.0)
    fy = np.where(seg == 1, freq, 0.0)
    fz = np.where(seg == 2, freq, 0.0)
    phase = np.where(is_cos, np.pi / 2, 0.0)     # cos(x) == sin(x + pi/2)
    return np.stack([fx, fy, fz, phase], axis=1).astype(np.float32)   # (C, 4)


def _pick_tile_n(N, C, *, min_tiles=2, block_bytes=8 * 1024 * 1024):
    """Largest lane-dense tile that (a) keeps blocks ~<= block_bytes and
    (b) leaves at least `min_tiles` grid steps so v7x's two TCs both get work."""
    if N <= 128:
        return N                                   # single full-array block
    budget = max(128, (block_bytes // (4 * max(C, 8))) // 128 * 128)
    cap = min(budget, max(128, (N // min_tiles) // 128 * 128))
    if N % 128 == 0:
        best = 128                                 # 128 always divides N here
        for t in range(128, cap + 1, 128):
            if N % t == 0:
                best = t
        return best                                # exact divisor: no masked tail
    return cap                                     # cdiv grid; Pallas masks tail


def sin_positional_encoding_3d(x, channels, *, tile_n=None):
    """x: (B, C, X, Y, Z) array (channels-first, like the torch module).
    Returns the positional encoding of shape (B, C, X, Y, Z), dtype of x.
    Only the shape/dtype of x are used (matching the torch forward)."""
    B, C, X, Y, Z = x.shape
    N = X * Y * Z
    if N >= (1 << 24):
        # TODO(synk): i32 coordinate decode for volumes >= 2**24 voxels.
        raise ValueError("float coordinate decode requires X*Y*Z < 2**24")

    params = jnp.asarray(_channel_params(channels, C))

    if tile_n is None:
        tile_n = _pick_tile_n(N, C)
    n_tiles = pl.cdiv(N, tile_n)

    kernel = functools.partial(_sinpe3d_kernel, Y, Z, tile_n)

    enc = pl.pallas_call(
        kernel,
        out_shape=jax.ShapeDtypeStruct((C, N), x.dtype),
        grid_spec=pltpu.PrefetchScalarGridSpec(
            num_scalar_prefetch=0,
            grid=(n_tiles,),
            in_specs=[pl.BlockSpec((C, 4), lambda t: (0, 0))],
            out_specs=pl.BlockSpec((C, tile_n), lambda t: (0, t)),
        ),
        compiler_params=pltpu.CompilerParams(
            dimension_semantics=("parallel",),
            vmem_limit_bytes=32 * 1024 * 1024),
    )(params)

    # Batch-invariant result: contiguous reshape (no transpose / copy), then a
    # broadcast over B that the consumer can fuse.
    return jnp.broadcast_to(enc.reshape(1, C, X, Y, Z), (B, C, X, Y, Z))


# ----------------------------------------------------------------------------
# Pure-JAX reference (mirrors the torch module) for a correctness check.
# ----------------------------------------------------------------------------
def sin_positional_encoding_3d_reference(x, channels):
    B, C, X, Y, Z = x.shape
    ch = int(np.ceil(channels / 6) * 2)
    if ch % 2:
        ch += 1
    inv_freq = 1.0 / (10000.0 ** (jnp.arange(0, ch, 2, dtype=jnp.float32) / ch))
    pos_x = jnp.arange(X, dtype=jnp.float32)
    pos_y = jnp.arange(Y, dtype=jnp.float32)
    pos_z = jnp.arange(Z, dtype=jnp.float32)
    sx = pos_x[:, None] * inv_freq[None, :]
    sy = pos_y[:, None] * inv_freq[None, :]
    sz = pos_z[:, None] * inv_freq[None, :]
    ex = jnp.concatenate([jnp.sin(sx), jnp.cos(sx)], axis=-1)   # (X, ch)
    ey = jnp.concatenate([jnp.sin(sy), jnp.cos(sy)], axis=-1)   # (Y, ch)
    ez = jnp.concatenate([jnp.sin(sz), jnp.cos(sz)], axis=-1)   # (Z, ch)
    emb = jnp.concatenate([
        jnp.broadcast_to(ex[:, None, None, :], (X, Y, Z, ch)),
        jnp.broadcast_to(ey[None, :, None, :], (X, Y, Z, ch)),
        jnp.broadcast_to(ez[None, None, :, :], (X, Y, Z, ch)),
    ], axis=-1)                                                  # (X,Y,Z,3*ch)
    emb = jnp.broadcast_to(emb[None, ..., :C], (B, X, Y, Z, C)).astype(x.dtype)
    return jnp.transpose(emb, (0, 4, 1, 2, 3))                   # (B,C,X,Y,Z)


if __name__ == "__main__":
    B, C, S = 2, 12, 16            # C = 12 exercises the x, y and z segments
    key = jax.random.PRNGKey(0)
    x = jax.random.normal(key, (B, C, S, S, S), jnp.float32)

    out = sin_positional_encoding_3d(x, channels=C)
    out = jax.block_until_ready(out)

    ref = sin_positional_encoding_3d_reference(x, channels=C)
    ref = jax.block_until_ready(ref)

    assert out.shape == (B, C, S, S, S), out.shape
    max_err = float(jnp.max(jnp.abs(out - ref)))
    assert jnp.allclose(out, ref, atol=1e-4, rtol=1e-4), max_err

    print("KERNEL_OK")
</pallas_src>

<mosaic_0001>
module attributes {stable_mosaic.version = 11 : i64} {
  func.func @_sinpe3d_kernel(%arg0: i32, %arg1: memref<12x4xf32, #tpu.memory_space<vmem>>, %arg2: memref<12x2048xf32, #tpu.memory_space<vmem>>) attributes {dimension_semantics = [#tpu.dimension_semantics<parallel>], iteration_bounds = array<i64: 2>, scalar_prefetch = 0 : i64, scratch_operands = 0 : i64, tpu.core_type = #tpu.core_type<tc>, window_params = [{pipeline_mode = #tpu.pipeline_mode<synchronous>, transform_indices = @transform_0, window_bounds = array<i64: 12, 4>}, {transform_indices = @transform_1, window_bounds = array<i64: 12, 2048>}]} {
    %0 = tpu.iota {dimensions = array<i32: 1>} : vector<1x2048xi32>
    %c2048_i32 = arith.constant 2048 : i32
    %1 = arith.muli %arg0, %c2048_i32 : i32
    %2 = vector.broadcast %1 : i32 to vector<1x2048xi32>
    %3 = arith.addi %0, %2 : vector<1x2048xi32>
    %4 = arith.sitofp %3 : vector<1x2048xi32> to vector<1x2048xf32>
    %cst = arith.constant 3.906250e-03 : f32
    %5 = vector.broadcast %cst : f32 to vector<1x2048xf32>
    %6 = arith.mulf %4, %5 : vector<1x2048xf32>
    %7 = math.floor %6 : vector<1x2048xf32>
    %cst_0 = arith.constant 2.560000e+02 : f32
    %8 = vector.broadcast %cst_0 : f32 to vector<1x2048xf32>
    %9 = arith.mulf %7, %8 : vector<1x2048xf32>
    %10 = arith.subf %4, %9 : vector<1x2048xf32>
    %cst_1 = arith.constant 2.560000e+02 : f32
    %11 = vector.broadcast %cst_1 : f32 to vector<1x2048xf32>
    %12 = arith.cmpf oge, %10, %11 : vector<1x2048xf32>
    %cst_2 = arith.constant 0.000000e+00 : f32
    %13 = vector.broadcast %cst_2 : f32 to vector<1x2048xf32>
    %14 = arith.cmpf olt, %10, %13 : vector<1x2048xf32>
    %cst_3 = arith.constant -1.000000e+00 : f32
    %cst_4 = arith.constant 0.000000e+00 : f32
    %15 = vector.broadcast %cst_3 : f32 to vector<1x2048xf32>
    %16 = vector.broadcast %cst_4 : f32 to vector<1x2048xf32>
    %17 = arith.select %14, %15, %16 : vector<1x2048xi1>, vector<1x2048xf32>
    %cst_5 = arith.constant 1.000000e+00 : f32
    %18 = vector.broadcast %cst_5 : f32 to vector<1x2048xf32>
    %19 = arith.select %12, %18, %17 : vector<1x2048xi1>, vector<1x2048xf32>
    %20 = arith.addf %7, %19 : vector<1x2048xf32>
    %cst_6 = arith.constant 2.560000e+02 : f32
    %21 = vector.broadcast %cst_6 : f32 to vector<1x2048xf32>
    %22 = arith.mulf %19, %21 : vector<1x2048xf32>
    %23 = arith.subf %10, %22 : vector<1x2048xf32>
    %cst_7 = arith.constant 6.250000e-02 : f32
    %24 = vector.broadcast %cst_7 : f32 to vector<1x2048xf32>
    %25 = arith.mulf %23, %24 : vector<1x2048xf32>
    %26 = math.floor %25 : vector<1x2048xf32>
    %cst_8 = arith.constant 1.600000e+01 : f32
    %27 = vector.broadcast %cst_8 : f32 to vector<1x2048xf32>
    %28 = arith.mulf %26, %27 : vector<1x2048xf32>
    %29 = arith.subf %23, %28 : vector<1x2048xf32>
    %cst_9 = arith.constant 1.600000e+01 : f32
    %30 = vector.broadcast %cst_9 : f32 to vector<1x2048xf32>
    %31 = arith.cmpf oge, %29, %30 : vector<1x2048xf32>
    %cst_10 = arith.constant 0.000000e+00 : f32
    %32 = vector.broadcast %cst_10 : f32 to vector<1x2048xf32>
    %33 = arith.cmpf olt, %29, %32 : vector<1x2048xf32>
    %cst_11 = arith.constant -1.000000e+00 : f32
    %cst_12 = arith.constant 0.000000e+00 : f32
    %34 = vector.broadcast %cst_11 : f32 to vector<1x2048xf32>
    %35 = vector.broadcast %cst_12 : f32 to vector<1x2048xf32>
    %36 = arith.select %33, %34, %35 : vector<1x2048xi1>, vector<1x2048xf32>
    %cst_13 = arith.constant 1.000000e+00 : f32
    %37 = vector.broadcast %cst_13 : f32 to vector<1x2048xf32>
    %38 = arith.select %31, %37, %36 : vector<1x2048xi1>, vector<1x2048xf32>
    %39 = arith.addf %26, %38 : vector<1x2048xf32>
    %cst_14 = arith.constant 1.600000e+01 : f32
    %40 = vector.broadcast %cst_14 : f32 to vector<1x2048xf32>
    %41 = arith.mulf %38, %40 : vector<1x2048xf32>
    %42 = arith.subf %29, %41 : vector<1x2048xf32>
    %c0 = arith.constant 0 : index
    %c0_15 = arith.constant 0 : index
    %43 = vector.load %arg1[%c0, %c0_15] : memref<12x4xf32, #tpu.memory_space<vmem>>, vector<12x4xf32>
    %44 = vector.extract_strided_slice %43 {offsets = [0, 0], sizes = [12, 1], strides = [1, 1]} : vector<12x4xf32> to vector<12x1xf32>
    %45 = vector.extract_strided_slice %43 {offsets = [0, 1], sizes = [12, 1], strides = [1, 1]} : vector<12x4xf32> to vector<12x1xf32>
    %46 = vector.extract_strided_slice %43 {offsets = [0, 2], sizes = [12, 1], strides = [1, 1]} : vector<12x4xf32> to vector<12x1xf32>
    %47 = vector.extract_strided_slice %43 {offsets = [0, 3], sizes = [12, 1], strides = [1, 1]} : vector<12x4xf32> to vector<12x1xf32>
    %48 = vector.broadcast %44 : vector<12x1xf32> to vector<12x2048xf32>
    %49 = vector.broadcast %20 : vector<1x2048xf32> to vector<12x2048xf32>
    %50 = arith.mulf %48, %49 : vector<12x2048xf32>
    %51 = vector.broadcast %45 : vector<12x1xf32> to vector<12x2048xf32>
    %52 = vector.broadcast %39 : vector<1x2048xf32> to vector<12x2048xf32>
    %53 = arith.mulf %51, %52 : vector<12x2048xf32>
    %54 = arith.addf %50, %53 : vector<12x2048xf32>
    %55 = vector.broadcast %46 : vector<12x1xf32> to vector<12x2048xf32>
    %56 = vector.broadcast %42 : vector<1x2048xf32> to vector<12x2048xf32>
    %57 = arith.mulf %55, %56 : vector<12x2048xf32>
    %58 = arith.addf %54, %57 : vector<12x2048xf32>
    %59 = vector.broadcast %47 : vector<12x1xf32> to vector<12x2048xf32>
    %60 = arith.addf %58, %59 : vector<12x2048xf32>
    %61 = math.sin %60 : vector<12x2048xf32>
    %c0_16 = arith.constant 0 : index
    %c0_17 = arith.constant 0 : index
    %62 = vector.load %arg2[%c0_16, %c0_17] : memref<12x2048xf32, #tpu.memory_space<vmem>>, vector<12x2048xf32>
    tpu.vector_store %arg2[%c0_16, %c0_17], %61 {strides = array<i32>} : memref<12x2048xf32, #tpu.memory_space<vmem>>, vector<12x2048xf32>,
    return
  }
  func.func @transform_0(%arg0: i32) -> (i32, i32) {
    %c0_i32 = arith.constant 0 : i32
    %c0_i32_0 = arith.constant 0 : i32
    %c0_i32_1 = arith.constant 0 : i32
    return %c0_i32, %c0_i32_0 : i32, i32
  }
  func.func @transform_1(%arg0: i32) -> (i32, i32) {
    %c0_i32 = arith.constant 0 : i32
    %c0_i32_0 = arith.constant 0 : i32
    return %c0_i32, %arg0 : i32, i32
  }
}

</mosaic_0001>

<llo_original>
// kernel: tpu_custom_call.1
$region0: #{tpu_custom_call.1}
  #allocation0 [shape = 'u32[]', space=smem, size = 0x4, offset = 0x4, fixed_abs, tag = 'smem constant byte address 0x4 - core index']
  #allocation1 [shape = 'u32[72,128]{1,0:T(1,128)}', space=vmem, size = 0x9000, scoped, tag = 'internal scratch']
  %s0 = inlined_call_operand.vmem [shape: f32[12,4], index: 0, kind: input, shape index: {}]
  %s1 = inlined_call_operand.hbm [shape: f32[12,4096], index: 1, kind: output, shape index: {}]
  %s2 = sld [smem:[#allocation0]]
  $region37: #{tpu_custom_call.1} parent=0
    _
  %s4 = ssub.s32 1, %s2
  %s5 = scalar_select 0, %s4, %s2
  $region1: #{tpu_custom_call.1} parent=0
    #allocation2 [shape = 'u8[262144]{0}', space=vmem, size = 0x40000, scoped, tag = 'output window, operand 0']
    #allocation3 [shape = 's32[2]{0}', space=sflag, size = 0x8, scoped, tag = 'scoped memory for tpu_custom_call.1']
    %6 = vsyncpa [#allocation3], 0
    %s7 = scalar_lea.sflag [#allocation3], 1
    %8 = vsyncpa %s7, 0
    loop: start=0, step=1, limit=4
    $region2: #{tpu_custom_call.1} parent=1 // loop_pre_header
      _
    $region3: #{tpu_custom_call.1} parent=1 // loop_header
      %s10 = sphi 0, %s14
      %p11 = scmp.ge.s32.totalorder %s10, 4
      %s18 = sphi 0, %s18
      %s20 = sphi 0, %s18
      %s21 = sphi 0, %s20
      %s35 = sphi 0, %s21
      %s41 = sphi 0, %s43
      %s44 = sphi 0, %s41
      %s45 = sphi 0, %s44
      %s61 = sphi 0, %s45
    $region4: #{tpu_custom_call.1} parent=1 // loop_header_branch
      %13 = sbr.rel (%p11) target = $region8
    $region5: #{tpu_custom_call.1} parent=1 // loop_body
      %s15 = ssub.s32 %s10, 1
      %s16 = ssub.s32 %s10, 2
      %s17 = sadd.s32 %s10, 1
      %s19 = sadd.s32 %s18, 1
      %p22 = scmp.eq.s32.totalorder %s10, 1
      %p23 = scmp.ne.s32.totalorder %s18, %s20
      %p24 = scmp.eq.s32.totalorder %s10, 0
      %p25 = por %p23, %p24
      %p26 = scmp.ne.s32.totalorder %s18, %s20
      %p27 = scmp.eq.s32.totalorder %s15, 1
      %p28 = por %p26, %p27
      %p29 = scmp.ne.s32.totalorder %s20, %s21
      %p30 = scmp.eq.s32.totalorder %s15, 0
      %p31 = por %p29, %p30
      %p32 = scmp.ne.s32.totalorder %s20, %s21
      %p33 = scmp.eq.s32.totalorder %s16, 1
      %p34 = por %p32, %p33
      %p36 = scmp.ne.s32.totalorder %s21, %s35
      %p37 = scmp.eq.s32.totalorder %s16, 0
      %p38 = por %p36, %p37
      %s39 = ssub.s32 %s10, %s17
      %p40 = scmp.eq.s32.totalorder %s39, 0
      %s42 = sadd.s32 %s41, 1
      %s43 = scalar_select %p40, %s41, %s42
      %p46 = pneg %p40
      %p47 = scmp.eq.s32.totalorder %s10, 1
      %p48 = por %p46, %p47
      %p49 = scmp.ne.s32.totalorder %s41, %s44
      %p50 = scmp.eq.s32.totalorder %s10, 0
      %p51 = por %p49, %p50
      %p52 = scmp.ne.s32.totalorder %s41, %s44
      %p53 = scmp.eq.s32.totalorder %s15, 1
      %p54 = por %p52, %p53
      %p55 = scmp.ne.s32.totalorder %s44, %s45
      %p56 = scmp.eq.s32.totalorder %s15, 0
      %p57 = por %p55, %p56
      %p58 = scmp.ne.s32.totalorder %s44, %s45
      %p59 = scmp.eq.s32.totalorder %s16, 1
      %p60 = por %p58, %p59
      %p62 = scmp.ne.s32.totalorder %s45, %s61
      %p63 = scmp.eq.s32.totalorder %s16, 0
      %p64 = por %p62, %p63
      %p65 = scmp.le.s32.totalorder 1, %s10
      %p66 = scmp.lt.s32.totalorder %s10, 3
      %p67 = pnand %p65, %p66
      %p68 = pneg %p67
      // Predicated region
      $region9: #{tpu_custom_call.1} parent=5 // pred_check
        _
      $region10: #{tpu_custom_call.1} parent=5 // pred_check_branch
        %70 = sbr.rel (%p67) target = $region12
      $region11: #{tpu_custom_call.1} parent=5 // pred_region
        %s71 = ssub.s32 %s10, 1
        // Predicated region
        $region13: #{tpu_custom_call.1} parent=11 // pred_check
          %p72 = pneg %p31
        $region14: #{tpu_custom_call.1} parent=11 // pred_check_branch
          %74 = sbr.rel (%p72) target = $region16
        $region15: #{tpu_custom_call.1} parent=11 // pred_region
          _
        $region16: #{tpu_custom_call.1} parent=11 // pred_fallthru
          _
      $region12: #{tpu_custom_call.1} parent=5 // pred_fallthru
        _
      %p75 = scmp.lt.s32.totalorder %s10, 2
      // Predicated region
      $region17: #{tpu_custom_call.1} parent=5 // pred_check
        %p76 = pneg %p75
      $region18: #{tpu_custom_call.1} parent=5 // pred_check_branch
        %78 = sbr.rel (%p76) target = $region20
      $region19: #{tpu_custom_call.1} parent=5 // pred_region
        _
      $region20: #{tpu_custom_call.1} parent=5 // pred_fallthru
        _
      %p79 = scmp.le.s32.totalorder 1, %s10
      %p80 = scmp.lt.s32.totalorder %s10, 3
      %p81 = pnand %p79, %p80
      %p82 = pneg %p81
      // Predicated region
      $region21: #{tpu_custom_call.1} parent=5 // pred_check
        _
      $region22: #{tpu_custom_call.1} parent=5 // pred_check_branch
        %84 = sbr.rel (%p81) target = $region24
      $region23: #{tpu_custom_call.1} parent=5 // pred_region
        %s85 = ssub.s32 %s10, 1
        %p86 = pneg %p31
        %p87 = pneg %p28
        %p88 = pneg %p57
        %p89 = pneg %p54
        %s90 = sand.u32 %s44, 1
        %s91 = scalar_lea.sflag [#allocation3], %s90
        %s92 = sand.u32 %s44, 1
        %s93 = smul.addr %s92, 256
        %s94 = scalar_lea.vmem [#allocation2], %s93
        %s95 = smul.u32 16, %s15
        %v96 = vlaneseq
        %v97 = vand.u32 %v96, 127
        %v98 = vadd.s32 %v97, 128
        %v99 = vadd.s32 %v97, 256
        %v100 = vadd.s32 %v97, 384
        %v101 = vadd.s32 %v97, 512
        %v102 = vadd.s32 %v97, 640
        %v103 = vadd.s32 %v97, 768
        %v104 = vadd.s32 %v97, 896
        %v105 = vadd.s32 %v97, 1024
        %v106 = vadd.s32 %v97, 1152
        %v107 = vadd.s32 %v97, 1280
        %v108 = vadd.s32 %v97, 1408
        %v109 = vadd.s32 %v97, 1536
        %v110 = vadd.s32 %v97, 1664
        %v111 = vadd.s32 %v97, 1792
        %v112 = vadd.s32 %v97, 1920
        %s113 = smul.u32 %s15, 2048
        %v114 = vstv %s113
        %v115 = vadd.s32 %v97, %v114
        %v116 = vadd.s32 %v98, %v114
        %v117 = vadd.s32 %v99, %v114
        %v118 = vadd.s32 %v100, %v114
        %v119 = vadd.s32 %v101, %v114
        %v120 = vadd.s32 %v102, %v114
        %v121 = vadd.s32 %v103, %v114
        %v122 = vadd.s32 %v104, %v114
        %v123 = vadd.s32 %v105, %v114
        %v124 = vadd.s32 %v106, %v114
        %v125 = vadd.s32 %v107, %v114
        %v126 = vadd.s32 %v108, %v114
        %v127 = vadd.s32 %v109, %v114
        %v128 = vadd.s32 %v110, %v114
        %v129 = vadd.s32 %v111, %v114
        %v130 = vadd.s32 %v112, %v114
        %v131 = vcvt.s32.f32 %v115
        %v132 = vcvt.s32.f32 %v116
        %v133 = vcvt.s32.f32 %v117
        %v134 = vcvt.s32.f32 %v118
        %v135 = vcvt.s32.f32 %v119
        %v136 = vcvt.s32.f32 %v120
        %v137 = vcvt.s32.f32 %v121
        %v138 = vcvt.s32.f32 %v122
        %v139 = vcvt.s32.f32 %v123
        %v140 = vcvt.s32.f32 %v124
        %v141 = vcvt.s32.f32 %v125
        %v142 = vcvt.s32.f32 %v126
        %v143 = vcvt.s32.f32 %v127
        %v144 = vcvt.s32.f32 %v128
        %v145 = vcvt.s32.f32 %v129
        %v146 = vcvt.s32.f32 %v130
        %v147 = vmul.f32 %v131, 0.00390625
        %v148 = vmul.f32 %v132, 0.00390625
        %v149 = vmul.f32 %v133, 0.00390625
        %v150 = vmul.f32 %v134, 0.00390625
        %v151 = vmul.f32 %v135, 0.00390625
        %v152 = vmul.f32 %v136, 0.00390625
        %v153 = vmul.f32 %v137, 0.00390625
        %v154 = vmul.f32 %v138, 0.00390625
        %v155 = vmul.f32 %v139, 0.00390625
        %v156 = vmul.f32 %v140, 0.00390625
        %v157 = vmul.f32 %v141, 0.00390625
        %v158 = vmul.f32 %v142, 0.00390625
        %v159 = vmul.f32 %v143, 0.00390625
        %v160 = vmul.f32 %v144, 0.00390625
        %v161 = vmul.f32 %v145, 0.00390625
        %v162 = vmul.f32 %v146, 0.00390625
        %v163 = vfloor.f32 %v147
        %v164 = vfloor.f32 %v148
        %v165 = vfloor.f32 %v149
        %v166 = vfloor.f32 %v150
        %v167 = vfloor.f32 %v151
        %v168 = vfloor.f32 %v152
        %v169 = vfloor.f32 %v153
        %v170 = vfloor.f32 %v154
        %v171 = vfloor.f32 %v155
        %v172 = vfloor.f32 %v156
        %v173 = vfloor.f32 %v157
        %v174 = vfloor.f32 %v158
        %v175 = vfloor.f32 %v159
        %v176 = vfloor.f32 %v160
        %v177 = vfloor.f32 %v161
        %v178 = vfloor.f32 %v162
        %v179 = vmul.f32 %v163, 256.0
        %v180 = vmul.f32 %v164, 256.0
        %v181 = vmul.f32 %v165, 256.0
        %v182 = vmul.f32 %v166, 256.0
        %v183 = vmul.f32 %v167, 256.0
        %v184 = vmul.f32 %v168, 256.0
        %v185 = vmul.f32 %v169, 256.0
        %v186 = vmul.f32 %v170, 256.0
        %v187 = vmul.f32 %v171, 256.0
        %v188 = vmul.f32 %v172, 256.0
        %v189 = vmul.f32 %v173, 256.0
        %v190 = vmul.f32 %v174, 256.0
        %v191 = vmul.f32 %v175, 256.0
        %v192 = vmul.f32 %v176, 256.0
        %v193 = vmul.f32 %v177, 256.0
        %v194 = vmul.f32 %v178, 256.0
        %v195 = vsub.f32 %v131, %v179
        %v196 = vsub.f32 %v132, %v180
        %v197 = vsub.f32 %v133, %v181
        %v198 = vsub.f32 %v134, %v182
        %v199 = vsub.f32 %v135, %v183
        %v200 = vsub.f32 %v136, %v184
        %v201 = vsub.f32 %v137, %v185
        %v202 = vsub.f32 %v138, %v186
        %v203 = vsub.f32 %v139, %v187
        %v204 = vsub.f32 %v140, %v188
        %v205 = vsub.f32 %v141, %v189
        %v206 = vsub.f32 %v142, %v190
        %v207 = vsub.f32 %v143, %v191
        %v208 = vsub.f32 %v144, %v192
        %v209 = vsub.f32 %v145, %v193
        %v210 = vsub.f32 %v146, %v194
        %vm211 = vcmp.ge.f32.partialorder %v195, 256.0
        %vm212 = vcmp.ge.f32.partialorder %v196, 256.0
        %vm213 = vcmp.ge.f32.partialorder %v197, 256.0
        %vm214 = vcmp.ge.f32.partialorder %v198, 256.0
        %vm215 = vcmp.ge.f32.partialorder %v199, 256.0
        %vm216 = vcmp.ge.f32.partialorder %v200, 256.0
        %vm217 = vcmp.ge.f32.partialorder %v201, 256.0
        %vm218 = vcmp.ge.f32.partialorder %v202, 256.0
        %vm219 = vcmp.ge.f32.partialorder %v203, 256.0
        %vm220 = vcmp.ge.f32.partialorder %v204, 256.0
        %vm221 = vcmp.ge.f32.partialorder %v205, 256.0
        %vm222 = vcmp.ge.f32.partialorder %v206, 256.0
        %vm223 = vcmp.ge.f32.partialorder %v207, 256.0
        %vm224 = vcmp.ge.f32.partialorder %v208, 256.0
        %vm225 = vcmp.ge.f32.partialorder %v209, 256.0
        %vm226 = vcmp.ge.f32.partialorder %v210, 256.0
        %vm227 = vcmp.lt.f32.partialorder %v195, 0.0
        %vm228 = vcmp.lt.f32.partialorder %v196, 0.0
        %vm229 = vcmp.lt.f32.partialorder %v197, 0.0
        %vm230 = vcmp.lt.f32.partialorder %v198, 0.0
        %vm231 = vcmp.lt.f32.partialorder %v199, 0.0
        %vm232 = vcmp.lt.f32.partialorder %v200, 0.0
        %vm233 = vcmp.lt.f32.partialorder %v201, 0.0
        %vm234 = vcmp.lt.f32.partialorder %v202, 0.0
        %vm235 = vcmp.lt.f32.partialorder %v203, 0.0
        %vm236 = vcmp.lt.f32.partialorder %v204, 0.0
        %vm237 = vcmp.lt.f32.partialorder %v205, 0.0
        %vm238 = vcmp.lt.f32.partialorder %v206, 0.0
        %vm239 = vcmp.lt.f32.partialorder %v207, 0.0
        %vm240 = vcmp.lt.f32.partialorder %v208, 0.0
        %vm241 = vcmp.lt.f32.partialorder %v209, 0.0
        %vm242 = vcmp.lt.f32.partialorder %v210, 0.0
        %v243 = vsel %vm227, -1.0, 0.0
        %v244 = vsel %vm228, -1.0, 0.0
        %v245 = vsel %vm229, -1.0, 0.0
        %v246 = vsel %vm230, -1.0, 0.0
        %v247 = vsel %vm231, -1.0, 0.0
        %v248 = vsel %vm232, -1.0, 0.0
        %v249 = vsel %vm233, -1.0, 0.0
        %v250 = vsel %vm234, -1.0, 0.0
        %v251 = vsel %vm235, -1.0, 0.0
        %v252 = vsel %vm236, -1.0, 0.0
        %v253 = vsel %vm237, -1.0, 0.0
        %v254 = vsel %vm238, -1.0, 0.0
        %v255 = vsel %vm239, -1.0, 0.0
        %v256 = vsel %vm240, -1.0, 0.0
        %v257 = vsel %vm241, -1.0, 0.0
        %v258 = vsel %vm242, -1.0, 0.0
        %v259 = vsel %vm211, 1.0, %v243
        %v260 = vsel %vm212, 1.0, %v244
        %v261 = vsel %vm213, 1.0, %v245
        %v262 = vsel %vm214, 1.0, %v246
        %v263 = vsel %vm215, 1.0, %v247
        %v264 = vsel %vm216, 1.0, %v248
        %v265 = vsel %vm217, 1.0, %v249
        %v266 = vsel %vm218, 1.0, %v250
        %v267 = vsel %vm219, 1.0, %v251
        %v268 = vsel %vm220, 1.0, %v252
        %v269 = vsel %vm221, 1.0, %v253
        %v270 = vsel %vm222, 1.0, %v254
        %v271 = vsel %vm223, 1.0, %v255
        %v272 = vsel %vm224, 1.0, %v256
        %v273 = vsel %vm225, 1.0, %v257
        %v274 = vsel %vm226, 1.0, %v258
        %v275 = vadd.f32 %v163, %v259
        %v276 = vadd.f32 %v164, %v260
        %v277 = vadd.f32 %v165, %v261
        %v278 = vadd.f32 %v166, %v262
        %v279 = vadd.f32 %v167, %v263
        %v280 = vadd.f32 %v168, %v264
        %v281 = vadd.f32 %v169, %v265
        %v282 = vadd.f32 %v170, %v266
        %v283 = vadd.f32 %v171, %v267
        %v284 = vadd.f32 %v172, %v268
        %v285 = vadd.f32 %v173, %v269
        %v286 = vadd.f32 %v174, %v270
        %v287 = vadd.f32 %v175, %v271
        %v288 = vadd.f32 %v176, %v272
        %v289 = vadd.f32 %v177, %v273
        %v290 = vadd.f32 %v178, %v274
        %v291 = vmul.f32 %v259, 256.0
        %v292 = vmul.f32 %v260, 256.0
        %v293 = vmul.f32 %v261, 256.0
        %v294 = vmul.f32 %v262, 256.0
        %v295 = vmul.f32 %v263, 256.0
        %v296 = vmul.f32 %v264, 256.0
        %v297 = vmul.f32 %v265, 256.0
        %v298 = vmul.f32 %v266, 256.0
        %v299 = vmul.f32 %v267, 256.0
        %v300 = vmul.f32 %v268, 256.0
        %v301 = vmul.f32 %v269, 256.0
        %v302 = vmul.f32 %v270, 256.0
        %v303 = vmul.f32 %v271, 256.0
        %v304 = vmul.f32 %v272, 256.0
        %v305 = vmul.f32 %v273, 256.0
        %v306 = vmul.f32 %v274, 256.0
        %v307 = vsub.f32 %v195, %v291
        %v308 = vsub.f32 %v196, %v292
        %v309 = vsub.f32 %v197, %v293
        %v310 = vsub.f32 %v198, %v294
        %v311 = vsub.f32 %v199, %v295
        %v312 = vsub.f32 %v200, %v296
        %v313 = vsub.f32 %v201, %v297
        %v314 = vsub.f32 %v202, %v298
        %v315 = vsub.f32 %v203, %v299
        %v316 = vsub.f32 %v204, %v300
        %v317 = vsub.f32 %v205, %v301
        %v318 = vsub.f32 %v206, %v302
        %v319 = vsub.f32 %v207, %v303
        %v320 = vsub.f32 %v208, %v304
        %v321 = vsub.f32 %v209, %v305
        %v322 = vsub.f32 %v210, %v306
        %v323 = vmul.f32 %v307, 0.0625
        %v324 = vmul.f32 %v308, 0.0625
        %v325 = vmul.f32 %v309, 0.0625
        %v326 = vmul.f32 %v310, 0.0625
        %v327 = vmul.f32 %v311, 0.0625
        %v328 = vmul.f32 %v312, 0.0625
        %v329 = vmul.f32 %v313, 0.0625
        %v330 = vmul.f32 %v314, 0.0625
        %v331 = vmul.f32 %v315, 0.0625
        %v332 = vmul.f32 %v316, 0.0625
        %v333 = vmul.f32 %v317, 0.0625
        %v334 = vmul.f32 %v318, 0.0625
        %v335 = vmul.f32 %v319, 0.0625
        %v336 = vmul.f32 %v320, 0.0625
        %v337 = vmul.f32 %v321, 0.0625
        %v338 = vmul.f32 %v322, 0.0625
        %v339 = vfloor.f32 %v323
        %v340 = vfloor.f32 %v324
        %v341 = vfloor.f32 %v325
        %v342 = vfloor.f32 %v326
        %v343 = vfloor.f32 %v327
        %v344 = vfloor.f32 %v328
        %v345 = vfloor.f32 %v329
        %v346 = vfloor.f32 %v330
        %v347 = vfloor.f32 %v331
        %v348 = vfloor.f32 %v332
        %v349 = vfloor.f32 %v333
        %v350 = vfloor.f32 %v334
        %v351 = vfloor.f32 %v335
        %v352 = vfloor.f32 %v336
        %v353 = vfloor.f32 %v337
        %v354 = vfloor.f32 %v338
        %v355 = vmul.f32 %v339, 16.0
        %v356 = vmul.f32 %v340, 16.0
        %v357 = vmul.f32 %v341, 16.0
        %v358 = vmul.f32 %v342, 16.0
        %v359 = vmul.f32 %v343, 16.0
        %v360 = vmul.f32 %v344, 16.0
        %v361 = vmul.f32 %v345, 16.0
        %v362 = vmul.f32 %v346, 16.0
        %v363 = vmul.f32 %v347, 16.0
        %v364 = vmul.f32 %v348, 16.0
        %v365 = vmul.f32 %v349, 16.0
        %v366 = vmul.f32 %v350, 16.0
        %v367 = vmul.f32 %v351, 16.0
        %v368 = vmul.f32 %v352, 16.0
        %v369 = vmul.f32 %v353, 16.0
        %v370 = vmul.f32 %v354, 16.0
        %v371 = vsub.f32 %v307, %v355
        %v372 = vsub.f32 %v308, %v356
        %v373 = vsub.f32 %v309, %v357
        %v374 = vsub.f32 %v310, %v358
        %v375 = vsub.f32 %v311, %v359
        %v376 = vsub.f32 %v312, %v360
        %v377 = vsub.f32 %v313, %v361
        %v378 = vsub.f32 %v314, %v362
        %v379 = vsub.f32 %v315, %v363
        %v380 = vsub.f32 %v316, %v364
        %v381 = vsub.f32 %v317, %v365
        %v382 = vsub.f32 %v318, %v366
        %v383 = vsub.f32 %v319, %v367
        %v384 = vsub.f32 %v320, %v368
        %v385 = vsub.f32 %v321, %v369
        %v386 = vsub.f32 %v322, %v370
        %vm387 = vcmp.ge.f32.partialorder %v371, 16.0
        %vm388 = vcmp.ge.f32.partialorder %v372, 16.0
        %vm389 = vcmp.ge.f32.partialorder %v373, 16.0
        %vm390 = vcmp.ge.f32.partialorder %v374, 16.0
        %vm391 = vcmp.ge.f32.partialorder %v375, 16.0
        %vm392 = vcmp.ge.f32.partialorder %v376, 16.0
        %vm393 = vcmp.ge.f32.partialorder %v377, 16.0
        %vm394 = vcmp.ge.f32.partialorder %v378, 16.0
        %vm395 = vcmp.ge.f32.partialorder %v379, 16.0
        %vm396 = vcmp.ge.f32.partialorder %v380, 16.0
        %vm397 = vcmp.ge.f32.partialorder %v381, 16.0
        %vm398 = vcmp.ge.f32.partialorder %v382, 16.0
        %vm399 = vcmp.ge.f32.partialorder %v383, 16.0
        %vm400 = vcmp.ge.f32.partialorder %v384, 16.0
        %vm401 = vcmp.ge.f32.partialorder %v385, 16.0
        %vm402 = vcmp.ge.f32.partialorder %v386, 16.0
        %vm403 = vcmp.lt.f32.partialorder %v371, 0.0
        %vm404 = vcmp.lt.f32.partialorder %v372, 0.0
        %vm405 = vcmp.lt.f32.partialorder %v373, 0.0
        %vm406 = vcmp.lt.f32.partialorder %v374, 0.0
        %vm407 = vcmp.lt.f32.partialorder %v375, 0.0
        %vm408 = vcmp.lt.f32.partialorder %v376, 0.0
        %vm409 = vcmp.lt.f32.partialorder %v377, 0.0
        %vm410 = vcmp.lt.f32.partialorder %v378, 0.0
        %vm411 = vcmp.lt.f32.partialorder %v379, 0.0
        %vm412 = vcmp.lt.f32.partialorder %v380, 0.0
        %vm413 = vcmp.lt.f32.partialorder %v381, 0.0
        %vm414 = vcmp.lt.f32.partialorder %v382, 0.0
        %vm415 = vcmp.lt.f32.partialorder %v383, 0.0
        %vm416 = vcmp.lt.f32.partialorder %v384, 0.0
        %vm417 = vcmp.lt.f32.partialorder %v385, 0.0
        %vm418 = vcmp.lt.f32.partialorder %v386, 0.0
        %v419 = vsel %vm403, -1.0, 0.0
        %v420 = vsel %vm404, -1.0, 0.0
        %v421 = vsel %vm405, -1.0, 0.0
        %v422 = vsel %vm406, -1.0, 0.0
        %v423 = vsel %vm407, -1.0, 0.0
        %v424 = vsel %vm408, -1.0, 0.0
        %v425 = vsel %vm409, -1.0, 0.0
        %v426 = vsel %vm410, -1.0, 0.0
        %v427 = vsel %vm411, -1.0, 0.0
        %v428 = vsel %vm412, -1.0, 0.0
        %v429 = vsel %vm413, -1.0, 0.0
        %v430 = vsel %vm414, -1.0, 0.0
        %v431 = vsel %vm415, -1.0, 0.0
        %v432 = vsel %vm416, -1.0, 0.0
        %v433 = vsel %vm417, -1.0, 0.0
        %v434 = vsel %vm418, -1.0, 0.0
        %v435 = vsel %vm387, 1.0, %v419
        %v436 = vsel %vm388, 1.0, %v420
        %v437 = vsel %vm389, 1.0, %v421
        %v438 = vsel %vm390, 1.0, %v422
        %v439 = vsel %vm391, 1.0, %v423
        %v440 = vsel %vm392, 1.0, %v424
        %v441 = vsel %vm393, 1.0, %v425
        %v442 = vsel %vm394, 1.0, %v426
        %v443 = vsel %vm395, 1.0, %v427
        %v444 = vsel %vm396, 1.0, %v428
        %v445 = vsel %vm397, 1.0, %v429
        %v446 = vsel %vm398, 1.0, %v430
        %v447 = vsel %vm399, 1.0, %v431
        %v448 = vsel %vm400, 1.0, %v432
        %v449 = vsel %vm401, 1.0, %v433
        %v450 = vsel %vm402, 1.0, %v434
        %v451 = vadd.f32 %v339, %v435
        %v452 = vadd.f32 %v340, %v436
        %v453 = vadd.f32 %v341, %v437
        %v454 = vadd.f32 %v342, %v438
        %v455 = vadd.f32 %v343, %v439
        %v456 = vadd.f32 %v344, %v440
        %v457 = vadd.f32 %v345, %v441
        %v458 = vadd.f32 %v346, %v442
        %v459 = vadd.f32 %v347, %v443
        %v460 = vadd.f32 %v348, %v444
        %v461 = vadd.f32 %v349, %v445
        %v462 = vadd.f32 %v350, %v446
        %v463 = vadd.f32 %v351, %v447
        %v464 = vadd.f32 %v352, %v448
        %v465 = vadd.f32 %v353, %v449
        %v466 = vadd.f32 %v354, %v450
        %v467 = vmul.f32 %v435, 16.0
        %v468 = vmul.f32 %v436, 16.0
        %v469 = vmul.f32 %v437, 16.0
        %v470 = vmul.f32 %v438, 16.0
        %v471 = vmul.f32 %v439, 16.0
        %v472 = vmul.f32 %v440, 16.0
        %v473 = vmul.f32 %v441, 16.0
        %v474 = vmul.f32 %v442, 16.0
        %v475 = vmul.f32 %v443, 16.0
        %v476 = vmul.f32 %v444, 16.0
        %v477 = vmul.f32 %v445, 16.0
        %v478 = vmul.f32 %v446, 16.0
        %v479 = vmul.f32 %v447, 16.0
        %v480 = vmul.f32 %v448, 16.0
        %v481 = vmul.f32 %v449, 16.0
        %v482 = vmul.f32 %v450, 16.0
        %v483 = vsub.f32 %v371, %v467
        %v484 = vsub.f32 %v372, %v468
        %v485 = vsub.f32 %v373, %v469
        %v486 = vsub.f32 %v374, %v470
        %v487 = vsub.f32 %v375, %v471
        %v488 = vsub.f32 %v376, %v472
        %v489 = vsub.f32 %v377, %v473
        %v490 = vsub.f32 %v378, %v474
        %v491 = vsub.f32 %v379, %v475
        %v492 = vsub.f32 %v380, %v476
        %v493 = vsub.f32 %v381, %v477
        %v494 = vsub.f32 %v382, %v478
        %v495 = vsub.f32 %v383, %v479
        %v496 = vsub.f32 %v384, %v480
        %v497 = vsub.f32 %v385, %v481
        %v498 = vsub.f32 %v386, %v482
        %v499 = vld [vmem:[%s0] sm:$0xff]
        %v500 = vld [vmem:[%s0 + $0x8] sm:$0xf]
        %502 = vset.pattern.permute.xlu0 0
        %503 = vperm.xlu0 %502, %v499
        %v504 = vpop.permute.xlu0 %503
        %507 = vset.pattern.permute.xlu0 0
        %508 = vperm.xlu0 %507, %v500
        %v509 = vpop.permute.xlu0 %508
        %v511 = vmul.f32 %v504, %v275
        %v512 = vmul.f32 %v504, %v276
        %v513 = vmul.f32 %v504, %v277
        %v514 = vmul.f32 %v504, %v278
        %v515 = vmul.f32 %v504, %v279
        %v516 = vmul.f32 %v504, %v280
        %v517 = vmul.f32 %v504, %v281
        %v518 = vmul.f32 %v504, %v282
        %v519 = vmul.f32 %v504, %v283
        %v520 = vmul.f32 %v504, %v284
        %v521 = vmul.f32 %v504, %v285
        %v522 = vmul.f32 %v504, %v286
        %v523 = vmul.f32 %v504, %v287
        %v524 = vmul.f32 %v504, %v288
        %v525 = vmul.f32 %v504, %v289
        %v526 = vmul.f32 %v504, %v290
        %v527 = vmul.f32 %v509, %v275
        %v528 = vmul.f32 %v509, %v276
        %v529 = vmul.f32 %v509, %v277
        %v530 = vmul.f32 %v509, %v278
        %v531 = vmul.f32 %v509, %v279
        %v532 = vmul.f32 %v509, %v280
        %v533 = vmul.f32 %v509, %v281
        %v534 = vmul.f32 %v509, %v282
        %v535 = vmul.f32 %v509, %v283
        %v536 = vmul.f32 %v509, %v284
        %v537 = vmul.f32 %v509, %v285
        %v538 = vmul.f32 %v509, %v286
        %v539 = vmul.f32 %v509, %v287
        %v540 = vmul.f32 %v509, %v288
        %v541 = vmul.f32 %v509, %v289
        %v542 = vmul.f32 %v509, %v290
        %543 = vset.pattern.permute.xlu0 1
        %544 = vperm.xlu0 %543, %v499
        %v545 = vpop.permute.xlu0 %544
        %547 = vset.pattern.permute.xlu0 1
        %548 = vperm.xlu0 %547, %v500
        %v549 = vpop.permute.xlu0 %548
        %v551 = vmul.f32 %v545, %v451
        %v552 = vmul.f32 %v545, %v452
        %v553 = vmul.f32 %v545, %v453
        %v554 = vmul.f32 %v545, %v454
        %v555 = vmul.f32 %v545, %v455
        %v556 = vmul.f32 %v545, %v456
        %v557 = vmul.f32 %v545, %v457
        %v558 = vmul.f32 %v545, %v458
        %v559 = vmul.f32 %v545, %v459
        %v560 = vmul.f32 %v545, %v460
        %v561 = vmul.f32 %v545, %v461
        %v562 = vmul.f32 %v545, %v462
        %v563 = vmul.f32 %v545, %v463
        %v564 = vmul.f32 %v545, %v464
        %v565 = vmul.f32 %v545, %v465
        %v566 = vmul.f32 %v545, %v466
        %v567 = vmul.f32 %v549, %v451
        %v568 = vmul.f32 %v549, %v452
        %v569 = vmul.f32 %v549, %v453
        %v570 = vmul.f32 %v549, %v454
        %v571 = vmul.f32 %v549, %v455
        %v572 = vmul.f32 %v549, %v456
        %v573 = vmul.f32 %v549, %v457
        %v574 = vmul.f32 %v549, %v458
        %v575 = vmul.f32 %v549, %v459
        %v576 = vmul.f32 %v549, %v460
        %v577 = vmul.f32 %v549, %v461
        %v578 = vmul.f32 %v549, %v462
        %v579 = vmul.f32 %v549, %v463
        %v580 = vmul.f32 %v549, %v464
        %v581 = vmul.f32 %v549, %v465
        %v582 = vmul.f32 %v549, %v466
        %v583 = vadd.f32 %v511, %v551
        %v584 = vadd.f32 %v512, %v552
        %v585 = vadd.f32 %v513, %v553
        %v586 = vadd.f32 %v514, %v554
        %v587 = vadd.f32 %v515, %v555
        %v588 = vadd.f32 %v516, %v556
        %v589 = vadd.f32 %v517, %v557
        %v590 = vadd.f32 %v518, %v558
        %v591 = vadd.f32 %v519, %v559
        %v592 = vadd.f32 %v520, %v560
        %v593 = vadd.f32 %v521, %v561
        %v594 = vadd.f32 %v522, %v562
        %v595 = vadd.f32 %v523, %v563
        %v596 = vadd.f32 %v524, %v564
        %v597 = vadd.f32 %v525, %v565
        %v598 = vadd.f32 %v526, %v566
        %v599 = vadd.f32 %v527, %v567
        %v600 = vadd.f32 %v528, %v568
        %v601 = vadd.f32 %v529, %v569
        %v602 = vadd.f32 %v530, %v570
        %v603 = vadd.f32 %v531, %v571
        %v604 = vadd.f32 %v532, %v572
        %v605 = vadd.f32 %v533, %v573
        %v606 = vadd.f32 %v534, %v574
        %v607 = vadd.f32 %v535, %v575
        %v608 = vadd.f32 %v536, %v576
        %v609 = vadd.f32 %v537, %v577
        %v610 = vadd.f32 %v538, %v578
        %v611 = vadd.f32 %v539, %v579
        %v612 = vadd.f32 %v540, %v580
        %v613 = vadd.f32 %v541, %v581
        %v614 = vadd.f32 %v542, %v582
        %615 = vset.pattern.permute.xlu0 2
        %616 = vperm.xlu0 %615, %v499
        %v617 = vpop.permute.xlu0 %616
        %619 = vset.pattern.permute.xlu0 2
        %620 = vperm.xlu0 %619, %v500
        %v621 = vpop.permute.xlu0 %620
        %v623 = vmul.f32 %v617, %v483
        %v624 = vmul.f32 %v617, %v484
        %v625 = vmul.f32 %v617, %v485
        %v626 = vmul.f32 %v617, %v486
        %v627 = vmul.f32 %v617, %v487
        %v628 = vmul.f32 %v617, %v488
        %v629 = vmul.f32 %v617, %v489
        %v630 = vmul.f32 %v617, %v490
        %v631 = vmul.f32 %v617, %v491
        %v632 = vmul.f32 %v617, %v492
        %v633 = vmul.f32 %v617, %v493
        %v634 = vmul.f32 %v617, %v494
        %v635 = vmul.f32 %v617, %v495
        %v636 = vmul.f32 %v617, %v496
        %v637 = vmul.f32 %v617, %v497
        %v638 = vmul.f32 %v617, %v498
        %v639 = vmul.f32 %v621, %v483
        %v640 = vmul.f32 %v621, %v484
        %v641 = vmul.f32 %v621, %v485
        %v642 = vmul.f32 %v621, %v486
        %v643 = vmul.f32 %v621, %v487
        %v644 = vmul.f32 %v621, %v488
        %v645 = vmul.f32 %v621, %v489
        %v646 = vmul.f32 %v621, %v490
        %v647 = vmul.f32 %v621, %v491
        %v648 = vmul.f32 %v621, %v492
        %v649 = vmul.f32 %v621, %v493
        %v650 = vmul.f32 %v621, %v494
        %v651 = vmul.f32 %v621, %v495
        %v652 = vmul.f32 %v621, %v496
        %v653 = vmul.f32 %v621, %v497
        %v654 = vmul.f32 %v621, %v498
        %v655 = vadd.f32 %v583, %v623
        %v656 = vadd.f32 %v584, %v624
        %v657 = vadd.f32 %v585, %v625
        %v658 = vadd.f32 %v586, %v626
        %v659 = vadd.f32 %v587, %v627
        %v660 = vadd.f32 %v588, %v628
        %v661 = vadd.f32 %v589, %v629
        %v662 = vadd.f32 %v590, %v630
        %v663 = vadd.f32 %v591, %v631
        %v664 = vadd.f32 %v592, %v632
        %v665 = vadd.f32 %v593, %v633
        %v666 = vadd.f32 %v594, %v634
        %v667 = vadd.f32 %v595, %v635
        %v668 = vadd.f32 %v596, %v636
        %v669 = vadd.f32 %v597, %v637
        %v670 = vadd.f32 %v598, %v638
        %v671 = vadd.f32 %v599, %v639
        %v672 = vadd.f32 %v600, %v640
        %v673 = vadd.f32 %v601, %v641
        %v674 = vadd.f32 %v602, %v642
        %v675 = vadd.f32 %v603, %v643
        %v676 = vadd.f32 %v604, %v644
        %v677 = vadd.f32 %v605, %v645
        %v678 = vadd.f32 %v606, %v646
        %v679 = vadd.f32 %v607, %v647
        %v680 = vadd.f32 %v608, %v648
        %v681 = vadd.f32 %v609, %v649
        %v682 = vadd.f32 %v610, %v650
        %v683 = vadd.f32 %v611, %v651
        %v684 = vadd.f32 %v612, %v652
        %v685 = vadd.f32 %v613, %v653
        %v686 = vadd.f32 %v614, %v654
        %687 = vset.pattern.permute.xlu0 3
        %688 = vperm.xlu0 %687, %v499
        %v689 = vpop.permute.xlu0 %688
        %691 = vset.pattern.permute.xlu0 3
        %692 = vperm.xlu0 %691, %v500
        %v693 = vpop.permute.xlu0 %692
        %v695 = vadd.f32 %v655, %v689
        %v696 = vadd.f32 %v656, %v689
        %v697 = vadd.f32 %v657, %v689
        %v698 = vadd.f32 %v658, %v689
        %v699 = vadd.f32 %v659, %v689
        %v700 = vadd.f32 %v660, %v689
        %v701 = vadd.f32 %v661, %v689
        %v702 = vadd.f32 %v662, %v689
        %v703 = vadd.f32 %v663, %v689
        %v704 = vadd.f32 %v664, %v689
        %v705 = vadd.f32 %v665, %v689
        %v706 = vadd.f32 %v666, %v689
        %v707 = vadd.f32 %v667, %v689
        %v708 = vadd.f32 %v668, %v689
        %v709 = vadd.f32 %v669, %v689
        %v710 = vadd.f32 %v670, %v689
        %v711 = vadd.f32 %v671, %v693
        %v712 = vadd.f32 %v672, %v693
        %v713 = vadd.f32 %v673, %v693
        %v714 = vadd.f32 %v674, %v693
        %v715 = vadd.f32 %v675, %v693
        %v716 = vadd.f32 %v676, %v693
        %v717 = vadd.f32 %v677, %v693
        %v718 = vadd.f32 %v678, %v693
        %v719 = vadd.f32 %v679, %v693
        %v720 = vadd.f32 %v680, %v693
        %v721 = vadd.f32 %v681, %v693
        %v722 = vadd.f32 %v682, %v693
        %v723 = vadd.f32 %v683, %v693
        %v724 = vadd.f32 %v684, %v693
        %v725 = vadd.f32 %v685, %v693
        %v726 = vadd.f32 %v686, %v693
        %v727 = vand.u32 2147483647, %v695
        %vm728 = vcmp.le.f32.partialorder %v727, 0.7853982
        %vm729 = vcmp.lt.s32.totalorder %v695, 0
        %v730 = vand.u32 %v695, 2139095040
        %v731 = vshrl.u32 %v730, 23
        %v732 = vsub.s32 %v731, 127
        %v733 = vand.u32 2147483647, %v695
        %v734 = vand.u32 %v733, 8388607
        %v735 = vor.u32 %v734, 8388608
        %v736 = vsub.s32 0, %v735
        %v737 = vadd.s32 %v732, 1
        %vm738 = vcmp.gt.s32.totalorder %v737, 0
        %v739 = vsel %vm738, %v737, 0
        %v740 = vshrl.u32 %v739, 5
        %v741 = vand.u32 %v739, 31
        %v742 = vsub.s32 32, %v741
        %v743 = vshrl.u32 683565275, %v742
        %v744 = vshll.u32 683565275, %v741
        %v745 = vshrl.u32 2475754826, %v742
        %v746 = vor.u32 %v744, %v745
        %v747 = vshll.u32 2475754826, %v741
        %v748 = vshrl.u32 2131351028, %v742
        %v749 = vor.u32 %v747, %v748
        %v750 = vshll.u32 2131351028, %v741
        %v751 = vshrl.u32 2102212464, %v742
        %v752 = vor.u32 %v750, %v751
        %v753 = vshll.u32 2102212464, %v741
        %v754 = vshrl.u32 920167782, %v742
        %v755 = vor.u32 %v753, %v754
        %v756 = vshll.u32 920167782, %v741
        %v757 = vshrl.u32 1326507024, %v742
        %v758 = vor.u32 %v756, %v757
        %vm759 = vcmp.lt.s32.totalorder %v740, 1
        %vm760 = vcmp.lt.s32.totalorder %v740, 2
        %vm761 = vcmp.lt.s32.totalorder %v740, 3
        %vm762 = vcmp.lt.s32.totalorder %v740, 4
        %v763 = vsel %vm759, %v743, %v746
        %v764 = vsel %vm762, %v752, 2102212464
        %v765 = vsel %vm761, %v749, %v764
        %v766 = vsel %vm760, %v763, %v765
        %v767 = vsel %vm759, %v746, %v749
        %v768 = vsel %vm762, %v755, 920167782
        %v769 = vsel %vm761, %v752, %v768
        %v770 = vsel %vm760, %v767, %v769
        %v771 = vsel %vm759, %v749, %v752
        %v772 = vsel %vm762, %v758, 1326507024
        %v773 = vsel %vm761, %v755, %v772
        %v774 = vsel %vm760, %v771, %v773
        %v775 = vshll.u32 %v735, 8
        %v776 = vand.u32 %v775, 65535
        %v777 = vshrl.u32 %v775, 16
        %v778 = vand.u32 %v774, 65535
        %v779 = vshrl.u32 %v774, 16
        %v780 = vmul.u32 %v776, %v778
        %v781 = vmul.u32 %v776, %v779
        %v782 = vmul.u32 %v777, %v778
        %v783 = vmul.u32 %v777, %v779
        %v784 = vshll.u32 %v781, 16
        %v785 = vshrl.u32 %v781, 16
        %v786 = vshll.u32 %v782, 16
        %v787 = vshrl.u32 %v782, 16
        %vm788 = vc.u32 %v780, %v784
        %v789 = vsel %vm788, 1, 0
        %v790 = vadd.s32 %v780, %v784
        %v791 = vadd.s32 %v783, %v789
        %vm792 = vc.u32 %v790, %v786
        %v793 = vsel %vm792, 1, 0
        %v794 = vadd.s32 %v790, %v786
        %v795 = vadd.s32 %v791, %v793
        %v796 = vadd.s32 %v795, %v785
        %v797 = vadd.s32 %v796, %v787
        %v798 = vand.u32 %v775, 65535
        %v799 = vshrl.u32 %v775, 16
        %v800 = vand.u32 %v770, 65535
        %v801 = vshrl.u32 %v770, 16
        %v802 = vmul.u32 %v798, %v800
        %v803 = vmul.u32 %v798, %v801
        %v804 = vmul.u32 %v799, %v800
        %v805 = vmul.u32 %v799, %v801
        %v806 = vshll.u32 %v803, 16
        %v807 = vshrl.u32 %v803, 16
        %v808 = vshll.u32 %v804, 16
        %v809 = vshrl.u32 %v804, 16
        %vm810 = vc.u32 %v802, %v806
        %v811 = vsel %vm810, 1, 0
        %v812 = vadd.s32 %v802, %v806
        %v813 = vadd.s32 %v805, %v811
        %vm814 = vc.u32 %v812, %v808
        %v815 = vsel %vm814, 1, 0
        %v816 = vadd.s32 %v812, %v808
        %v817 = vadd.s32 %v813, %v815
        %v818 = vadd.s32 %v817, %v807
        %v819 = vadd.s32 %v818, %v809
        %v820 = vmul.u32 %v775, %v766
        %v821 = vadd.s32 %v797, %v816
        %vm822 = vc.u32 %v797, %v816
        %v823 = vadd.s32 %v819, 1
        %v824 = vsel %vm822, %v823, %v819
        %v825 = vadd.s32 %v820, %v824
        %v826 = vadd.s32 %v825, 536870912
        %v827 = vshrl.u32 %v826, 30
        %v828 = vshll.u32 %v827, 30
        %v829 = vsub.s32 %v825, %v828
        %vm830 = vcmp.lt.s32.totalorder %v829, 0
        %v831 = vsub.s32 0, %v829
        %v832 = vsel %vm830, %v831, %v829
        %v833 = vclz %v832
        %v834 = vsub.s32 %v833, 2
        %vm835 = vcmp.gt.s32.totalorder 0, %v834
        %v836 = vsel %vm835, 0, %v834
        %v837 = vsub.s32 32, %v836
        %v838 = vshll.u32 %v829, %v836
        %v839 = vshrl.u32 %v821, %v837
        %v840 = vor.u32 %v838, %v839
        %v841 = vsub.s32 4294967266, %v836
        %v842 = vadd.s32 %v841, 127
        %v843 = vshll.u32 %v842, 23
        %v844 = vor.u32 4788187, %v843
        %v845 = vand.u32 2147483647, %v844
        %v847 = vcvt.s32.f32 %v840
        %v848 = vmul.f32 %v847, %v845
        %v849 = vxor.u32 %v848, 2147483648
        %v850 = vsel %vm729, %v849, %v848
        %v851 = vsub.s32 4, %v827
        %v852 = vsel %vm729, %v851, %v827
        %v853 = vsel %vm728, %v695, %v850
        %v854 = vsel %vm728, 0, %v852
        %v855 = vmul.f32 %v853, %v853
        %v856 = vmul.f32 %v855, -0.001358992
        %v857 = vadd.f32 %v856, 0.041655596
        %v858 = vmul.f32 %v855, %v857
        %v859 = vadd.f32 %v858, -0.4999988
        %v860 = vmul.f32 %v855, %v859
        %v861 = vadd.f32 1.0, %v860
        %v862 = vmul.f32 %v853, %v853
        %v863 = vmul.f32 %v862, -0.00019511016
        %v864 = vadd.f32 %v863, 0.008332121
        %v865 = vmul.f32 %v862, %v864
        %v866 = vadd.f32 %v865, -0.16666654
        %v867 = vmul.f32 %v862, %v866
        %v868 = vadd.f32 %v867, 1.0
        %v869 = vmul.f32 %v868, %v853
        %vm870 = vweird.f32 %v695
        %v871 = vadd.s32 %v854, 3
        %v872 = vand.u32 %v871, 3
        %vm873 = vcmp.lt.s32.totalorder %v872, 2
        %vm874 = vcmp.eq.s32.totalorder %v872, 0
        %v875 = vxor.u32 %v869, 2147483648
        %v876 = vsel %vm874, %v861, %v875
        %vm877 = vcmp.eq.s32.totalorder %v872, 2
        %v878 = vxor.u32 %v861, 2147483648
        %v879 = vsel %vm877, %v878, %v869
        %v880 = vsel %vm873, %v876, %v879
        %v881 = vsel %vm870, nan, %v880
        %v882 = vand.u32 2147483647, %v696
        %vm883 = vcmp.le.f32.partialorder %v882, 0.7853982
        %vm884 = vcmp.lt.s32.totalorder %v696, 0
        %v885 = vand.u32 %v696, 2139095040
        %v886 = vshrl.u32 %v885, 23
        %v887 = vsub.s32 %v886, 127
        %v888 = vand.u32 2147483647, %v696
        %v889 = vand.u32 %v888, 8388607
        %v890 = vor.u32 %v889, 8388608
        %v891 = vsub.s32 0, %v890
        %v892 = vadd.s32 %v887, 1
        %vm893 = vcmp.gt.s32.totalorder %v892, 0
        %v894 = vsel %vm893, %v892, 0
        %v895 = vshrl.u32 %v894, 5
        %v896 = vand.u32 %v894, 31
        %v897 = vsub.s32 32, %v896
        %v898 = vshrl.u32 683565275, %v897
        %v899 = vshll.u32 683565275, %v896
        %v900 = vshrl.u32 2475754826, %v897
        %v901 = vor.u32 %v899, %v900
        %v902 = vshll.u32 2475754826, %v896
        %v903 = vshrl.u32 2131351028, %v897
        %v904 = vor.u32 %v902, %v903
        %v905 = vshll.u32 2131351028, %v896
        %v906 = vshrl.u32 2102212464, %v897
        %v907 = vor.u32 %v905, %v906
        %v908 = vshll.u32 2102212464, %v896
        %v909 = vshrl.u32 920167782, %v897
        %v910 = vor.u32 %v908, %v909
        %v911 = vshll.u32 920167782, %v896
        %v912 = vshrl.u32 1326507024, %v897
        %v913 = vor.u32 %v911, %v912
        %vm914 = vcmp.lt.s32.totalorder %v895, 1
        %vm915 = vcmp.lt.s32.totalorder %v895, 2
        %vm916 = vcmp.lt.s32.totalorder %v895, 3
        %vm917 = vcmp.lt.s32.totalorder %v895, 4
        %v918 = vsel %vm914, %v898, %v901
        %v919 = vsel %vm917, %v907, 2102212464
        %v920 = vsel %vm916, %v904, %v919
        %v921 = vsel %vm915, %v918, %v920
        %v922 = vsel %vm914, %v901, %v904
        %v923 = vsel %vm917, %v910, 920167782
        %v924 = vsel %vm916, %v907, %v923
        %v925 = vsel %vm915, %v922, %v924
        %v926 = vsel %vm914, %v904, %v907
        %v927 = vsel %vm917, %v913, 1326507024
        %v928 = vsel %vm916, %v910, %v927
        %v929 = vsel %vm915, %v926, %v928
        %v930 = vshll.u32 %v890, 8
        %v931 = vand.u32 %v930, 65535
        %v932 = vshrl.u32 %v930, 16
        %v933 = vand.u32 %v929, 65535
        %v934 = vshrl.u32 %v929, 16
        %v935 = vmul.u32 %v931, %v933
        %v936 = vmul.u32 %v931, %v934
        %v937 = vmul.u32 %v932, %v933
        %v938 = vmul.u32 %v932, %v934
        %v939 = vshll.u32 %v936, 16
        %v940 = vshrl.u32 %v936, 16
        %v941 = vshll.u32 %v937, 16
        %v942 = vshrl.u32 %v937, 16
        %vm943 = vc.u32 %v935, %v939
        %v944 = vsel %vm943, 1, 0
        %v945 = vadd.s32 %v935, %v939
        %v946 = vadd.s32 %v938, %v944
        %vm947 = vc.u32 %v945, %v941
        %v948 = vsel %vm947, 1, 0
        %v949 = vadd.s32 %v945, %v941
        %v950 = vadd.s32 %v946, %v948
        %v951 = vadd.s32 %v950, %v940
        %v952 = vadd.s32 %v951, %v942
        %v953 = vand.u32 %v930, 65535
        %v954 = vshrl.u32 %v930, 16
        %v955 = vand.u32 %v925, 65535
        %v956 = vshrl.u32 %v925, 16
        %v957 = vmul.u32 %v953, %v955
        %v958 = vmul.u32 %v953, %v956
        %v959 = vmul.u32 %v954, %v955
        %v960 = vmul.u32 %v954, %v956
        %v961 = vshll.u32 %v958, 16
        %v962 = vshrl.u32 %v958, 16
        %v963 = vshll.u32 %v959, 16
        %v964 = vshrl.u32 %v959, 16
        %vm965 = vc.u32 %v957, %v961
        %v966 = vsel %vm965, 1, 0
        %v967 = vadd.s32 %v957, %v961
        %v968 = vadd.s32 %v960, %v966
        %vm969 = vc.u32 %v967, %v963
        %v970 = vsel %vm969, 1, 0
        %v971 = vadd.s32 %v967, %v963
        %v972 = vadd.s32 %v968, %v970
        %v973 = vadd.s32 %v972, %v962
        %v974 = vadd.s32 %v973, %v964
        %v975 = vmul.u32 %v930, %v921
        %v976 = vadd.s32 %v952, %v971
        %vm977 = vc.u32 %v952, %v971
        %v978 = vadd.s32 %v974, 1
        %v979 = vsel %vm977, %v978, %v974
        %v980 = vadd.s32 %v975, %v979
        %v981 = vadd.s32 %v980, 536870912
        %v982 = vshrl.u32 %v981, 30
        %v983 = vshll.u32 %v982, 30
        %v984 = vsub.s32 %v980, %v983
        %vm985 = vcmp.lt.s32.totalorder %v984, 0
        %v986 = vsub.s32 0, %v984
        %v987 = vsel %vm985, %v986, %v984
        %v988 = vclz %v987
        %v989 = vsub.s32 %v988, 2
        %vm990 = vcmp.gt.s32.totalorder 0, %v989
        %v991 = vsel %vm990, 0, %v989
        %v992 = vsub.s32 32, %v991
        %v993 = vshll.u32 %v984, %v991
        %v994 = vshrl.u32 %v976, %v992
        %v995 = vor.u32 %v993, %v994
        %v996 = vsub.s32 4294967266, %v991
        %v997 = vadd.s32 %v996, 127
        %v998 = vshll.u32 %v997, 23
        %v999 = vor.u32 4788187, %v998
        %v1000 = vand.u32 2147483647, %v999
        %v1002 = vcvt.s32.f32 %v995
        %v1003 = vmul.f32 %v1002, %v1000
        %v1004 = vxor.u32 %v1003, 2147483648
        %v1005 = vsel %vm884, %v1004, %v1003
        %v1006 = vsub.s32 4, %v982
        %v1007 = vsel %vm884, %v1006, %v982
        %v1008 = vsel %vm883, %v696, %v1005
        %v1009 = vsel %vm883, 0, %v1007
        %v1010 = vmul.f32 %v1008, %v1008
        %v1011 = vmul.f32 %v1010, -0.001358992
        %v1012 = vadd.f32 %v1011, 0.041655596
        %v1013 = vmul.f32 %v1010, %v1012
        %v1014 = vadd.f32 %v1013, -0.4999988
        %v1015 = vmul.f32 %v1010, %v1014
        %v1016 = vadd.f32 1.0, %v1015
        %v1017 = vmul.f32 %v1008, %v1008
        %v1018 = vmul.f32 %v1017, -0.00019511016
        %v1019 = vadd.f32 %v1018, 0.008332121
        %v1020 = vmul.f32 %v1017, %v1019
        %v1021 = vadd.f32 %v1020, -0.16666654
        %v1022 = vmul.f32 %v1017, %v1021
        %v1023 = vadd.f32 %v1022, 1.0
        %v1024 = vmul.f32 %v1023, %v1008
        %vm1025 = vweird.f32 %v696
        %v1026 = vadd.s32 %v1009, 3
        %v1027 = vand.u32 %v1026, 3
        %vm1028 = vcmp.lt.s32.totalorder %v1027, 2
        %vm1029 = vcmp.eq.s32.totalorder %v1027, 0
        %v1030 = vxor.u32 %v1024, 2147483648
        %v1031 = vsel %vm1029, %v1016, %v1030
        %vm1032 = vcmp.eq.s32.totalorder %v1027, 2
        %v1033 = vxor.u32 %v1016, 2147483648
        %v1034 = vsel %vm1032, %v1033, %v1024
        %v1035 = vsel %vm1028, %v1031, %v1034
        %v1036 = vsel %vm1025, nan, %v1035
        %v1037 = vand.u32 2147483647, %v697
        %vm1038 = vcmp.le.f32.partialorder %v1037, 0.7853982
        %vm1039 = vcmp.lt.s32.totalorder %v697, 0
        %v1040 = vand.u32 %v697, 2139095040
        %v1041 = vshrl.u32 %v1040, 23
        %v1042 = vsub.s32 %v1041, 127
        %v1043 = vand.u32 2147483647, %v697
        %v1044 = vand.u32 %v1043, 8388607
        %v1045 = vor.u32 %v1044, 8388608
        %v1046 = vsub.s32 0, %v1045
        %v1047 = vadd.s32 %v1042, 1
        %vm1048 = vcmp.gt.s32.totalorder %v1047, 0
        %v1049 = vsel %vm1048, %v1047, 0
        %v1050 = vshrl.u32 %v1049, 5
        %v1051 = vand.u32 %v1049, 31
        %v1052 = vsub.s32 32, %v1051
        %v1053 = vshrl.u32 683565275, %v1052
        %v1054 = vshll.u32 683565275, %v1051
        %v1055 = vshrl.u32 2475754826, %v1052
        %v1056 = vor.u32 %v1054, %v1055
        %v1057 = vshll.u32 2475754826, %v1051
        %v1058 = vshrl.u32 2131351028, %v1052
        %v1059 = vor.u32 %v1057, %v1058
        %v1060 = vshll.u32 2131351028, %v1051
        %v1061 = vshrl.u32 2102212464, %v1052
        %v1062 = vor.u32 %v1060, %v1061
        %v1063 = vshll.u32 2102212464, %v1051
        %v1064 = vshrl.u32 920167782, %v1052
        %v1065 = vor.u32 %v1063, %v1064
        %v1066 = vshll.u32 920167782, %v1051
        %v1067 = vshrl.u32 1326507024, %v1052
        %v1068 = vor.u32 %v1066, %v1067
        %vm1069 = vcmp.lt.s32.totalorder %v1050, 1
        %vm1070 = vcmp.lt.s32.totalorder %v1050, 2
        %vm1071 = vcmp.lt.s32.totalorder %v1050, 3
        %vm1072 = vcmp.lt.s32.totalorder %v1050, 4
        %v1073 = vsel %vm1069, %v1053, %v1056
        %v1074 = vsel %vm1072, %v1062, 2102212464
        %v1075 = vsel %vm1071, %v1059, %v1074
        %v1076 = vsel %vm1070, %v1073, %v1075
        %v1077 = vsel %vm1069, %v1056, %v1059
        %v1078 = vsel %vm1072, %v1065, 920167782
        %v1079 = vsel %vm1071, %v1062, %v1078
        %v1080 = vsel %vm1070, %v1077, %v1079
        %v1081 = vsel %vm1069, %v1059, %v1062
        %v1082 = vsel %vm1072, %v1068, 1326507024
        %v1083 = vsel %vm1071, %v1065, %v1082
        %v1084 = vsel %vm1070, %v1081, %v1083
        %v1085 = vshll.u32 %v1045, 8
        %v1086 = vand.u32 %v1085, 65535
        %v1087 = vshrl.u32 %v1085, 16
        %v1088 = vand.u32 %v1084, 65535
        %v1089 = vshrl.u32 %v1084, 16
        %v1090 = vmul.u32 %v1086, %v1088
        %v1091 = vmul.u32 %v1086, %v1089
        %v1092 = vmul.u32 %v1087, %v1088
        %v1093 = vmul.u32 %v1087, %v1089
        %v1094 = vshll.u32 %v1091, 16
        %v1095 = vshrl.u32 %v1091, 16
        %v1096 = vshll.u32 %v1092, 16
        %v1097 = vshrl.u32 %v1092, 16
        %vm1098 = vc.u32 %v1090, %v1094
        %v1099 = vsel %vm1098, 1, 0
        %v1100 = vadd.s32 %v1090, %v1094
        %v1101 = vadd.s32 %v1093, %v1099
        %vm1102 = vc.u32 %v1100, %v1096
        %v1103 = vsel %vm1102, 1, 0
        %v1104 = vadd.s32 %v1100, %v1096
        %v1105 = vadd.s32 %v1101, %v1103
        %v1106 = vadd.s32 %v1105, %v1095
        %v1107 = vadd.s32 %v1106, %v1097
        %v1108 = vand.u32 %v1085, 65535
        %v1109 = vshrl.u32 %v1085, 16
        %v1110 = vand.u32 %v1080, 65535
        %v1111 = vshrl.u32 %v1080, 16
        %v1112 = vmul.u32 %v1108, %v1110
        %v1113 = vmul.u32 %v1108, %v1111
        %v1114 = vmul.u32 %v1109, %v1110
        %v1115 = vmul.u32 %v1109, %v1111
        %v1116 = vshll.u32 %v1113, 16
        %v1117 = vshrl.u32 %v1113, 16
        %v1118 = vshll.u32 %v1114, 16
        %v1119 = vshrl.u32 %v1114, 16
        %vm1120 = vc.u32 %v1112, %v1116
        %v1121 = vsel %vm1120, 1, 0
        %v1122 = vadd.s32 %v1112, %v1116
        %v1123 = vadd.s32 %v1115, %v1121
        %vm1124 = vc.u32 %v1122, %v1118
        %v1125 = vsel %vm1124, 1, 0
        %v1126 = vadd.s32 %v1122, %v1118
        %v1127 = vadd.s32 %v1123, %v1125
        %v1128 = vadd.s32 %v1127, %v1117
        %v1129 = vadd.s32 %v1128, %v1119
        %v1130 = vmul.u32 %v1085, %v1076
        %v1131 = vadd.s32 %v1107, %v1126
        %vm1132 = vc.u32 %v1107, %v1126
        %v1133 = vadd.s32 %v1129, 1
        %v1134 = vsel %vm1132, %v1133, %v1129
        %v1135 = vadd.s32 %v1130, %v1134
        %v1136 = vadd.s32 %v1135, 536870912
        %v1137 = vshrl.u32 %v1136, 30
        %v1138 = vshll.u32 %v1137, 30
        %v1139 = vsub.s32 %v1135, %v1138
        %vm1140 = vcmp.lt.s32.totalorder %v1139, 0
        %v1141 = vsub.s32 0, %v1139
        %v1142 = vsel %vm1140, %v1141, %v1139
        %v1143 = vclz %v1142
        %v1144 = vsub.s32 %v1143, 2
        %vm1145 = vcmp.gt.s32.totalorder 0, %v1144
        %v1146 = vsel %vm1145, 0, %v1144
        %v1147 = vsub.s32 32, %v1146
        %v1148 = vshll.u32 %v1139, %v1146
        %v1149 = vshrl.u32 %v1131, %v1147
        %v1150 = vor.u32 %v1148, %v1149
        %v1151 = vsub.s32 4294967266, %v1146
        %v1152 = vadd.s32 %v1151, 127
        %v1153 = vshll.u32 %v1152, 23
        %v1154 = vor.u32 4788187, %v1153
        %v1155 = vand.u32 2147483647, %v1154
        %v1157 = vcvt.s32.f32 %v1150
        %v1158 = vmul.f32 %v1157, %v1155
        %v1159 = vxor.u32 %v1158, 2147483648
        %v1160 = vsel %vm1039, %v1159, %v1158
        %v1161 = vsub.s32 4, %v1137
        %v1162 = vsel %vm1039, %v1161, %v1137
        %v1163 = vsel %vm1038, %v697, %v1160
        %v1164 = vsel %vm1038, 0, %v1162
        %v1165 = vmul.f32 %v1163, %v1163
        %v1166 = vmul.f32 %v1165, -0.001358992
        %v1167 = vadd.f32 %v1166, 0.041655596
        %v1168 = vmul.f32 %v1165, %v1167
        %v1169 = vadd.f32 %v1168, -0.4999988
        %v1170 = vmul.f32 %v1165, %v1169
        %v1171 = vadd.f32 1.0, %v1170
        %v1172 = vmul.f32 %v1163, %v1163
        %v1173 = vmul.f32 %v1172, -0.00019511016
        %v1174 = vadd.f32 %v1173, 0.008332121
        %v1175 = vmul.f32 %v1172, %v1174
        %v1176 = vadd.f32 %v1175, -0.16666654
        %v1177 = vmul.f32 %v1172, %v1176
        %v1178 = vadd.f32 %v1177, 1.0
        %v1179 = vmul.f32 %v1178, %v1163
        %vm1180 = vweird.f32 %v697
        %v1181 = vadd.s32 %v1164, 3
        %v1182 = vand.u32 %v1181, 3
        %vm1183 = vcmp.lt.s32.totalorder %v1182, 2
        %vm1184 = vcmp.eq.s32.totalorder %v1182, 0
        %v1185 = vxor.u32 %v1179, 2147483648
        %v1186 = vsel %vm1184, %v1171, %v1185
        %vm1187 = vcmp.eq.s32.totalorder %v1182, 2
        %v1188 = vxor.u32 %v1171, 2147483648
        %v1189 = vsel %vm1187, %v1188, %v1179
        %v1190 = vsel %vm1183, %v1186, %v1189
        %v1191 = vsel %vm1180, nan, %v1190
        %v1192 = vand.u32 2147483647, %v698
        %vm1193 = vcmp.le.f32.partialorder %v1192, 0.7853982
        %vm1194 = vcmp.lt.s32.totalorder %v698, 0
        %v1195 = vand.u32 %v698, 2139095040
        %v1196 = vshrl.u32 %v1195, 23
        %v1197 = vsub.s32 %v1196, 127
        %v1198 = vand.u32 2147483647, %v698
        %v1199 = vand.u32 %v1198, 8388607
        %v1200 = vor.u32 %v1199, 8388608
        %v1201 = vsub.s32 0, %v1200
        %v1202 = vadd.s32 %v1197, 1
        %vm1203 = vcmp.gt.s32.totalorder %v1202, 0
        %v1204 = vsel %vm1203, %v1202, 0
        %v1205 = vshrl.u32 %v1204, 5
        %v1206 = vand.u32 %v1204, 31
        %v1207 = vsub.s32 32, %v1206
        %v1208 = vshrl.u32 683565275, %v1207
        %v1209 = vshll.u32 683565275, %v1206
        %v1210 = vshrl.u32 2475754826, %v1207
        %v1211 = vor.u32 %v1209, %v1210
        %v1212 = vshll.u32 2475754826, %v1206
        %v1213 = vshrl.u32 2131351028, %v1207
        %v1214 = vor.u32 %v1212, %v1213
        %v1215 = vshll.u32 2131351028, %v1206
        %v1216 = vshrl.u32 2102212464, %v1207
        %v1217 = vor.u32 %v1215, %v1216
        %v1218 = vshll.u32 2102212464, %v1206
        %v1219 = vshrl.u32 920167782, %v1207
        %v1220 = vor.u32 %v1218, %v1219
        %v1221 = vshll.u32 920167782, %v1206
        %v1222 = vshrl.u32 1326507024, %v1207
        %v1223 = vor.u32 %v1221, %v1222
        %vm1224 = vcmp.lt.s32.totalorder %v1205, 1
        %vm1225 = vcmp.lt.s32.totalorder %v1205, 2
        %vm1226 = vcmp.lt.s32.totalorder %v1205, 3
        %vm1227 = vcmp.lt.s32.totalorder %v1205, 4
        %v1228 = vsel %vm1224, %v1208, %v1211
        %v1229 = vsel %vm1227, %v1217, 2102212464
        %v1230 = vsel %vm1226, %v1214, %v1229
        %v1231 = vsel %vm1225, %v1228, %v1230
        %v1232 = vsel %vm1224, %v1211, %v1214
        %v1233 = vsel %vm1227, %v1220, 920167782
        %v1234 = vsel %vm1226, %v1217, %v1233
        %v1235 = vsel %vm1225, %v1232, %v1234
        %v1236 = vsel %vm1224, %v1214, %v1217
        %v1237 = vsel %vm1227, %v1223, 1326507024
        %v1238 = vsel %vm1226, %v1220, %v1237
        %v1239 = vsel %vm1225, %v1236, %v1238
        %v1240 = vshll.u32 %v1200, 8
        %v1241 = vand.u32 %v1240, 65535
        %v1242 = vshrl.u32 %v1240, 16
        %v1243 = vand.u32 %v1239, 65535
        %v1244 = vshrl.u32 %v1239, 16
        %v1245 = vmul.u32 %v1241, %v1243
        %v1246 = vmul.u32 %v1241, %v1244
        %v1247 = vmul.u32 %v1242, %v1243
        %v1248 = vmul.u32 %v1242, %v1244
        %v1249 = vshll.u32 %v1246, 16
        %v1250 = vshrl.u32 %v1246, 16
        %v1251 = vshll.u32 %v1247, 16
        %v1252 = vshrl.u32 %v1247, 16
        %vm1253 = vc.u32 %v1245, %v1249
        %v1254 = vsel %vm1253, 1, 0
        %v1255 = vadd.s32 %v1245, %v1249
        %v1256 = vadd.s32 %v1248, %v1254
        %vm1257 = vc.u32 %v1255, %v1251
        %v1258 = vsel %vm1257, 1, 0
        %v1259 = vadd.s32 %v1255, %v1251
        %v1260 = vadd.s32 %v1256, %v1258
        %v1261 = vadd.s32 %v1260, %v1250
        %v1262 = vadd.s32 %v1261, %v1252
        %v1263 = vand.u32 %v1240, 65535
        %v1264 = vshrl.u32 %v1240, 16
        %v1265 = vand.u32 %v1235, 65535
        %v1266 = vshrl.u32 %v1235, 16
        %v1267 = vmul.u32 %v1263, %v1265
        %v1268 = vmul.u32 %v1263, %v1266
        %v1269 = vmul.u32 %v1264, %v1265
        %v1270 = vmul.u32 %v1264, %v1266
        %v1271 = vshll.u32 %v1268, 16
        %v1272 = vshrl.u32 %v1268, 16
        %v1273 = vshll.u32 %v1269, 16
        %v1274 = vshrl.u32 %v1269, 16
        %vm1275 = vc.u32 %v1267, %v1271
        %v1276 = vsel %vm1275, 1, 0
        %v1277 = vadd.s32 %v1267, %v1271
        %v1278 = vadd.s32 %v1270, %v1276
        %vm1279 = vc.u32 %v1277, %v1273
        %v1280 = vsel %vm1279, 1, 0
        %v1281 = vadd.s32 %v1277, %v1273
        %v1282 = vadd.s32 %v1278, %v1280
        %v1283 = vadd.s32 %v1282, %v1272
        %v1284 = vadd.s32 %v1283, %v1274
        %v1285 = vmul.u32 %v1240, %v1231
        %v1286 = vadd.s32 %v1262, %v1281
        %vm1287 = vc.u32 %v1262, %v1281
        %v1288 = vadd.s32 %v1284, 1
        %v1289 = vsel %vm1287, %v1288, %v1284
        %v1290 = vadd.s32 %v1285, %v1289
        %v1291 = vadd.s32 %v1290, 536870912
        %v1292 = vshrl.u32 %v1291, 30
        %v1293 = vshll.u32 %v1292, 30
        %v1294 = vsub.s32 %v1290, %v1293
        %vm1295 = vcmp.lt.s32.totalorder %v1294, 0
        %v1296 = vsub.s32 0, %v1294
        %v1297 = vsel %vm1295, %v1296, %v1294
        %v1298 = vclz %v1297
        %v1299 = vsub.s32 %v1298, 2
        %vm1300 = vcmp.gt.s32.totalorder 0, %v1299
        %v1301 = vsel %vm1300, 0, %v1299
        %v1302 = vsub.s32 32, %v1301
        %v1303 = vshll.u32 %v1294, %v1301
        %v1304 = vshrl.u32 %v1286, %v1302
        %v1305 = vor.u32 %v1303, %v1304
        %v1306 = vsub.s32 4294967266, %v1301
        %v1307 = vadd.s32 %v1306, 127
        %v1308 = vshll.u32 %v1307, 23
        %v1309 = vor.u32 4788187, %v1308
        %v1310 = vand.u32 2147483647, %v1309
        %v1312 = vcvt.s32.f32 %v1305
        %v1313 = vmul.f32 %v1312, %v1310
        %v1314 = vxor.u32 %v1313, 2147483648
        %v1315 = vsel %vm1194, %v1314, %v1313
        %v1316 = vsub.s32 4, %v1292
        %v1317 = vsel %vm1194, %v1316, %v1292
        %v1318 = vsel %vm1193, %v698, %v1315
        %v1319 = vsel %vm1193, 0, %v1317
        %v1320 = vmul.f32 %v1318, %v1318
        %v1321 = vmul.f32 %v1320, -0.001358992
        %v1322 = vadd.f32 %v1321, 0.041655596
        %v1323 = vmul.f32 %v1320, %v1322
        %v1324 = vadd.f32 %v1323, -0.4999988
        %v1325 = vmul.f32 %v1320, %v1324
        %v1326 = vadd.f32 1.0, %v1325
        %v1327 = vmul.f32 %v1318, %v1318
        %v1328 = vmul.f32 %v1327, -0.00019511016
        %v1329 = vadd.f32 %v1328, 0.008332121
        %v1330 = vmul.f32 %v1327, %v1329
        %v1331 = vadd.f32 %v1330, -0.16666654
        %v1332 = vmul.f32 %v1327, %v1331
        %v1333 = vadd.f32 %v1332, 1.0
        %v1334 = vmul.f32 %v1333, %v1318
        %vm1335 = vweird.f32 %v698
        %v1336 = vadd.s32 %v1319, 3
        %v1337 = vand.u32 %v1336, 3
        %vm1338 = vcmp.lt.s32.totalorder %v1337, 2
        %vm1339 = vcmp.eq.s32.totalorder %v1337, 0
        %v1340 = vxor.u32 %v1334, 2147483648
        %v1341 = vsel %vm1339, %v1326, %v1340
        %vm1342 = vcmp.eq.s32.totalorder %v1337, 2
        %v1343 = vxor.u32 %v1326, 2147483648
        %v1344 = vsel %vm1342, %v1343, %v1334
        %v1345 = vsel %vm1338, %v1341, %v1344
        %v1346 = vsel %vm1335, nan, %v1345
        %v1347 = vand.u32 2147483647, %v699
        %vm1348 = vcmp.le.f32.partialorder %v1347, 0.7853982
        %vm1349 = vcmp.lt.s32.totalorder %v699, 0
        %v1350 = vand.u32 %v699, 2139095040
        %v1351 = vshrl.u32 %v1350, 23
        %v1352 = vsub.s32 %v1351, 127
        %v1353 = vand.u32 2147483647, %v699
        %v1354 = vand.u32 %v1353, 8388607
        %v1355 = vor.u32 %v1354, 8388608
        %v1356 = vsub.s32 0, %v1355
        %v1357 = vadd.s32 %v1352, 1
        %vm1358 = vcmp.gt.s32.totalorder %v1357, 0
        %v1359 = vsel %vm1358, %v1357, 0
        %v1360 = vshrl.u32 %v1359, 5
        %v1361 = vand.u32 %v1359, 31
        %v1362 = vsub.s32 32, %v1361
        %v1363 = vshrl.u32 683565275, %v1362
        %v1364 = vshll.u32 683565275, %v1361
        %v1365 = vshrl.u32 2475754826, %v1362
        %v1366 = vor.u32 %v1364, %v1365
        %v1367 = vshll.u32 2475754826, %v1361
        %v1368 = vshrl.u32 2131351028, %v1362
        %v1369 = vor.u32 %v1367, %v1368
        %v1370 = vshll.u32 2131351028, %v1361
        %v1371 = vshrl.u32 2102212464, %v1362
        %v1372 = vor.u32 %v1370, %v1371
        %v1373 = vshll.u32 2102212464, %v1361
        %v1374 = vshrl.u32 920167782, %v1362
        %v1375 = vor.u32 %v1373, %v1374
        %v1376 = vshll.u32 920167782, %v1361
        %v1377 = vshrl.u32 1326507024, %v1362
        %v1378 = vor.u32 %v1376, %v1377
        %vm1379 = vcmp.lt.s32.totalorder %v1360, 1
        %vm1380 = vcmp.lt.s32.totalorder %v1360, 2
        %vm1381 = vcmp.lt.s32.totalorder %v1360, 3
        %vm1382 = vcmp.lt.s32.totalorder %v1360, 4
        %v1383 = vsel %vm1379, %v1363, %v1366
        %v1384 = vsel %vm1382, %v1372, 2102212464
        %v1385 = vsel %vm1381, %v1369, %v1384
        %v1386 = vsel %vm1380, %v1383, %v1385
        %v1387 = vsel %vm1379, %v1366, %v1369
        %v1388 = vsel %vm1382, %v1375, 920167782
        %v1389 = vsel %vm1381, %v1372, %v1388
        %v1390 = vsel %vm1380, %v1387, %v1389
        %v1391 = vsel %vm1379, %v1369, %v1372
        %v1392 = vsel %vm1382, %v1378, 1326507024
        %v1393 = vsel %vm1381, %v1375, %v1392
        %v1394 = vsel %vm1380, %v1391, %v1393
        %v1395 = vshll.u32 %v1355, 8
        %v1396 = vand.u32 %v1395, 65535
        %v1397 = vshrl.u32 %v1395, 16
        %v1398 = vand.u32 %v1394, 65535
        %v1399 = vshrl.u32 %v1394, 16
        %v1400 = vmul.u32 %v1396, %v1398
        %v1401 = vmul.u32 %v1396, %v1399
        %v1402 = vmul.u32 %v1397, %v1398
        %v1403 = vmul.u32 %v1397, %v1399
        %v1404 = vshll.u32 %v1401, 16
        %v1405 = vshrl.u32 %v1401, 16
        %v1406 = vshll.u32 %v1402, 16
        %v1407 = vshrl.u32 %v1402, 16
        %vm1408 = vc.u32 %v1400, %v1404
        %v1409 = vsel %vm1408, 1, 0
        %v1410 = vadd.s32 %v1400, %v1404
        %v1411 = vadd.s32 %v1403, %v1409
        %vm1412 = vc.u32 %v1410, %v1406
        %v1413 = vsel %vm1412, 1, 0
        %v1414 = vadd.s32 %v1410, %v1406
        %v1415 = vadd.s32 %v1411, %v1413
        %v1416 = vadd.s32 %v1415, %v1405
        %v1417 = vadd.s32 %v1416, %v1407
        %v1418 = vand.u32 %v1395, 65535
        %v1419 = vshrl.u32 %v1395, 16
        %v1420 = vand.u32 %v1390, 65535
        %v1421 = vshrl.u32 %v1390, 16
        %v1422 = vmul.u32 %v1418, %v1420
        %v1423 = vmul.u32 %v1418, %v1421
        %v1424 = vmul.u32 %v1419, %v1420
        %v1425 = vmul.u32 %v1419, %v1421
        %v1426 = vshll.u32 %v1423, 16
        %v1427 = vshrl.u32 %v1423, 16
        %v1428 = vshll.u32 %v1424, 16
        %v1429 = vshrl.u32 %v1424, 16
        %vm1430 = vc.u32 %v1422, %v1426
        %v1431 = vsel %vm1430, 1, 0
        %v1432 = vadd.s32 %v1422, %v1426
        %v1433 = vadd.s32 %v1425, %v1431
        %vm1434 = vc.u32 %v1432, %v1428
        %v1435 = vsel %vm1434, 1, 0
        %v1436 = vadd.s32 %v1432, %v1428
        %v1437 = vadd.s32 %v1433, %v1435
        %v1438 = vadd.s32 %v1437, %v1427
        %v1439 = vadd.s32 %v1438, %v1429
        %v1440 = vmul.u32 %v1395, %v1386
        %v1441 = vadd.s32 %v1417, %v1436
        %vm1442 = vc.u32 %v1417, %v1436
        %v1443 = vadd.s32 %v1439, 1
        %v1444 = vsel %vm1442, %v1443, %v1439
        %v1445 = vadd.s32 %v1440, %v1444
        %v1446 = vadd.s32 %v1445, 536870912
        %v1447 = vshrl.u32 %v1446, 30
        %v1448 = vshll.u32 %v1447, 30
        %v1449 = vsub.s32 %v1445, %v1448
        %vm1450 = vcmp.lt.s32.totalorder %v1449, 0
        %v1451 = vsub.s32 0, %v1449
        %v1452 = vsel %vm1450, %v1451, %v1449
        %v1453 = vclz %v1452
        %v1454 = vsub.s32 %v1453, 2
        %vm1455 = vcmp.gt.s32.totalorder 0, %v1454
        %v1456 = vsel %vm1455, 0, %v1454
        %v1457 = vsub.s32 32, %v1456
        %v1458 = vshll.u32 %v1449, %v1456
        %v1459 = vshrl.u32 %v1441, %v1457
        %v1460 = vor.u32 %v1458, %v1459
        %v1461 = vsub.s32 4294967266, %v1456
        %v1462 = vadd.s32 %v1461, 127
        %v1463 = vshll.u32 %v1462, 23
        %v1464 = vor.u32 4788187, %v1463
        %v1465 = vand.u32 2147483647, %v1464
        %v1467 = vcvt.s32.f32 %v1460
        %v1468 = vmul.f32 %v1467, %v1465
        %v1469 = vxor.u32 %v1468, 2147483648
        %v1470 = vsel %vm1349, %v1469, %v1468
        %v1471 = vsub.s32 4, %v1447
        %v1472 = vsel %vm1349, %v1471, %v1447
        %v1473 = vsel %vm1348, %v699, %v1470
        %v1474 = vsel %vm1348, 0, %v1472
        %v1475 = vmul.f32 %v1473, %v1473
        %v1476 = vmul.f32 %v1475, -0.001358992
        %v1477 = vadd.f32 %v1476, 0.041655596
        %v1478 = vmul.f32 %v1475, %v1477
        %v1479 = vadd.f32 %v1478, -0.4999988
        %v1480 = vmul.f32 %v1475, %v1479
        %v1481 = vadd.f32 1.0, %v1480
        %v1482 = vmul.f32 %v1473, %v1473
        %v1483 = vmul.f32 %v1482, -0.00019511016
        %v1484 = vadd.f32 %v1483, 0.008332121
        %v1485 = vmul.f32 %v1482, %v1484
        %v1486 = vadd.f32 %v1485, -0.16666654
        %v1487 = vmul.f32 %v1482, %v1486
        %v1488 = vadd.f32 %v1487, 1.0
        %v1489 = vmul.f32 %v1488, %v1473
        %vm1490 = vweird.f32 %v699
        %v1491 = vadd.s32 %v1474, 3
        %v1492 = vand.u32 %v1491, 3
        %vm1493 = vcmp.lt.s32.totalorder %v1492, 2
        %vm1494 = vcmp.eq.s32.totalorder %v1492, 0
        %v1495 = vxor.u32 %v1489, 2147483648
        %v1496 = vsel %vm1494, %v1481, %v1495
        %vm1497 = vcmp.eq.s32.totalorder %v1492, 2
        %v1498 = vxor.u32 %v1481, 2147483648
        %v1499 = vsel %vm1497, %v1498, %v1489
        %v1500 = vsel %vm1493, %v1496, %v1499
        %v1501 = vsel %vm1490, nan, %v1500
        %v1502 = vand.u32 2147483647, %v700
        %vm1503 = vcmp.le.f32.partialorder %v1502, 0.7853982
        %vm1504 = vcmp.lt.s32.totalorder %v700, 0
        %v1505 = vand.u32 %v700, 2139095040
        %v1506 = vshrl.u32 %v1505, 23
        %v1507 = vsub.s32 %v1506, 127
        %v1508 = vand.u32 2147483647, %v700
        %v1509 = vand.u32 %v1508, 8388607
        %v1510 = vor.u32 %v1509, 8388608
        %v1511 = vsub.s32 0, %v1510
        %v1512 = vadd.s32 %v1507, 1
        %vm1513 = vcmp.gt.s32.totalorder %v1512, 0
        %v1514 = vsel %vm1513, %v1512, 0
        %v1515 = vshrl.u32 %v1514, 5
        %v1516 = vand.u32 %v1514, 31
        %v1517 = vsub.s32 32, %v1516
        %v1518 = vshrl.u32 683565275, %v1517
        %v1519 = vshll.u32 683565275, %v1516
        %v1520 = vshrl.u32 2475754826, %v1517
        %v1521 = vor.u32 %v1519, %v1520
        %v1522 = vshll.u32 2475754826, %v1516
        %v1523 = vshrl.u32 2131351028, %v1517
        %v1524 = vor.u32 %v1522, %v1523
        %v1525 = vshll.u32 2131351028, %v1516
        %v1526 = vshrl.u32 2102212464, %v1517
        %v1527 = vor.u32 %v1525, %v1526
        %v1528 = vshll.u32 2102212464, %v1516
        %v1529 = vshrl.u32 920167782, %v1517
        %v1530 = vor.u32 %v1528, %v1529
        %v1531 = vshll.u32 920167782, %v1516
        %v1532 = vshrl.u32 1326507024, %v1517
        %v1533 = vor.u32 %v1531, %v1532
        %vm1534 = vcmp.lt.s32.totalorder %v1515, 1
        %vm1535 = vcmp.lt.s32.totalorder %v1515, 2
        %vm1536 = vcmp.lt.s32.totalorder %v1515, 3
        %vm1537 = vcmp.lt.s32.totalorder %v1515, 4
        %v1538 = vsel %vm1534, %v1518, %v1521
        %v1539 = vsel %vm1537, %v1527, 2102212464
        %v1540 = vsel %vm1536, %v1524, %v1539
        %v1541 = vsel %vm1535, %v1538, %v1540
        %v1542 = vsel %vm1534, %v1521, %v1524
        %v1543 = vsel %vm1537, %v1530, 920167782
        %v1544 = vsel %vm1536, %v1527, %v1543
        %v1545 = vsel %vm1535, %v1542, %v1544
        %v1546 = vsel %vm1534, %v1524, %v1527
        %v1547 = vsel %vm1537, %v1533, 1326507024
        %v1548 = vsel %vm1536, %v1530, %v1547
        %v1549 = vsel %vm1535, %v1546, %v1548
        %v1550 = vshll.u32 %v1510, 8
        %v1551 = vand.u32 %v1550, 65535
        %v1552 = vshrl.u32 %v1550, 16
        %v1553 = vand.u32 %v1549, 65535
        %v1554 = vshrl.u32 %v1549, 16
        %v1555 = vmul.u32 %v1551, %v1553
        %v1556 = vmul.u32 %v1551, %v1554
        %v1557 = vmul.u32 %v1552, %v1553
        %v1558 = vmul.u32 %v1552, %v1554
        %v1559 = vshll.u32 %v1556, 16
        %v1560 = vshrl.u32 %v1556, 16
        %v1561 = vshll.u32 %v1557, 16
        %v1562 = vshrl.u32 %v1557, 16
        %vm1563 = vc.u32 %v1555, %v1559
        %v1564 = vsel %vm1563, 1, 0
        %v1565 = vadd.s32 %v1555, %v1559
        %v1566 = vadd.s32 %v1558, %v1564
        %vm1567 = vc.u32 %v1565, %v1561
        %v1568 = vsel %vm1567, 1, 0
        %v1569 = vadd.s32 %v1565, %v1561
        %v1570 = vadd.s32 %v1566, %v1568
        %v1571 = vadd.s32 %v1570, %v1560
        %v1572 = vadd.s32 %v1571, %v1562
        %v1573 = vand.u32 %v1550, 65535
        %v1574 = vshrl.u32 %v1550, 16
        %v1575 = vand.u32 %v1545, 65535
        %v1576 = vshrl.u32 %v1545, 16
        %v1577 = vmul.u32 %v1573, %v1575
        %v1578 = vmul.u32 %v1573, %v1576
        %v1579 = vmul.u32 %v1574, %v1575
        %v1580 = vmul.u32 %v1574, %v1576
        %v1581 = vshll.u32 %v1578, 16
        %v1582 = vshrl.u32 %v1578, 16
        %v1583 = vshll.u32 %v1579, 16
        %v1584 = vshrl.u32 %v1579, 16
        %vm1585 = vc.u32 %v1577, %v1581
        %v1586 = vsel %vm1585, 1, 0
        %v1587 = vadd.s32 %v1577, %v1581
        %v1588 = vadd.s32 %v1580, %v1586
        %vm1589 = vc.u32 %v1587, %v1583
        %v1590 = vsel %vm1589, 1, 0
        %v1591 = vadd.s32 %v1587, %v1583
        %v1592 = vadd.s32 %v1588, %v1590
        %v1593 = vadd.s32 %v1592, %v1582
        %v1594 = vadd.s32 %v1593, %v1584
        %v1595 = vmul.u32 %v1550, %v1541
        %v1596 = vadd.s32 %v1572, %v1591
        %vm1597 = vc.u32 %v1572, %v1591
        %v1598 = vadd.s32 %v1594, 1
        %v1599 = vsel %vm1597, %v1598, %v1594
        %v1600 = vadd.s32 %v1595, %v1599
        %v1601 = vadd.s32 %v1600, 536870912
        %v1602 = vshrl.u32 %v1601, 30
        %v1603 = vshll.u32 %v1602, 30
        %v1604 = vsub.s32 %v1600, %v1603
        %vm1605 = vcmp.lt.s32.totalorder %v1604, 0
        %v1606 = vsub.s32 0, %v1604
        %v1607 = vsel %vm1605, %v1606, %v1604
        %v1608 = vclz %v1607
        %v1609 = vsub.s32 %v1608, 2
        %vm1610 = vcmp.gt.s32.totalorder 0, %v1609
        %v1611 = vsel %vm1610, 0, %v1609
        %v1612 = vsub.s32 32, %v1611
        %v1613 = vshll.u32 %v1604, %v1611
        %v1614 = vshrl.u32 %v1596, %v1612
        %v1615 = vor.u32 %v1613, %v1614
        %v1616 = vsub.s32 4294967266, %v1611
        %v1617 = vadd.s32 %v1616, 127
        %v1618 = vshll.u32 %v1617, 23
        %v1619 = vor.u32 4788187, %v1618
        %v1620 = vand.u32 2147483647, %v1619
        %v1622 = vcvt.s32.f32 %v1615
        %v1623 = vmul.f32 %v1622, %v1620
        %v1624 = vxor.u32 %v1623, 2147483648
        %v1625 = vsel %vm1504, %v1624, %v1623
        %v1626 = vsub.s32 4, %v1602
        %v1627 = vsel %vm1504, %v1626, %v1602
        %v1628 = vsel %vm1503, %v700, %v1625
        %v1629 = vsel %vm1503, 0, %v1627
        %v1630 = vmul.f32 %v1628, %v1628
        %v1631 = vmul.f32 %v1630, -0.001358992
        %v1632 = vadd.f32 %v1631, 0.041655596
        %v1633 = vmul.f32 %v1630, %v1632
        %v1634 = vadd.f32 %v1633, -0.4999988
        %v1635 = vmul.f32 %v1630, %v1634
        %v1636 = vadd.f32 1.0, %v1635
        %v1637 = vmul.f32 %v1628, %v1628
        %v1638 = vmul.f32 %v1637, -0.00019511016
        %v1639 = vadd.f32 %v1638, 0.008332121
        %v1640 = vmul.f32 %v1637, %v1639
        %v1641 = vadd.f32 %v1640, -0.16666654
        %v1642 = vmul.f32 %v1637, %v1641
        %v1643 = vadd.f32 %v1642, 1.0
        %v1644 = vmul.f32 %v1643, %v1628
        %vm1645 = vweird.f32 %v700
        %v1646 = vadd.s32 %v1629, 3
        %v1647 = vand.u32 %v1646, 3
        %vm1648 = vcmp.lt.s32.totalorder %v1647, 2
        %vm1649 = vcmp.eq.s32.totalorder %v1647, 0
        %v1650 = vxor.u32 %v1644, 2147483648
        %v1651 = vsel %vm1649, %v1636, %v1650
        %vm1652 = vcmp.eq.s32.totalorder %v1647, 2
        %v1653 = vxor.u32 %v1636, 2147483648
        %v1654 = vsel %vm1652, %v1653, %v1644
        %v1655 = vsel %vm1648, %v1651, %v1654
        %v1656 = vsel %vm1645, nan, %v1655
        %v1657 = vand.u32 2147483647, %v701
        %vm1658 = vcmp.le.f32.partialorder %v1657, 0.7853982
        %vm1659 = vcmp.lt.s32.totalorder %v701, 0
        %v1660 = vand.u32 %v701, 2139095040
        %v1661 = vshrl.u32 %v1660, 23
        %v1662 = vsub.s32 %v1661, 127
        %v1663 = vand.u32 2147483647, %v701
        %v1664 = vand.u32 %v1663, 8388607
        %v1665 = vor.u32 %v1664, 8388608
        %v1666 = vsub.s32 0, %v1665
        %v1667 = vadd.s32 %v1662, 1
        %vm1668 = vcmp.gt.s32.totalorder %v1667, 0
        %v1669 = vsel %vm1668, %v1667, 0
        %v1670 = vshrl.u32 %v1669, 5
        %v1671 = vand.u32 %v1669, 31
        %v1672 = vsub.s32 32, %v1671
        %v1673 = vshrl.u32 683565275, %v1672
        %v1674 = vshll.u32 683565275, %v1671
        %v1675 = vshrl.u32 2475754826, %v1672
        %v1676 = vor.u32 %v1674, %v1675
        %v1677 = vshll.u32 2475754826, %v1671
        %v1678 = vshrl.u32 2131351028, %v1672
        %v1679 = vor.u32 %v1677, %v1678
        %v1680 = vshll.u32 2131351028, %v1671
        %v1681 = vshrl.u32 2102212464, %v1672
        %v1682 = vor.u32 %v1680, %v1681
        %v1683 = vshll.u32 2102212464, %v1671
        %v1684 = vshrl.u32 920167782, %v1672
        %v1685 = vor.u32 %v1683, %v1684
        %v1686 = vshll.u32 920167782, %v1671
        %v1687 = vshrl.u32 1326507024, %v1672
        %v1688 = vor.u32 %v1686, %v1687
        %vm1689 = vcmp.lt.s32.totalorder %v1670, 1
        %vm1690 = vcmp.lt.s32.totalorder %v1670, 2
        %vm1691 = vcmp.lt.s32.totalorder %v1670, 3
        %vm1692 = vcmp.lt.s32.totalorder %v1670, 4
        %v1693 = vsel %vm1689, %v1673, %v1676
        %v1694 = vsel %vm1692, %v1682, 2102212464
        %v1695 = vsel %vm1691, %v1679, %v1694
        %v1696 = vsel %vm1690, %v1693, %v1695
        %v1697 = vsel %vm1689, %v1676, %v1679
        %v1698 = vsel %vm1692, %v1685, 920167782
        %v1699 = vsel %vm1691, %v1682, %v1698
        %v1700 = vsel %vm1690, %v1697, %v1699
        %v1701 = vsel %vm1689, %v1679, %v1682
        %v1702 = vsel %vm1692, %v1688, 1326507024
        %v1703 = vsel %vm1691, %v1685, %v1702
        %v1704 = vsel %vm1690, %v1701, %v1703
        %v1705 = vshll.u32 %v1665, 8
        %v1706 = vand.u32 %v1705, 65535
        %v1707 = vshrl.u32 %v1705, 16
        %v1708 = vand.u32 %v1704, 65535
        %v1709 = vshrl.u32 %v1704, 16
        %v1710 = vmul.u32 %v1706, %v1708
        %v1711 = vmul.u32 %v1706, %v1709
        %v1712 = vmul.u32 %v1707, %v1708
        %v1713 = vmul.u32 %v1707, %v1709
        %v1714 = vshll.u32 %v1711, 16
        %v1715 = vshrl.u32 %v1711, 16
        %v1716 = vshll.u32 %v1712, 16
        %v1717 = vshrl.u32 %v1712, 16
        %vm1718 = vc.u32 %v1710, %v1714
        %v1719 = vsel %vm1718, 1, 0
        %v1720 = vadd.s32 %v1710, %v1714
        %v1721 = vadd.s32 %v1713, %v1719
        %vm1722 = vc.u32 %v1720, %v1716
        %v1723 = vsel %vm1722, 1, 0
        %v1724 = vadd.s32 %v1720, %v1716
        %v1725 = vadd.s32 %v1721, %v1723
        %v1726 = vadd.s32 %v1725, %v1715
        %v1727 = vadd.s32 %v1726, %v1717
        %v1728 = vand.u32 %v1705, 65535
        %v1729 = vshrl.u32 %v1705, 16
        %v1730 = vand.u32 %v1700, 65535
        %v1731 = vshrl.u32 %v1700, 16
        %v1732 = vmul.u32 %v1728, %v1730
        %v1733 = vmul.u32 %v1728, %v1731
        %v1734 = vmul.u32 %v1729, %v1730
        %v1735 = vmul.u32 %v1729, %v1731
        %v1736 = vshll.u32 %v1733, 16
        %v1737 = vshrl.u32 %v1733, 16
        %v1738 = vshll.u32 %v1734, 16
        %v1739 = vshrl.u32 %v1734, 16
        %vm1740 = vc.u32 %v1732, %v1736
        %v1741 = vsel %vm1740, 1, 0
        %v1742 = vadd.s32 %v1732, %v1736
        %v1743 = vadd.s32 %v1735, %v1741
        %vm1744 = vc.u32 %v1742, %v1738
        %v1745 = vsel %vm1744, 1, 0
        %v1746 = vadd.s32 %v1742, %v1738
        %v1747 = vadd.s32 %v1743, %v1745
        %v1748 = vadd.s32 %v1747, %v1737
        %v1749 = vadd.s32 %v1748, %v1739
        %v1750 = vmul.u32 %v1705, %v1696
        %v1751 = vadd.s32 %v1727, %v1746
        %vm1752 = vc.u32 %v1727, %v1746
        %v1753 = vadd.s32 %v1749, 1
        %v1754 = vsel %vm1752, %v1753, %v1749
        %v1755 = vadd.s32 %v1750, %v1754
        %v1756 = vadd.s32 %v1755, 536870912
        %v1757 = vshrl.u32 %v1756, 30
        %v1758 = vshll.u32 %v1757, 30
        %v1759 = vsub.s32 %v1755, %v1758
        %vm1760 = vcmp.lt.s32.totalorder %v1759, 0
        %v1761 = vsub.s32 0, %v1759
        %v1762 = vsel %vm1760, %v1761, %v1759
        %v1763 = vclz %v1762
        %v1764 = vsub.s32 %v1763, 2
        %vm1765 = vcmp.gt.s32.totalorder 0, %v1764
        %v1766 = vsel %vm1765, 0, %v1764
        %v1767 = vsub.s32 32, %v1766
        %v1768 = vshll.u32 %v1759, %v1766
        %v1769 = vshrl.u32 %v1751, %v1767
        %v1770 = vor.u32 %v1768, %v1769
        %v1771 = vsub.s32 4294967266, %v1766
        %v1772 = vadd.s32 %v1771, 127
        %v1773 = vshll.u32 %v1772, 23
        %v1774 = vor.u32 4788187, %v1773
        %v1775 = vand.u32 2147483647, %v1774
        %v1777 = vcvt.s32.f32 %v1770
        %v1778 = vmul.f32 %v1777, %v1775
        %v1779 = vxor.u32 %v1778, 2147483648
        %v1780 = vsel %vm1659, %v1779, %v1778
        %v1781 = vsub.s32 4, %v1757
        %v1782 = vsel %vm1659, %v1781, %v1757
        %v1783 = vsel %vm1658, %v701, %v1780
        %v1784 = vsel %vm1658, 0, %v1782
        %v1785 = vmul.f32 %v1783, %v1783
        %v1786 = vmul.f32 %v1785, -0.001358992
        %v1787 = vadd.f32 %v1786, 0.041655596
        %v1788 = vmul.f32 %v1785, %v1787
        %v1789 = vadd.f32 %v1788, -0.4999988
        %v1790 = vmul.f32 %v1785, %v1789
        %v1791 = vadd.f32 1.0, %v1790
        %v1792 = vmul.f32 %v1783, %v1783
        %v1793 = vmul.f32 %v1792, -0.00019511016
        %v1794 = vadd.f32 %v1793, 0.008332121
        %v1795 = vmul.f32 %v1792, %v1794
        %v1796 = vadd.f32 %v1795, -0.16666654
        %v1797 = vmul.f32 %v1792, %v1796
        %v1798 = vadd.f32 %v1797, 1.0
        %v1799 = vmul.f32 %v1798, %v1783
        %vm1800 = vweird.f32 %v701
        %v1801 = vadd.s32 %v1784, 3
        %v1802 = vand.u32 %v1801, 3
        %vm1803 = vcmp.lt.s32.totalorder %v1802, 2
        %vm1804 = vcmp.eq.s32.totalorder %v1802, 0
        %v1805 = vxor.u32 %v1799, 2147483648
        %v1806 = vsel %vm1804, %v1791, %v1805
        %vm1807 = vcmp.eq.s32.totalorder %v1802, 2
        %v1808 = vxor.u32 %v1791, 2147483648
        %v1809 = vsel %vm1807, %v1808, %v1799
        %v1810 = vsel %vm1803, %v1806, %v1809
        %v1811 = vsel %vm1800, nan, %v1810
        %v1812 = vand.u32 2147483647, %v702
        %vm1813 = vcmp.le.f32.partialorder %v1812, 0.7853982
        %vm1814 = vcmp.lt.s32.totalorder %v702, 0
        %v1815 = vand.u32 %v702, 2139095040
        %v1816 = vshrl.u32 %v1815, 23
        %v1817 = vsub.s32 %v1816, 127
        %v1818 = vand.u32 2147483647, %v702
        %v1819 = vand.u32 %v1818, 8388607
        %v1820 = vor.u32 %v1819, 8388608
        %v1821 = vsub.s32 0, %v1820
        %v1822 = vadd.s32 %v1817, 1
        %vm1823 = vcmp.gt.s32.totalorder %v1822, 0
        %v1824 = vsel %vm1823, %v1822, 0
        %v1825 = vshrl.u32 %v1824, 5
        %v1826 = vand.u32 %v1824, 31
        %v1827 = vsub.s32 32, %v1826
        %v1828 = vshrl.u32 683565275, %v1827
        %v1829 = vshll.u32 683565275, %v1826
        %v1830 = vshrl.u32 2475754826, %v1827
        %v1831 = vor.u32 %v1829, %v1830
        %v1832 = vshll.u32 2475754826, %v1826
        %v1833 = vshrl.u32 2131351028, %v1827
        %v1834 = vor.u32 %v1832, %v1833
        %v1835 = vshll.u32 2131351028, %v1826
        %v1836 = vshrl.u32 2102212464, %v1827
        %v1837 = vor.u32 %v1835, %v1836
        %v1838 = vshll.u32 2102212464, %v1826
        %v1839 = vshrl.u32 920167782, %v1827
        %v1840 = vor.u32 %v1838, %v1839
        %v1841 = vshll.u32 920167782, %v1826
        %v1842 = vshrl.u32 1326507024, %v1827
        %v1843 = vor.u32 %v1841, %v1842
        %vm1844 = vcmp.lt.s32.totalorder %v1825, 1
        %vm1845 = vcmp.lt.s32.totalorder %v1825, 2
        %vm1846 = vcmp.lt.s32.totalorder %v1825, 3
        %vm1847 = vcmp.lt.s32.totalorder %v1825, 4
        %v1848 = vsel %vm1844, %v1828, %v1831
        %v1849 = vsel %vm1847, %v1837, 2102212464
        %v1850 = vsel %vm1846, %v1834, %v1849
        %v1851 = vsel %vm1845, %v1848, %v1850
        %v1852 = vsel %vm1844, %v1831, %v1834
        %v1853 = vsel %vm1847, %v1840, 920167782
        %v1854 = vsel %vm1846, %v1837, %v1853
        %v1855 = vsel %vm1845, %v1852, %v1854
        %v1856 = vsel %vm1844, %v1834, %v1837
        %v1857 = vsel %vm1847, %v1843, 1326507024
        %v1858 = vsel %vm1846, %v1840, %v1857
        %v1859 = vsel %vm1845, %v1856, %v1858
        %v1860 = vshll.u32 %v1820, 8
        %v1861 = vand.u32 %v1860, 65535
        %v1862 = vshrl.u32 %v1860, 16
        %v1863 = vand.u32 %v1859, 65535
        %v1864 = vshrl.u32 %v1859, 16
        %v1865 = vmul.u32 %v1861, %v1863
        %v1866 = vmul.u32 %v1861, %v1864
        %v1867 = vmul.u32 %v1862, %v1863
        %v1868 = vmul.u32 %v1862, %v1864
        %v1869 = vshll.u32 %v1866, 16
        %v1870 = vshrl.u32 %v1866, 16
        %v1871 = vshll.u32 %v1867, 16
        %v1872 = vshrl.u32 %v1867, 16
        %vm1873 = vc.u32 %v1865, %v1869
        %v1874 = vsel %vm1873, 1, 0
        %v1875 = vadd.s32 %v1865, %v1869
        %v1876 = vadd.s32 %v1868, %v1874
        %vm1877 = vc.u32 %v1875, %v1871
        %v1878 = vsel %vm1877, 1, 0
        %v1879 = vadd.s32 %v1875, %v1871
        %v1880 = vadd.s32 %v1876, %v1878
        %v1881 = vadd.s32 %v1880, %v1870
        %v1882 = vadd.s32 %v1881, %v1872
        %v1883 = vand.u32 %v1860, 65535
        %v1884 = vshrl.u32 %v1860, 16
        %v1885 = vand.u32 %v1855, 65535
        %v1886 = vshrl.u32 %v1855, 16
        %v1887 = vmul.u32 %v1883, %v1885
        %v1888 = vmul.u32 %v1883, %v1886
        %v1889 = vmul.u32 %v1884, %v1885
        %v1890 = vmul.u32 %v1884, %v1886
        %v1891 = vshll.u32 %v1888, 16
        %v1892 = vshrl.u32 %v1888, 16
        %v1893 = vshll.u32 %v1889, 16
        %v1894 = vshrl.u32 %v1889, 16
        %vm1895 = vc.u32 %v1887, %v1891
        %v1896 = vsel %vm1895, 1, 0
        %v1897 = vadd.s32 %v1887, %v1891
        %v1898 = vadd.s32 %v1890, %v1896
        %vm1899 = vc.u32 %v1897, %v1893
        %v1900 = vsel %vm1899, 1, 0
        %v1901 = vadd.s32 %v1897, %v1893
        %v1902 = vadd.s32 %v1898, %v1900
        %v1903 = vadd.s32 %v1902, %v1892
        %v1904 = vadd.s32 %v1903, %v1894
        %v1905 = vmul.u32 %v1860, %v1851
        %v1906 = vadd.s32 %v1882, %v1901
        %vm1907 = vc.u32 %v1882, %v1901
        %v1908 = vadd.s32 %v1904, 1
        %v1909 = vsel %vm1907, %v1908, %v1904
        %v1910 = vadd.s32 %v1905, %v1909
        %v1911 = vadd.s32 %v1910, 536870912
        %v1912 = vshrl.u32 %v1911, 30
        %v1913 = vshll.u32 %v1912, 30
        %v1914 = vsub.s32 %v1910, %v1913
        %vm1915 = vcmp.lt.s32.totalorder %v1914, 0
        %v1916 = vsub.s32 0, %v1914
        %v1917 = vsel %vm1915, %v1916, %v1914
        %v1918 = vclz %v1917
        %v1919 = vsub.s32 %v1918, 2
        %vm1920 = vcmp.gt.s32.totalorder 0, %v1919
        %v1921 = vsel %vm1920, 0, %v1919
        %v1922 = vsub.s32 32, %v1921
        %v1923 = vshll.u32 %v1914, %v1921
        %v1924 = vshrl.u32 %v1906, %v1922
        %v1925 = vor.u32 %v1923, %v1924
        %v1926 = vsub.s32 4294967266, %v1921
        %v1927 = vadd.s32 %v1926, 127
        %v1928 = vshll.u32 %v1927, 23
        %v1929 = vor.u32 4788187, %v1928
        %v1930 = vand.u32 2147483647, %v1929
        %v1932 = vcvt.s32.f32 %v1925
        %v1933 = vmul.f32 %v1932, %v1930
        %v1934 = vxor.u32 %v1933, 2147483648
        %v1935 = vsel %vm1814, %v1934, %v1933
        %v1936 = vsub.s32 4, %v1912
        %v1937 = vsel %vm1814, %v1936, %v1912
        %v1938 = vsel %vm1813, %v702, %v1935
        %v1939 = vsel %vm1813, 0, %v1937
        %v1940 = vmul.f32 %v1938, %v1938
        %v1941 = vmul.f32 %v1940, -0.001358992
        %v1942 = vadd.f32 %v1941, 0.041655596
        %v1943 = vmul.f32 %v1940, %v1942
        %v1944 = vadd.f32 %v1943, -0.4999988
        %v1945 = vmul.f32 %v1940, %v1944
        %v1946 = vadd.f32 1.0, %v1945
        %v1947 = vmul.f32 %v1938, %v1938
        %v1948 = vmul.f32 %v1947, -0.00019511016
        %v1949 = vadd.f32 %v1948, 0.008332121
        %v1950 = vmul.f32 %v1947, %v1949
        %v1951 = vadd.f32 %v1950, -0.16666654
        %v1952 = vmul.f32 %v1947, %v1951
        %v1953 = vadd.f32 %v1952, 1.0
        %v1954 = vmul.f32 %v1953, %v1938
        %vm1955 = vweird.f32 %v702
        %v1956 = vadd.s32 %v1939, 3
        %v1957 = vand.u32 %v1956, 3
        %vm1958 = vcmp.lt.s32.totalorder %v1957, 2
        %vm1959 = vcmp.eq.s32.totalorder %v1957, 0
        %v1960 = vxor.u32 %v1954, 2147483648
        %v1961 = vsel %vm1959, %v1946, %v1960
        %vm1962 = vcmp.eq.s32.totalorder %v1957, 2
        %v1963 = vxor.u32 %v1946, 2147483648
        %v1964 = vsel %vm1962, %v1963, %v1954
        %v1965 = vsel %vm1958, %v1961, %v1964
        %v1966 = vsel %vm1955, nan, %v1965
        %v1967 = vand.u32 2147483647, %v703
        %vm1968 = vcmp.le.f32.partialorder %v1967, 0.7853982
        %vm1969 = vcmp.lt.s32.totalorder %v703, 0
        %v1970 = vand.u32 %v703, 2139095040
        %v1971 = vshrl.u32 %v1970, 23
        %v1972 = vsub.s32 %v1971, 127
        %v1973 = vand.u32 2147483647, %v703
        %v1974 = vand.u32 %v1973, 8388607
        %v1975 = vor.u32 %v1974, 8388608
        %v1976 = vsub.s32 0, %v1975
        %v1977 = vadd.s32 %v1972, 1
        %vm1978 = vcmp.gt.s32.totalorder %v1977, 0
        %v1979 = vsel %vm1978, %v1977, 0
        %v1980 = vshrl.u32 %v1979, 5
        %v1981 = vand.u32 %v1979, 31
        %v1982 = vsub.s32 32, %v1981
        %v1983 = vshrl.u32 683565275, %v1982
        %v1984 = vshll.u32 683565275, %v1981
        %v1985 = vshrl.u32 2475754826, %v1982
        %v1986 = vor.u32 %v1984, %v1985
        %v1987 = vshll.u32 2475754826, %v1981
        %v1988 = vshrl.u32 2131351028, %v1982
        %v1989 = vor.u32 %v1987, %v1988
        %v1990 = vshll.u32 2131351028, %v1981
        %v1991 = vshrl.u32 2102212464, %v1982
        %v1992 = vor.u32 %v1990, %v1991
        %v1993 = vshll.u32 2102212464, %v1981
        %v1994 = vshrl.u32 920167782, %v1982
        %v1995 = vor.u32 %v1993, %v1994
        %v1996 = vshll.u32 920167782, %v1981
        %v1997 = vshrl.u32 1326507024, %v1982
        %v1998 = vor.u32 %v1996, %v1997
        %vm1999 = vcmp.lt.s32.totalorder %v1980, 1
        %vm2000 = vcmp.lt.s32.totalorder %v1980, 2
        %vm2001 = vcmp.lt.s32.totalorder %v1980, 3
        %vm2002 = vcmp.lt.s32.totalorder %v1980, 4
        %v2003 = vsel %vm1999, %v1983, %v1986
        %v2004 = vsel %vm2002, %v1992, 2102212464
        %v2005 = vsel %vm2001, %v1989, %v2004
        %v2006 = vsel %vm2000, %v2003, %v2005
        %v2007 = vsel %vm1999, %v1986, %v1989
        %v2008 = vsel %vm2002, %v1995, 920167782
        %v2009 = vsel %vm2001, %v1992, %v2008
        %v2010 = vsel %vm2000, %v2007, %v2009
        %v2011 = vsel %vm1999, %v1989, %v1992
        %v2012 = vsel %vm2002, %v1998, 1326507024
        %v2013 = vsel %vm2001, %v1995, %v2012
        %v2014 = vsel %vm2000, %v2011, %v2013
        %v2015 = vshll.u32 %v1975, 8
        %v2016 = vand.u32 %v2015, 65535
        %v2017 = vshrl.u32 %v2015, 16
        %v2018 = vand.u32 %v2014, 65535
        %v2019 = vshrl.u32 %v2014, 16
        %v2020 = vmul.u32 %v2016, %v2018
        %v2021 = vmul.u32 %v2016, %v2019
        %v2022 = vmul.u32 %v2017, %v2018
        %v2023 = vmul.u32 %v2017, %v2019
        %v2024 = vshll.u32 %v2021, 16
        %v2025 = vshrl.u32 %v2021, 16
        %v2026 = vshll.u32 %v2022, 16
        %v2027 = vshrl.u32 %v2022, 16
        %vm2028 = vc.u32 %v2020, %v2024
        %v2029 = vsel %vm2028, 1, 0
        %v2030 = vadd.s32 %v2020, %v2024
        %v2031 = vadd.s32 %v2023, %v2029
        %vm2032 = vc.u32 %v2030, %v2026
        %v2033 = vsel %vm2032, 1, 0
        %v2034 = vadd.s32 %v2030, %v2026
        %v2035 = vadd.s32 %v2031, %v2033
        %v2036 = vadd.s32 %v2035, %v2025
        %v2037 = vadd.s32 %v2036, %v2027
        %v2038 = vand.u32 %v2015, 65535
        %v2039 = vshrl.u32 %v2015, 16
        %v2040 = vand.u32 %v2010, 65535
        %v2041 = vshrl.u32 %v2010, 16
        %v2042 = vmul.u32 %v2038, %v2040
        %v2043 = vmul.u32 %v2038, %v2041
        %v2044 = vmul.u32 %v2039, %v2040
        %v2045 = vmul.u32 %v2039, %v2041
        %v2046 = vshll.u32 %v2043, 16
        %v2047 = vshrl.u32 %v2043, 16
        %v2048 = vshll.u32 %v2044, 16
        %v2049 = vshrl.u32 %v2044, 16
        %vm2050 = vc.u32 %v2042, %v2046
        %v2051 = vsel %vm2050, 1, 0
        %v2052 = vadd.s32 %v2042, %v2046
        %v2053 = vadd.s32 %v2045, %v2051
        %vm2054 = vc.u32 %v2052, %v2048
        %v2055 = vsel %vm2054, 1, 0
        %v2056 = vadd.s32 %v2052, %v2048
        %v2057 = vadd.s32 %v2053, %v2055
        %v2058 = vadd.s32 %v2057, %v2047
        %v2059 = vadd.s32 %v2058, %v2049
        %v2060 = vmul.u32 %v2015, %v2006
        %v2061 = vadd.s32 %v2037, %v2056
        %vm2062 = vc.u32 %v2037, %v2056
        %v2063 = vadd.s32 %v2059, 1
        %v2064 = vsel %vm2062, %v2063, %v2059
        %v2065 = vadd.s32 %v2060, %v2064
        %v2066 = vadd.s32 %v2065, 536870912
        %v2067 = vshrl.u32 %v2066, 30
        %v2068 = vshll.u32 %v2067, 30
        %v2069 = vsub.s32 %v2065, %v2068
        %vm2070 = vcmp.lt.s32.totalorder %v2069, 0
        %v2071 = vsub.s32 0, %v2069
        %v2072 = vsel %vm2070, %v2071, %v2069
        %v2073 = vclz %v2072
        %v2074 = vsub.s32 %v2073, 2
        %vm2075 = vcmp.gt.s32.totalorder 0, %v2074
        %v2076 = vsel %vm2075, 0, %v2074
        %v2077 = vsub.s32 32, %v2076
        %v2078 = vshll.u32 %v2069, %v2076
        %v2079 = vshrl.u32 %v2061, %v2077
        %v2080 = vor.u32 %v2078, %v2079
        %v2081 = vsub.s32 4294967266, %v2076
        %v2082 = vadd.s32 %v2081, 127
        %v2083 = vshll.u32 %v2082, 23
        %v2084 = vor.u32 4788187, %v2083
        %v2085 = vand.u32 2147483647, %v2084
        %v2087 = vcvt.s32.f32 %v2080
        %v2088 = vmul.f32 %v2087, %v2085
        %v2089 = vxor.u32 %v2088, 2147483648
        %v2090 = vsel %vm1969, %v2089, %v2088
        %v2091 = vsub.s32 4, %v2067
        %v2092 = vsel %vm1969, %v2091, %v2067
        %v2093 = vsel %vm1968, %v703, %v2090
        %v2094 = vsel %vm1968, 0, %v2092
        %v2095 = vmul.f32 %v2093, %v2093
        %v2096 = vmul.f32 %v2095, -0.001358992
        %v2097 = vadd.f32 %v2096, 0.041655596
        %v2098 = vmul.f32 %v2095, %v2097
        %v2099 = vadd.f32 %v2098, -0.4999988
        %v2100 = vmul.f32 %v2095, %v2099
        %v2101 = vadd.f32 1.0, %v2100
        %v2102 = vmul.f32 %v2093, %v2093
        %v2103 = vmul.f32 %v2102, -0.00019511016
        %v2104 = vadd.f32 %v2103, 0.008332121
        %v2105 = vmul.f32 %v2102, %v2104
        %v2106 = vadd.f32 %v2105, -0.16666654
        %v2107 = vmul.f32 %v2102, %v2106
        %v2108 = vadd.f32 %v2107, 1.0
        %v2109 = vmul.f32 %v2108, %v2093
        %vm2110 = vweird.f32 %v703
        %v2111 = vadd.s32 %v2094, 3
        %v2112 = vand.u32 %v2111, 3
        %vm2113 = vcmp.lt.s32.totalorder %v2112, 2
        %vm2114 = vcmp.eq.s32.totalorder %v2112, 0
        %v2115 = vxor.u32 %v2109, 2147483648
        %v2116 = vsel %vm2114, %v2101, %v2115
        %vm2117 = vcmp.eq.s32.totalorder %v2112, 2
        %v2118 = vxor.u32 %v2101, 2147483648
        %v2119 = vsel %vm2117, %v2118, %v2109
        %v2120 = vsel %vm2113, %v2116, %v2119
        %v2121 = vsel %vm2110, nan, %v2120
        %v2122 = vand.u32 2147483647, %v704
        %vm2123 = vcmp.le.f32.partialorder %v2122, 0.7853982
        %vm2124 = vcmp.lt.s32.totalorder %v704, 0
        %v2125 = vand.u32 %v704, 2139095040
        %v2126 = vshrl.u32 %v2125, 23
        %v2127 = vsub.s32 %v2126, 127
        %v2128 = vand.u32 2147483647, %v704
        %v2129 = vand.u32 %v2128, 8388607
        %v2130 = vor.u32 %v2129, 8388608
        %v2131 = vsub.s32 0, %v2130
        %v2132 = vadd.s32 %v2127, 1
        %vm2133 = vcmp.gt.s32.totalorder %v2132, 0
        %v2134 = vsel %vm2133, %v2132, 0
        %v2135 = vshrl.u32 %v2134, 5
        %v2136 = vand.u32 %v2134, 31
        %v2137 = vsub.s32 32, %v2136
        %v2138 = vshrl.u32 683565275, %v2137
        %v2139 = vshll.u32 683565275, %v2136
        %v2140 = vshrl.u32 2475754826, %v2137
        %v2141 = vor.u32 %v2139, %v2140
        %v2142 = vshll.u32 2475754826, %v2136
        %v2143 = vshrl.u32 2131351028, %v2137
        %v2144 = vor.u32 %v2142, %v2143
        %v2145 = vshll.u32 2131351028, %v2136
        %v2146 = vshrl.u32 2102212464, %v2137
        %v2147 = vor.u32 %v2145, %v2146
        %v2148 = vshll.u32 2102212464, %v2136
        %v2149 = vshrl.u32 920167782, %v2137
        %v2150 = vor.u32 %v2148, %v2149
        %v2151 = vshll.u32 920167782, %v2136
        %v2152 = vshrl.u32 1326507024, %v2137
        %v2153 = vor.u32 %v2151, %v2152
        %vm2154 = vcmp.lt.s32.totalorder %v2135, 1
        %vm2155 = vcmp.lt.s32.totalorder %v2135, 2
        %vm2156 = vcmp.lt.s32.totalorder %v2135, 3
        %vm2157 = vcmp.lt.s32.totalorder %v2135, 4
        %v2158 = vsel %vm2154, %v2138, %v2141
        %v2159 = vsel %vm2157, %v2147, 2102212464
        %v2160 = vsel %vm2156, %v2144, %v2159
        %v2161 = vsel %vm2155, %v2158, %v2160
        %v2162 = vsel %vm2154, %v2141, %v2144
        %v2163 = vsel %vm2157, %v2150, 920167782
        %v2164 = vsel %vm2156, %v2147, %v2163
        %v2165 = vsel %vm2155, %v2162, %v2164
        %v2166 = vsel %vm2154, %v2144, %v2147
        %v2167 = vsel %vm2157, %v2153, 1326507024
        %v2168 = vsel %vm2156, %v2150, %v2167
        %v2169 = vsel %vm2155, %v2166, %v2168
        %v2170 = vshll.u32 %v2130, 8
        %v2171 = vand.u32 %v2170, 65535
        %v2172 = vshrl.u32 %v2170, 16
        %v2173 = vand.u32 %v2169, 65535
        %v2174 = vshrl.u32 %v2169, 16
        %v2175 = vmul.u32 %v2171, %v2173
        %v2176 = vmul.u32 %v2171, %v2174
        %v2177 = vmul.u32 %v2172, %v2173
        %v2178 = vmul.u32 %v2172, %v2174
        %v2179 = vshll.u32 %v2176, 16
        %v2180 = vshrl.u32 %v2176, 16
        %v2181 = vshll.u32 %v2177, 16
        %v2182 = vshrl.u32 %v2177, 16
        %vm2183 = vc.u32 %v2175, %v2179
        %v2184 = vsel %vm2183, 1, 0
        %v2185 = vadd.s32 %v2175, %v2179
        %v2186 = vadd.s32 %v2178, %v2184
        %vm2187 = vc.u32 %v2185, %v2181
        %v2188 = vsel %vm2187, 1, 0
        %v2189 = vadd.s32 %v2185, %v2181
        %v2190 = vadd.s32 %v2186, %v2188
        %v2191 = vadd.s32 %v2190, %v2180
        %v2192 = vadd.s32 %v2191, %v2182
        %v2193 = vand.u32 %v2170, 65535
        %v2194 = vshrl.u32 %v2170, 16
        %v2195 = vand.u32 %v2165, 65535
        %v2196 = vshrl.u32 %v2165, 16
        %v2197 = vmul.u32 %v2193, %v2195
        %v2198 = vmul.u32 %v2193, %v2196
        %v2199 = vmul.u32 %v2194, %v2195
        %v2200 = vmul.u32 %v2194, %v2196
        %v2201 = vshll.u32 %v2198, 16
        %v2202 = vshrl.u32 %v2198, 16
        %v2203 = vshll.u32 %v2199, 16
        %v2204 = vshrl.u32 %v2199, 16
        %vm2205 = vc.u32 %v2197, %v2201
        %v2206 = vsel %vm2205, 1, 0
        %v2207 = vadd.s32 %v2197, %v2201
        %v2208 = vadd.s32 %v2200, %v2206
        %vm2209 = vc.u32 %v2207, %v2203
        %v2210 = vsel %vm2209, 1, 0
        %v2211 = vadd.s32 %v2207, %v2203
        %v2212 = vadd.s32 %v2208, %v2210
        %v2213 = vadd.s32 %v2212, %v2202
        %v2214 = vadd.s32 %v2213, %v2204
        %v2215 = vmul.u32 %v2170, %v2161
        %v2216 = vadd.s32 %v2192, %v2211
        %vm2217 = vc.u32 %v2192, %v2211
        %v2218 = vadd.s32 %v2214, 1
        %v2219 = vsel %vm2217, %v2218, %v2214
        %v2220 = vadd.s32 %v2215, %v2219
        %v2221 = vadd.s32 %v2220, 536870912
        %v2222 = vshrl.u32 %v2221, 30
        %v2223 = vshll.u32 %v2222, 30
        %v2224 = vsub.s32 %v2220, %v2223
        %vm2225 = vcmp.lt.s32.totalorder %v2224, 0
        %v2226 = vsub.s32 0, %v2224
        %v2227 = vsel %vm2225, %v2226, %v2224
        %v2228 = vclz %v2227
        %v2229 = vsub.s32 %v2228, 2
        %vm2230 = vcmp.gt.s32.totalorder 0, %v2229
        %v2231 = vsel %vm2230, 0, %v2229
        %v2232 = vsub.s32 32, %v2231
        %v2233 = vshll.u32 %v2224, %v2231
        %v2234 = vshrl.u32 %v2216, %v2232
        %v2235 = vor.u32 %v2233, %v2234
        %v2236 = vsub.s32 4294967266, %v2231
        %v2237 = vadd.s32 %v2236, 127
        %v2238 = vshll.u32 %v2237, 23
        %v2239 = vor.u32 4788187, %v2238
        %v2240 = vand.u32 2147483647, %v2239
        %v2242 = vcvt.s32.f32 %v2235
        %v2243 = vmul.f32 %v2242, %v2240
        %v2244 = vxor.u32 %v2243, 2147483648
        %v2245 = vsel %vm2124, %v2244, %v2243
        %v2246 = vsub.s32 4, %v2222
        %v2247 = vsel %vm2124, %v2246, %v2222
        %v2248 = vsel %vm2123, %v704, %v2245
        %v2249 = vsel %vm2123, 0, %v2247
        %v2250 = vmul.f32 %v2248, %v2248
        %v2251 = vmul.f32 %v2250, -0.001358992
        %v2252 = vadd.f32 %v2251, 0.041655596
        %v2253 = vmul.f32 %v2250, %v2252
        %v2254 = vadd.f32 %v2253, -0.4999988
        %v2255 = vmul.f32 %v2250, %v2254
        %v2256 = vadd.f32 1.0, %v2255
        %v2257 = vmul.f32 %v2248, %v2248
        %v2258 = vmul.f32 %v2257, -0.00019511016
        %v2259 = vadd.f32 %v2258, 0.008332121
        %v2260 = vmul.f32 %v2257, %v2259
        %v2261 = vadd.f32 %v2260, -0.16666654
        %v2262 = vmul.f32 %v2257, %v2261
        %v2263 = vadd.f32 %v2262, 1.0
        %v2264 = vmul.f32 %v2263, %v2248
        %vm2265 = vweird.f32 %v704
        %v2266 = vadd.s32 %v2249, 3
        %v2267 = vand.u32 %v2266, 3
        %vm2268 = vcmp.lt.s32.totalorder %v2267, 2
        %vm2269 = vcmp.eq.s32.totalorder %v2267, 0
        %v2270 = vxor.u32 %v2264, 2147483648
        %v2271 = vsel %vm2269, %v2256, %v2270
        %vm2272 = vcmp.eq.s32.totalorder %v2267, 2
        %v2273 = vxor.u32 %v2256, 2147483648
        %v2274 = vsel %vm2272, %v2273, %v2264
        %v2275 = vsel %vm2268, %v2271, %v2274
        %v2276 = vsel %vm2265, nan, %v2275
        %v2277 = vand.u32 2147483647, %v705
        %vm2278 = vcmp.le.f32.partialorder %v2277, 0.7853982
        %vm2279 = vcmp.lt.s32.totalorder %v705, 0
        %v2280 = vand.u32 %v705, 2139095040
        %v2281 = vshrl.u32 %v2280, 23
        %v2282 = vsub.s32 %v2281, 127
        %v2283 = vand.u32 2147483647, %v705
        %v2284 = vand.u32 %v2283, 8388607
        %v2285 = vor.u32 %v2284, 8388608
        %v2286 = vsub.s32 0, %v2285
        %v2287 = vadd.s32 %v2282, 1
        %vm2288 = vcmp.gt.s32.totalorder %v2287, 0
        %v2289 = vsel %vm2288, %v2287, 0
        %v2290 = vshrl.u32 %v2289, 5
        %v2291 = vand.u32 %v2289, 31
        %v2292 = vsub.s32 32, %v2291
        %v2293 = vshrl.u32 683565275, %v2292
        %v2294 = vshll.u32 683565275, %v2291
        %v2295 = vshrl.u32 2475754826, %v2292
        %v2296 = vor.u32 %v2294, %v2295
        %v2297 = vshll.u32 2475754826, %v2291
        %v2298 = vshrl.u32 2131351028, %v2292
        %v2299 = vor.u32 %v2297, %v2298
        %v2300 = vshll.u32 2131351028, %v2291
        %v2301 = vshrl.u32 2102212464, %v2292
        %v2302 = vor.u32 %v2300, %v2301
        %v2303 = vshll.u32 2102212464, %v2291
        %v2304 = vshrl.u32 920167782, %v2292
        %v2305 = vor.u32 %v2303, %v2304
        %v2306 = vshll.u32 920167782, %v2291
        %v2307 = vshrl.u32 1326507024, %v2292
        %v2308 = vor.u32 %v2306, %v2307
        %vm2309 = vcmp.lt.s32.totalorder %v2290, 1
        %vm2310 = vcmp.lt.s32.totalorder %v2290, 2
        %vm2311 = vcmp.lt.s32.totalorder %v2290, 3
        %vm2312 = vcmp.lt.s32.totalorder %v2290, 4
        %v2313 = vsel %vm2309, %v2293, %v2296
        %v2314 = vsel %vm2312, %v2302, 2102212464
        %v2315 = vsel %vm2311, %v2299, %v2314
        %v2316 = vsel %vm2310, %v2313, %v2315
        %v2317 = vsel %vm2309, %v2296, %v2299
        %v2318 = vsel %vm2312, %v2305, 920167782
        %v2319 = vsel %vm2311, %v2302, %v2318
        %v2320 = vsel %vm2310, %v2317, %v2319
        %v2321 = vsel %vm2309, %v2299, %v2302
        %v2322 = vsel %vm2312, %v2308, 1326507024
        %v2323 = vsel %vm2311, %v2305, %v2322
        %v2324 = vsel %vm2310, %v2321, %v2323
        %v2325 = vshll.u32 %v2285, 8
        %v2326 = vand.u32 %v2325, 65535
        %v2327 = vshrl.u32 %v2325, 16
        %v2328 = vand.u32 %v2324, 65535
        %v2329 = vshrl.u32 %v2324, 16
        %v2330 = vmul.u32 %v2326, %v2328
        %v2331 = vmul.u32 %v2326, %v2329
        %v2332 = vmul.u32 %v2327, %v2328
        %v2333 = vmul.u32 %v2327, %v2329
        %v2334 = vshll.u32 %v2331, 16
        %v2335 = vshrl.u32 %v2331, 16
        %v2336 = vshll.u32 %v2332, 16
        %v2337 = vshrl.u32 %v2332, 16
        %vm2338 = vc.u32 %v2330, %v2334
        %v2339 = vsel %vm2338, 1, 0
        %v2340 = vadd.s32 %v2330, %v2334
        %v2341 = vadd.s32 %v2333, %v2339
        %vm2342 = vc.u32 %v2340, %v2336
        %v2343 = vsel %vm2342, 1, 0
        %v2344 = vadd.s32 %v2340, %v2336
        %v2345 = vadd.s32 %v2341, %v2343
        %v2346 = vadd.s32 %v2345, %v2335
        %v2347 = vadd.s32 %v2346, %v2337
        %v2348 = vand.u32 %v2325, 65535
        %v2349 = vshrl.u32 %v2325, 16
        %v2350 = vand.u32 %v2320, 65535
        %v2351 = vshrl.u32 %v2320, 16
        %v2352 = vmul.u32 %v2348, %v2350
        %v2353 = vmul.u32 %v2348, %v2351
        %v2354 = vmul.u32 %v2349, %v2350
        %v2355 = vmul.u32 %v2349, %v2351
        %v2356 = vshll.u32 %v2353, 16
        %v2357 = vshrl.u32 %v2353, 16
        %v2358 = vshll.u32 %v2354, 16
        %v2359 = vshrl.u32 %v2354, 16
        %vm2360 = vc.u32 %v2352, %v2356
        %v2361 = vsel %vm2360, 1, 0
        %v2362 = vadd.s32 %v2352, %v2356
        %v2363 = vadd.s32 %v2355, %v2361
        %vm2364 = vc.u32 %v2362, %v2358
        %v2365 = vsel %vm2364, 1, 0
        %v2366 = vadd.s32 %v2362, %v2358
        %v2367 = vadd.s32 %v2363, %v2365
        %v2368 = vadd.s32 %v2367, %v2357
        %v2369 = vadd.s32 %v2368, %v2359
        %v2370 = vmul.u32 %v2325, %v2316
        %v2371 = vadd.s32 %v2347, %v2366
        %vm2372 = vc.u32 %v2347, %v2366
        %v2373 = vadd.s32 %v2369, 1
        %v2374 = vsel %vm2372, %v2373, %v2369
        %v2375 = vadd.s32 %v2370, %v2374
        %v2376 = vadd.s32 %v2375, 536870912
        %v2377 = vshrl.u32 %v2376, 30
        %v2378 = vshll.u32 %v2377, 30
        %v2379 = vsub.s32 %v2375, %v2378
        %vm2380 = vcmp.lt.s32.totalorder %v2379, 0
        %v2381 = vsub.s32 0, %v2379
        %v2382 = vsel %vm2380, %v2381, %v2379
        %v2383 = vclz %v2382
        %v2384 = vsub.s32 %v2383, 2
        %vm2385 = vcmp.gt.s32.totalorder 0, %v2384
        %v2386 = vsel %vm2385, 0, %v2384
        %v2387 = vsub.s32 32, %v2386
        %v2388 = vshll.u32 %v2379, %v2386
        %v2389 = vshrl.u32 %v2371, %v2387
        %v2390 = vor.u32 %v2388, %v2389
        %v2391 = vsub.s32 4294967266, %v2386
        %v2392 = vadd.s32 %v2391, 127
        %v2393 = vshll.u32 %v2392, 23
        %v2394 = vor.u32 4788187, %v2393
        %v2395 = vand.u32 2147483647, %v2394
        %v2397 = vcvt.s32.f32 %v2390
        %v2398 = vmul.f32 %v2397, %v2395
        %v2399 = vxor.u32 %v2398, 2147483648
        %v2400 = vsel %vm2279, %v2399, %v2398
        %v2401 = vsub.s32 4, %v2377
        %v2402 = vsel %vm2279, %v2401, %v2377
        %v2403 = vsel %vm2278, %v705, %v2400
        %v2404 = vsel %vm2278, 0, %v2402
        %v2405 = vmul.f32 %v2403, %v2403
        %v2406 = vmul.f32 %v2405, -0.001358992
        %v2407 = vadd.f32 %v2406, 0.041655596
        %v2408 = vmul.f32 %v2405, %v2407
        %v2409 = vadd.f32 %v2408, -0.4999988
        %v2410 = vmul.f32 %v2405, %v2409
        %v2411 = vadd.f32 1.0, %v2410
        %v2412 = vmul.f32 %v2403, %v2403
        %v2413 = vmul.f32 %v2412, -0.00019511016
        %v2414 = vadd.f32 %v2413, 0.008332121
        %v2415 = vmul.f32 %v2412, %v2414
        %v2416 = vadd.f32 %v2415, -0.16666654
        %v2417 = vmul.f32 %v2412, %v2416
        %v2418 = vadd.f32 %v2417, 1.0
        %v2419 = vmul.f32 %v2418, %v2403
        %vm2420 = vweird.f32 %v705
        %v2421 = vadd.s32 %v2404, 3
        %v2422 = vand.u32 %v2421, 3
        %vm2423 = vcmp.lt.s32.totalorder %v2422, 2
        %vm2424 = vcmp.eq.s32.totalorder %v2422, 0
        %v2425 = vxor.u32 %v2419, 2147483648
        %v2426 = vsel %vm2424, %v2411, %v2425
        %vm2427 = vcmp.eq.s32.totalorder %v2422, 2
        %v2428 = vxor.u32 %v2411, 2147483648
        %v2429 = vsel %vm2427, %v2428, %v2419
        %v2430 = vsel %vm2423, %v2426, %v2429
        %v2431 = vsel %vm2420, nan, %v2430
        %v2432 = vand.u32 2147483647, %v706
        %vm2433 = vcmp.le.f32.partialorder %v2432, 0.7853982
        %vm2434 = vcmp.lt.s32.totalorder %v706, 0
        %v2435 = vand.u32 %v706, 2139095040
        %v2436 = vshrl.u32 %v2435, 23
        %v2437 = vsub.s32 %v2436, 127
        %v2438 = vand.u32 2147483647, %v706
        %v2439 = vand.u32 %v2438, 8388607
        %v2440 = vor.u32 %v2439, 8388608
        %v2441 = vsub.s32 0, %v2440
        %v2442 = vadd.s32 %v2437, 1
        %vm2443 = vcmp.gt.s32.totalorder %v2442, 0
        %v2444 = vsel %vm2443, %v2442, 0
        %v2445 = vshrl.u32 %v2444, 5
        %v2446 = vand.u32 %v2444, 31
        %v2447 = vsub.s32 32, %v2446
        %v2448 = vshrl.u32 683565275, %v2447
        %v2449 = vshll.u32 683565275, %v2446
        %v2450 = vshrl.u32 2475754826, %v2447
        %v2451 = vor.u32 %v2449, %v2450
        %v2452 = vshll.u32 2475754826, %v2446
        %v2453 = vshrl.u32 2131351028, %v2447
        %v2454 = vor.u32 %v2452, %v2453
        %v2455 = vshll.u32 2131351028, %v2446
        %v2456 = vshrl.u32 2102212464, %v2447
        %v2457 = vor.u32 %v2455, %v2456
        %v2458 = vshll.u32 2102212464, %v2446
        %v2459 = vshrl.u32 920167782, %v2447
        %v2460 = vor.u32 %v2458, %v2459
        %v2461 = vshll.u32 920167782, %v2446
        %v2462 = vshrl.u32 1326507024, %v2447
        %v2463 = vor.u32 %v2461, %v2462
        %vm2464 = vcmp.lt.s32.totalorder %v2445, 1
        %vm2465 = vcmp.lt.s32.totalorder %v2445, 2
        %vm2466 = vcmp.lt.s32.totalorder %v2445, 3
        %vm2467 = vcmp.lt.s32.totalorder %v2445, 4
        %v2468 = vsel %vm2464, %v2448, %v2451
        %v2469 = vsel %vm2467, %v2457, 2102212464
        %v2470 = vsel %vm2466, %v2454, %v2469
        %v2471 = vsel %vm2465, %v2468, %v2470
        %v2472 = vsel %vm2464, %v2451, %v2454
        %v2473 = vsel %vm2467, %v2460, 920167782
        %v2474 = vsel %vm2466, %v2457, %v2473
        %v2475 = vsel %vm2465, %v2472, %v2474
        %v2476 = vsel %vm2464, %v2454, %v2457
        %v2477 = vsel %vm2467, %v2463, 1326507024
        %v2478 = vsel %vm2466, %v2460, %v2477
        %v2479 = vsel %vm2465, %v2476, %v2478
        %v2480 = vshll.u32 %v2440, 8
        %v2481 = vand.u32 %v2480, 65535
        %v2482 = vshrl.u32 %v2480, 16
        %v2483 = vand.u32 %v2479, 65535
        %v2484 = vshrl.u32 %v2479, 16
        %v2485 = vmul.u32 %v2481, %v2483
        %v2486 = vmul.u32 %v2481, %v2484
        %v2487 = vmul.u32 %v2482, %v2483
        %v2488 = vmul.u32 %v2482, %v2484
        %v2489 = vshll.u32 %v2486, 16
        %v2490 = vshrl.u32 %v2486, 16
        %v2491 = vshll.u32 %v2487, 16
        %v2492 = vshrl.u32 %v2487, 16
        %vm2493 = vc.u32 %v2485, %v2489
        %v2494 = vsel %vm2493, 1, 0
        %v2495 = vadd.s32 %v2485, %v2489
        %v2496 = vadd.s32 %v2488, %v2494
        %vm2497 = vc.u32 %v2495, %v2491
        %v2498 = vsel %vm2497, 1, 0
        %v2499 = vadd.s32 %v2495, %v2491
        %v2500 = vadd.s32 %v2496, %v2498
        %v2501 = vadd.s32 %v2500, %v2490
        %v2502 = vadd.s32 %v2501, %v2492
        %v2503 = vand.u32 %v2480, 65535
        %v2504 = vshrl.u32 %v2480, 16
        %v2505 = vand.u32 %v2475, 65535
        %v2506 = vshrl.u32 %v2475, 16
        %v2507 = vmul.u32 %v2503, %v2505
        %v2508 = vmul.u32 %v2503, %v2506
        %v2509 = vmul.u32 %v2504, %v2505
        %v2510 = vmul.u32 %v2504, %v2506
        %v2511 = vshll.u32 %v2508, 16
        %v2512 = vshrl.u32 %v2508, 16
        %v2513 = vshll.u32 %v2509, 16
        %v2514 = vshrl.u32 %v2509, 16
        %vm2515 = vc.u32 %v2507, %v2511
        %v2516 = vsel %vm2515, 1, 0
        %v2517 = vadd.s32 %v2507, %v2511
        %v2518 = vadd.s32 %v2510, %v2516
        %vm2519 = vc.u32 %v2517, %v2513
        %v2520 = vsel %vm2519, 1, 0
        %v2521 = vadd.s32 %v2517, %v2513
        %v2522 = vadd.s32 %v2518, %v2520
        %v2523 = vadd.s32 %v2522, %v2512
        %v2524 = vadd.s32 %v2523, %v2514
        %v2525 = vmul.u32 %v2480, %v2471
        %v2526 = vadd.s32 %v2502, %v2521
        %vm2527 = vc.u32 %v2502, %v2521
        %v2528 = vadd.s32 %v2524, 1
        %v2529 = vsel %vm2527, %v2528, %v2524
        %v2530 = vadd.s32 %v2525, %v2529
        %v2531 = vadd.s32 %v2530, 536870912
        %v2532 = vshrl.u32 %v2531, 30
        %v2533 = vshll.u32 %v2532, 30
        %v2534 = vsub.s32 %v2530, %v2533
        %vm2535 = vcmp.lt.s32.totalorder %v2534, 0
        %v2536 = vsub.s32 0, %v2534
        %v2537 = vsel %vm2535, %v2536, %v2534
        %v2538 = vclz %v2537
        %v2539 = vsub.s32 %v2538, 2
        %vm2540 = vcmp.gt.s32.totalorder 0, %v2539
        %v2541 = vsel %vm2540, 0, %v2539
        %v2542 = vsub.s32 32, %v2541
        %v2543 = vshll.u32 %v2534, %v2541
        %v2544 = vshrl.u32 %v2526, %v2542
        %v2545 = vor.u32 %v2543, %v2544
        %v2546 = vsub.s32 4294967266, %v2541
        %v2547 = vadd.s32 %v2546, 127
        %v2548 = vshll.u32 %v2547, 23
        %v2549 = vor.u32 4788187, %v2548
        %v2550 = vand.u32 2147483647, %v2549
        %v2552 = vcvt.s32.f32 %v2545
        %v2553 = vmul.f32 %v2552, %v2550
        %v2554 = vxor.u32 %v2553, 2147483648
        %v2555 = vsel %vm2434, %v2554, %v2553
        %v2556 = vsub.s32 4, %v2532
        %v2557 = vsel %vm2434, %v2556, %v2532
        %v2558 = vsel %vm2433, %v706, %v2555
        %v2559 = vsel %vm2433, 0, %v2557
        %v2560 = vmul.f32 %v2558, %v2558
        %v2561 = vmul.f32 %v2560, -0.001358992
        %v2562 = vadd.f32 %v2561, 0.041655596
        %v2563 = vmul.f32 %v2560, %v2562
        %v2564 = vadd.f32 %v2563, -0.4999988
        %v2565 = vmul.f32 %v2560, %v2564
        %v2566 = vadd.f32 1.0, %v2565
        %v2567 = vmul.f32 %v2558, %v2558
        %v2568 = vmul.f32 %v2567, -0.00019511016
        %v2569 = vadd.f32 %v2568, 0.008332121
        %v2570 = vmul.f32 %v2567, %v2569
        %v2571 = vadd.f32 %v2570, -0.16666654
        %v2572 = vmul.f32 %v2567, %v2571
        %v2573 = vadd.f32 %v2572, 1.0
        %v2574 = vmul.f32 %v2573, %v2558
        %vm2575 = vweird.f32 %v706
        %v2576 = vadd.s32 %v2559, 3
        %v2577 = vand.u32 %v2576, 3
        %vm2578 = vcmp.lt.s32.totalorder %v2577, 2
        %vm2579 = vcmp.eq.s32.totalorder %v2577, 0
        %v2580 = vxor.u32 %v2574, 2147483648
        %v2581 = vsel %vm2579, %v2566, %v2580
        %vm2582 = vcmp.eq.s32.totalorder %v2577, 2
        %v2583 = vxor.u32 %v2566, 2147483648
        %v2584 = vsel %vm2582, %v2583, %v2574
        %v2585 = vsel %vm2578, %v2581, %v2584
        %v2586 = vsel %vm2575, nan, %v2585
        %v2587 = vand.u32 2147483647, %v707
        %vm2588 = vcmp.le.f32.partialorder %v2587, 0.7853982
        %vm2589 = vcmp.lt.s32.totalorder %v707, 0
        %v2590 = vand.u32 %v707, 2139095040
        %v2591 = vshrl.u32 %v2590, 23
        %v2592 = vsub.s32 %v2591, 127
        %v2593 = vand.u32 2147483647, %v707
        %v2594 = vand.u32 %v2593, 8388607
        %v2595 = vor.u32 %v2594, 8388608
        %v2596 = vsub.s32 0, %v2595
        %v2597 = vadd.s32 %v2592, 1
        %vm2598 = vcmp.gt.s32.totalorder %v2597, 0
        %v2599 = vsel %vm2598, %v2597, 0
        %v2600 = vshrl.u32 %v2599, 5
        %v2601 = vand.u32 %v2599, 31
        %v2602 = vsub.s32 32, %v2601
        %v2603 = vshrl.u32 683565275, %v2602
        %v2604 = vshll.u32 683565275, %v2601
        %v2605 = vshrl.u32 2475754826, %v2602
        %v2606 = vor.u32 %v2604, %v2605
        %v2607 = vshll.u32 2475754826, %v2601
        %v2608 = vshrl.u32 2131351028, %v2602
        %v2609 = vor.u32 %v2607, %v2608
        %v2610 = vshll.u32 2131351028, %v2601
        %v2611 = vshrl.u32 2102212464, %v2602
        %v2612 = vor.u32 %v2610, %v2611
        %v2613 = vshll.u32 2102212464, %v2601
        %v2614 = vshrl.u32 920167782, %v2602
        %v2615 = vor.u32 %v2613, %v2614
        %v2616 = vshll.u32 920167782, %v2601
        %v2617 = vshrl.u32 1326507024, %v2602
        %v2618 = vor.u32 %v2616, %v2617
        %vm2619 = vcmp.lt.s32.totalorder %v2600, 1
        %vm2620 = vcmp.lt.s32.totalorder %v2600, 2
        %vm2621 = vcmp.lt.s32.totalorder %v2600, 3
        %vm2622 = vcmp.lt.s32.totalorder %v2600, 4
        %v2623 = vsel %vm2619, %v2603, %v2606
        %v2624 = vsel %vm2622, %v2612, 2102212464
        %v2625 = vsel %vm2621, %v2609, %v2624
        %v2626 = vsel %vm2620, %v2623, %v2625
        %v2627 = vsel %vm2619, %v2606, %v2609
        %v2628 = vsel %vm2622, %v2615, 920167782
        %v2629 = vsel %vm2621, %v2612, %v2628
        %v2630 = vsel %vm2620, %v2627, %v2629
        %v2631 = vsel %vm2619, %v2609, %v2612
        %v2632 = vsel %vm2622, %v2618, 1326507024
        %v2633 = vsel %vm2621, %v2615, %v2632
        %v2634 = vsel %vm2620, %v2631, %v2633
        %v2635 = vshll.u32 %v2595, 8
        %v2636 = vand.u32 %v2635, 65535
        %v2637 = vshrl.u32 %v2635, 16
        %v2638 = vand.u32 %v2634, 65535
        %v2639 = vshrl.u32 %v2634, 16
        %v2640 = vmul.u32 %v2636, %v2638
        %v2641 = vmul.u32 %v2636, %v2639
        %v2642 = vmul.u32 %v2637, %v2638
        %v2643 = vmul.u32 %v2637, %v2639
        %v2644 = vshll.u32 %v2641, 16
        %v2645 = vshrl.u32 %v2641, 16
        %v2646 = vshll.u32 %v2642, 16
        %v2647 = vshrl.u32 %v2642, 16
        %vm2648 = vc.u32 %v2640, %v2644
        %v2649 = vsel %vm2648, 1, 0
        %v2650 = vadd.s32 %v2640, %v2644
        %v2651 = vadd.s32 %v2643, %v2649
        %vm2652 = vc.u32 %v2650, %v2646
        %v2653 = vsel %vm2652, 1, 0
        %v2654 = vadd.s32 %v2650, %v2646
        %v2655 = vadd.s32 %v2651, %v2653
        %v2656 = vadd.s32 %v2655, %v2645
        %v2657 = vadd.s32 %v2656, %v2647
        %v2658 = vand.u32 %v2635, 65535
        %v2659 = vshrl.u32 %v2635, 16
        %v2660 = vand.u32 %v2630, 65535
        %v2661 = vshrl.u32 %v2630, 16
        %v2662 = vmul.u32 %v2658, %v2660
        %v2663 = vmul.u32 %v2658, %v2661
        %v2664 = vmul.u32 %v2659, %v2660
        %v2665 = vmul.u32 %v2659, %v2661
        %v2666 = vshll.u32 %v2663, 16
        %v2667 = vshrl.u32 %v2663, 16
        %v2668 = vshll.u32 %v2664, 16
        %v2669 = vshrl.u32 %v2664, 16
        %vm2670 = vc.u32 %v2662, %v2666
        %v2671 = vsel %vm2670, 1, 0
        %v2672 = vadd.s32 %v2662, %v2666
        %v2673 = vadd.s32 %v2665, %v2671
        %vm2674 = vc.u32 %v2672, %v2668
        %v2675 = vsel %vm2674, 1, 0
        %v2676 = vadd.s32 %v2672, %v2668
        %v2677 = vadd.s32 %v2673, %v2675
        %v2678 = vadd.s32 %v2677, %v2667
        %v2679 = vadd.s32 %v2678, %v2669
        %v2680 = vmul.u32 %v2635, %v2626
        %v2681 = vadd.s32 %v2657, %v2676
        %vm2682 = vc.u32 %v2657, %v2676
        %v2683 = vadd.s32 %v2679, 1
        %v2684 = vsel %vm2682, %v2683, %v2679
        %v2685 = vadd.s32 %v2680, %v2684
        %v2686 = vadd.s32 %v2685, 536870912
        %v2687 = vshrl.u32 %v2686, 30
        %v2688 = vshll.u32 %v2687, 30
        %v2689 = vsub.s32 %v2685, %v2688
        %vm2690 = vcmp.lt.s32.totalorder %v2689, 0
        %v2691 = vsub.s32 0, %v2689
        %v2692 = vsel %vm2690, %v2691, %v2689
        %v2693 = vclz %v2692
        %v2694 = vsub.s32 %v2693, 2
        %vm2695 = vcmp.gt.s32.totalorder 0, %v2694
        %v2696 = vsel %vm2695, 0, %v2694
        %v2697 = vsub.s32 32, %v2696
        %v2698 = vshll.u32 %v2689, %v2696
        %v2699 = vshrl.u32 %v2681, %v2697
        %v2700 = vor.u32 %v2698, %v2699
        %v2701 = vsub.s32 4294967266, %v2696
        %v2702 = vadd.s32 %v2701, 127
        %v2703 = vshll.u32 %v2702, 23
        %v2704 = vor.u32 4788187, %v2703
        %v2705 = vand.u32 2147483647, %v2704
        %v2707 = vcvt.s32.f32 %v2700
        %v2708 = vmul.f32 %v2707, %v2705
        %v2709 = vxor.u32 %v2708, 2147483648
        %v2710 = vsel %vm2589, %v2709, %v2708
        %v2711 = vsub.s32 4, %v2687
        %v2712 = vsel %vm2589, %v2711, %v2687
        %v2713 = vsel %vm2588, %v707, %v2710
        %v2714 = vsel %vm2588, 0, %v2712
        %v2715 = vmul.f32 %v2713, %v2713
        %v2716 = vmul.f32 %v2715, -0.001358992
        %v2717 = vadd.f32 %v2716, 0.041655596
        %v2718 = vmul.f32 %v2715, %v2717
        %v2719 = vadd.f32 %v2718, -0.4999988
        %v2720 = vmul.f32 %v2715, %v2719
        %v2721 = vadd.f32 1.0, %v2720
        %v2722 = vmul.f32 %v2713, %v2713
        %v2723 = vmul.f32 %v2722, -0.00019511016
        %v2724 = vadd.f32 %v2723, 0.008332121
        %v2725 = vmul.f32 %v2722, %v2724
        %v2726 = vadd.f32 %v2725, -0.16666654
        %v2727 = vmul.f32 %v2722, %v2726
        %v2728 = vadd.f32 %v2727, 1.0
        %v2729 = vmul.f32 %v2728, %v2713
        %vm2730 = vweird.f32 %v707
        %v2731 = vadd.s32 %v2714, 3
        %v2732 = vand.u32 %v2731, 3
        %vm2733 = vcmp.lt.s32.totalorder %v2732, 2
        %vm2734 = vcmp.eq.s32.totalorder %v2732, 0
        %v2735 = vxor.u32 %v2729, 2147483648
        %v2736 = vsel %vm2734, %v2721, %v2735
        %vm2737 = vcmp.eq.s32.totalorder %v2732, 2
        %v2738 = vxor.u32 %v2721, 2147483648
        %v2739 = vsel %vm2737, %v2738, %v2729
        %v2740 = vsel %vm2733, %v2736, %v2739
        %v2741 = vsel %vm2730, nan, %v2740
        %v2742 = vand.u32 2147483647, %v708
        %vm2743 = vcmp.le.f32.partialorder %v2742, 0.7853982
        %vm2744 = vcmp.lt.s32.totalorder %v708, 0
        %v2745 = vand.u32 %v708, 2139095040
        %v2746 = vshrl.u32 %v2745, 23
        %v2747 = vsub.s32 %v2746, 127
        %v2748 = vand.u32 2147483647, %v708
        %v2749 = vand.u32 %v2748, 8388607
        %v2750 = vor.u32 %v2749, 8388608
        %v2751 = vsub.s32 0, %v2750
        %v2752 = vadd.s32 %v2747, 1
        %vm2753 = vcmp.gt.s32.totalorder %v2752, 0
        %v2754 = vsel %vm2753, %v2752, 0
        %v2755 = vshrl.u32 %v2754, 5
        %v2756 = vand.u32 %v2754, 31
        %v2757 = vsub.s32 32, %v2756
        %v2758 = vshrl.u32 683565275, %v2757
        %v2759 = vshll.u32 683565275, %v2756
        %v2760 = vshrl.u32 2475754826, %v2757
        %v2761 = vor.u32 %v2759, %v2760
        %v2762 = vshll.u32 2475754826, %v2756
        %v2763 = vshrl.u32 2131351028, %v2757
        %v2764 = vor.u32 %v2762, %v2763
        %v2765 = vshll.u32 2131351028, %v2756
        %v2766 = vshrl.u32 2102212464, %v2757
        %v2767 = vor.u32 %v2765, %v2766
        %v2768 = vshll.u32 2102212464, %v2756
        %v2769 = vshrl.u32 920167782, %v2757
        %v2770 = vor.u32 %v2768, %v2769
        %v2771 = vshll.u32 920167782, %v2756
        %v2772 = vshrl.u32 1326507024, %v2757
        %v2773 = vor.u32 %v2771, %v2772
        %vm2774 = vcmp.lt.s32.totalorder %v2755, 1
        %vm2775 = vcmp.lt.s32.totalorder %v2755, 2
        %vm2776 = vcmp.lt.s32.totalorder %v2755, 3
        %vm2777 = vcmp.lt.s32.totalorder %v2755, 4
        %v2778 = vsel %vm2774, %v2758, %v2761
        %v2779 = vsel %vm2777, %v2767, 2102212464
        %v2780 = vsel %vm2776, %v2764, %v2779
        %v2781 = vsel %vm2775, %v2778, %v2780
        %v2782 = vsel %vm2774, %v2761, %v2764
        %v2783 = vsel %vm2777, %v2770, 920167782
        %v2784 = vsel %vm2776, %v2767, %v2783
        %v2785 = vsel %vm2775, %v2782, %v2784
        %v2786 = vsel %vm2774, %v2764, %v2767
        %v2787 = vsel %vm2777, %v2773, 1326507024
        %v2788 = vsel %vm2776, %v2770, %v2787
        %v2789 = vsel %vm2775, %v2786, %v2788
        %v2790 = vshll.u32 %v2750, 8
        %v2791 = vand.u32 %v2790, 65535
        %v2792 = vshrl.u32 %v2790, 16
        %v2793 = vand.u32 %v2789, 65535
        %v2794 = vshrl.u32 %v2789, 16
        %v2795 = vmul.u32 %v2791, %v2793
        %v2796 = vmul.u32 %v2791, %v2794
        %v2797 = vmul.u32 %v2792, %v2793
        %v2798 = vmul.u32 %v2792, %v2794
        %v2799 = vshll.u32 %v2796, 16
        %v2800 = vshrl.u32 %v2796, 16
        %v2801 = vshll.u32 %v2797, 16
        %v2802 = vshrl.u32 %v2797, 16
        %vm2803 = vc.u32 %v2795, %v2799
        %v2804 = vsel %vm2803, 1, 0
        %v2805 = vadd.s32 %v2795, %v2799
        %v2806 = vadd.s32 %v2798, %v2804
        %vm2807 = vc.u32 %v2805, %v2801
        %v2808 = vsel %vm2807, 1, 0
        %v2809 = vadd.s32 %v2805, %v2801
        %v2810 = vadd.s32 %v2806, %v2808
        %v2811 = vadd.s32 %v2810, %v2800
        %v2812 = vadd.s32 %v2811, %v2802
        %v2813 = vand.u32 %v2790, 65535
        %v2814 = vshrl.u32 %v2790, 16
        %v2815 = vand.u32 %v2785, 65535
        %v2816 = vshrl.u32 %v2785, 16
        %v2817 = vmul.u32 %v2813, %v2815
        %v2818 = vmul.u32 %v2813, %v2816
        %v2819 = vmul.u32 %v2814, %v2815
        %v2820 = vmul.u32 %v2814, %v2816
        %v2821 = vshll.u32 %v2818, 16
        %v2822 = vshrl.u32 %v2818, 16
        %v2823 = vshll.u32 %v2819, 16
        %v2824 = vshrl.u32 %v2819, 16
        %vm2825 = vc.u32 %v2817, %v2821
        %v2826 = vsel %vm2825, 1, 0
        %v2827 = vadd.s32 %v2817, %v2821
        %v2828 = vadd.s32 %v2820, %v2826
        %vm2829 = vc.u32 %v2827, %v2823
        %v2830 = vsel %vm2829, 1, 0
        %v2831 = vadd.s32 %v2827, %v2823
        %v2832 = vadd.s32 %v2828, %v2830
        %v2833 = vadd.s32 %v2832, %v2822
        %v2834 = vadd.s32 %v2833, %v2824
        %v2835 = vmul.u32 %v2790, %v2781
        %v2836 = vadd.s32 %v2812, %v2831
        %vm2837 = vc.u32 %v2812, %v2831
        %v2838 = vadd.s32 %v2834, 1
        %v2839 = vsel %vm2837, %v2838, %v2834
        %v2840 = vadd.s32 %v2835, %v2839
        %v2841 = vadd.s32 %v2840, 536870912
        %v2842 = vshrl.u32 %v2841, 30
        %v2843 = vshll.u32 %v2842, 30
        %v2844 = vsub.s32 %v2840, %v2843
        %vm2845 = vcmp.lt.s32.totalorder %v2844, 0
        %v2846 = vsub.s32 0, %v2844
        %v2847 = vsel %vm2845, %v2846, %v2844
        %v2848 = vclz %v2847
        %v2849 = vsub.s32 %v2848, 2
        %vm2850 = vcmp.gt.s32.totalorder 0, %v2849
        %v2851 = vsel %vm2850, 0, %v2849
        %v2852 = vsub.s32 32, %v2851
        %v2853 = vshll.u32 %v2844, %v2851
        %v2854 = vshrl.u32 %v2836, %v2852
        %v2855 = vor.u32 %v2853, %v2854
        %v2856 = vsub.s32 4294967266, %v2851
        %v2857 = vadd.s32 %v2856, 127
        %v2858 = vshll.u32 %v2857, 23
        %v2859 = vor.u32 4788187, %v2858
        %v2860 = vand.u32 2147483647, %v2859
        %v2862 = vcvt.s32.f32 %v2855
        %v2863 = vmul.f32 %v2862, %v2860
        %v2864 = vxor.u32 %v2863, 2147483648
        %v2865 = vsel %vm2744, %v2864, %v2863
        %v2866 = vsub.s32 4, %v2842
        %v2867 = vsel %vm2744, %v2866, %v2842
        %v2868 = vsel %vm2743, %v708, %v2865
        %v2869 = vsel %vm2743, 0, %v2867
        %v2870 = vmul.f32 %v2868, %v2868
        %v2871 = vmul.f32 %v2870, -0.001358992
        %v2872 = vadd.f32 %v2871, 0.041655596
        %v2873 = vmul.f32 %v2870, %v2872
        %v2874 = vadd.f32 %v2873, -0.4999988
        %v2875 = vmul.f32 %v2870, %v2874
        %v2876 = vadd.f32 1.0, %v2875
        %v2877 = vmul.f32 %v2868, %v2868
        %v2878 = vmul.f32 %v2877, -0.00019511016
        %v2879 = vadd.f32 %v2878, 0.008332121
        %v2880 = vmul.f32 %v2877, %v2879
        %v2881 = vadd.f32 %v2880, -0.16666654
        %v2882 = vmul.f32 %v2877, %v2881
        %v2883 = vadd.f32 %v2882, 1.0
        %v2884 = vmul.f32 %v2883, %v2868
        %vm2885 = vweird.f32 %v708
        %v2886 = vadd.s32 %v2869, 3
        %v2887 = vand.u32 %v2886, 3
        %vm2888 = vcmp.lt.s32.totalorder %v2887, 2
        %vm2889 = vcmp.eq.s32.totalorder %v2887, 0
        %v2890 = vxor.u32 %v2884, 2147483648
        %v2891 = vsel %vm2889, %v2876, %v2890
        %vm2892 = vcmp.eq.s32.totalorder %v2887, 2
        %v2893 = vxor.u32 %v2876, 2147483648
        %v2894 = vsel %vm2892, %v2893, %v2884
        %v2895 = vsel %vm2888, %v2891, %v2894
        %v2896 = vsel %vm2885, nan, %v2895
        %v2897 = vand.u32 2147483647, %v709
        %vm2898 = vcmp.le.f32.partialorder %v2897, 0.7853982
        %vm2899 = vcmp.lt.s32.totalorder %v709, 0
        %v2900 = vand.u32 %v709, 2139095040
        %v2901 = vshrl.u32 %v2900, 23
        %v2902 = vsub.s32 %v2901, 127
        %v2903 = vand.u32 2147483647, %v709
        %v2904 = vand.u32 %v2903, 8388607
        %v2905 = vor.u32 %v2904, 8388608
        %v2906 = vsub.s32 0, %v2905
        %v2907 = vadd.s32 %v2902, 1
        %vm2908 = vcmp.gt.s32.totalorder %v2907, 0
        %v2909 = vsel %vm2908, %v2907, 0
        %v2910 = vshrl.u32 %v2909, 5
        %v2911 = vand.u32 %v2909, 31
        %v2912 = vsub.s32 32, %v2911
        %v2913 = vshrl.u32 683565275, %v2912
        %v2914 = vshll.u32 683565275, %v2911
        %v2915 = vshrl.u32 2475754826, %v2912
        %v2916 = vor.u32 %v2914, %v2915
        %v2917 = vshll.u32 2475754826, %v2911
        %v2918 = vshrl.u32 2131351028, %v2912
        %v2919 = vor.u32 %v2917, %v2918
        %v2920 = vshll.u32 2131351028, %v2911
        %v2921 = vshrl.u32 2102212464, %v2912
        %v2922 = vor.u32 %v2920, %v2921
        %v2923 = vshll.u32 2102212464, %v2911
        %v2924 = vshrl.u32 920167782, %v2912
        %v2925 = vor.u32 %v2923, %v2924
        %v2926 = vshll.u32 920167782, %v2911
        %v2927 = vshrl.u32 1326507024, %v2912
        %v2928 = vor.u32 %v2926, %v2927
        %vm2929 = vcmp.lt.s32.totalorder %v2910, 1
        %vm2930 = vcmp.lt.s32.totalorder %v2910, 2
        %vm2931 = vcmp.lt.s32.totalorder %v2910, 3
        %vm2932 = vcmp.lt.s32.totalorder %v2910, 4
        %v2933 = vsel %vm2929, %v2913, %v2916
        %v2934 = vsel %vm2932, %v2922, 2102212464
        %v2935 = vsel %vm2931, %v2919, %v2934
        %v2936 = vsel %vm2930, %v2933, %v2935
        %v2937 = vsel %vm2929, %v2916, %v2919
        %v2938 = vsel %vm2932, %v2925, 920167782
        %v2939 = vsel %vm2931, %v2922, %v2938
        %v2940 = vsel %vm2930, %v2937, %v2939
        %v2941 = vsel %vm2929, %v2919, %v2922
        %v2942 = vsel %vm2932, %v2928, 1326507024
        %v2943 = vsel %vm2931, %v2925, %v2942
        %v2944 = vsel %vm2930, %v2941, %v2943
        %v2945 = vshll.u32 %v2905, 8
        %v2946 = vand.u32 %v2945, 65535
        %v2947 = vshrl.u32 %v2945, 16
        %v2948 = vand.u32 %v2944, 65535
        %v2949 = vshrl.u32 %v2944, 16
        %v2950 = vmul.u32 %v2946, %v2948
        %v2951 = vmul.u32 %v2946, %v2949
        %v2952 = vmul.u32 %v2947, %v2948
        %v2953 = vmul.u32 %v2947, %v2949
        %v2954 = vshll.u32 %v2951, 16
        %v2955 = vshrl.u32 %v2951, 16
        %v2956 = vshll.u32 %v2952, 16
        %v2957 = vshrl.u32 %v2952, 16
        %vm2958 = vc.u32 %v2950, %v2954
        %v2959 = vsel %vm2958, 1, 0
        %v2960 = vadd.s32 %v2950, %v2954
        %v2961 = vadd.s32 %v2953, %v2959
        %vm2962 = vc.u32 %v2960, %v2956
        %v2963 = vsel %vm2962, 1, 0
        %v2964 = vadd.s32 %v2960, %v2956
        %v2965 = vadd.s32 %v2961, %v2963
        %v2966 = vadd.s32 %v2965, %v2955
        %v2967 = vadd.s32 %v2966, %v2957
        %v2968 = vand.u32 %v2945, 65535
        %v2969 = vshrl.u32 %v2945, 16
        %v2970 = vand.u32 %v2940, 65535
        %v2971 = vshrl.u32 %v2940, 16
        %v2972 = vmul.u32 %v2968, %v2970
        %v2973 = vmul.u32 %v2968, %v2971
        %v2974 = vmul.u32 %v2969, %v2970
        %v2975 = vmul.u32 %v2969, %v2971
        %v2976 = vshll.u32 %v2973, 16
        %v2977 = vshrl.u32 %v2973, 16
        %v2978 = vshll.u32 %v2974, 16
        %v2979 = vshrl.u32 %v2974, 16
        %vm2980 = vc.u32 %v2972, %v2976
        %v2981 = vsel %vm2980, 1, 0
        %v2982 = vadd.s32 %v2972, %v2976
        %v2983 = vadd.s32 %v2975, %v2981
        %vm2984 = vc.u32 %v2982, %v2978
        %v2985 = vsel %vm2984, 1, 0
        %v2986 = vadd.s32 %v2982, %v2978
        %v2987 = vadd.s32 %v2983, %v2985
        %v2988 = vadd.s32 %v2987, %v2977
        %v2989 = vadd.s32 %v2988, %v2979
        %v2990 = vmul.u32 %v2945, %v2936
        %v2991 = vadd.s32 %v2967, %v2986
        %vm2992 = vc.u32 %v2967, %v2986
        %v2993 = vadd.s32 %v2989, 1
        %v2994 = vsel %vm2992, %v2993, %v2989
        %v2995 = vadd.s32 %v2990, %v2994
        %v2996 = vadd.s32 %v2995, 536870912
        %v2997 = vshrl.u32 %v2996, 30
        %v2998 = vshll.u32 %v2997, 30
        %v2999 = vsub.s32 %v2995, %v2998
        %vm3000 = vcmp.lt.s32.totalorder %v2999, 0
        %v3001 = vsub.s32 0, %v2999
        %v3002 = vsel %vm3000, %v3001, %v2999
        %v3003 = vclz %v3002
        %v3004 = vsub.s32 %v3003, 2
        %vm3005 = vcmp.gt.s32.totalorder 0, %v3004
        %v3006 = vsel %vm3005, 0, %v3004
        %v3007 = vsub.s32 32, %v3006
        %v3008 = vshll.u32 %v2999, %v3006
        %v3009 = vshrl.u32 %v2991, %v3007
        %v3010 = vor.u32 %v3008, %v3009
        %v3011 = vsub.s32 4294967266, %v3006
        %v3012 = vadd.s32 %v3011, 127
        %v3013 = vshll.u32 %v3012, 23
        %v3014 = vor.u32 4788187, %v3013
        %v3015 = vand.u32 2147483647, %v3014
        %v3017 = vcvt.s32.f32 %v3010
        %v3018 = vmul.f32 %v3017, %v3015
        %v3019 = vxor.u32 %v3018, 2147483648
        %v3020 = vsel %vm2899, %v3019, %v3018
        %v3021 = vsub.s32 4, %v2997
        %v3022 = vsel %vm2899, %v3021, %v2997
        %v3023 = vsel %vm2898, %v709, %v3020
        %v3024 = vsel %vm2898, 0, %v3022
        %v3025 = vmul.f32 %v3023, %v3023
        %v3026 = vmul.f32 %v3025, -0.001358992
        %v3027 = vadd.f32 %v3026, 0.041655596
        %v3028 = vmul.f32 %v3025, %v3027
        %v3029 = vadd.f32 %v3028, -0.4999988
        %v3030 = vmul.f32 %v3025, %v3029
        %v3031 = vadd.f32 1.0, %v3030
        %v3032 = vmul.f32 %v3023, %v3023
        %v3033 = vmul.f32 %v3032, -0.00019511016
        %v3034 = vadd.f32 %v3033, 0.008332121
        %v3035 = vmul.f32 %v3032, %v3034
        %v3036 = vadd.f32 %v3035, -0.16666654
        %v3037 = vmul.f32 %v3032, %v3036
        %v3038 = vadd.f32 %v3037, 1.0
        %v3039 = vmul.f32 %v3038, %v3023
        %vm3040 = vweird.f32 %v709
        %v3041 = vadd.s32 %v3024, 3
        %v3042 = vand.u32 %v3041, 3
        %vm3043 = vcmp.lt.s32.totalorder %v3042, 2
        %vm3044 = vcmp.eq.s32.totalorder %v3042, 0
        %v3045 = vxor.u32 %v3039, 2147483648
        %v3046 = vsel %vm3044, %v3031, %v3045
        %vm3047 = vcmp.eq.s32.totalorder %v3042, 2
        %v3048 = vxor.u32 %v3031, 2147483648
        %v3049 = vsel %vm3047, %v3048, %v3039
        %v3050 = vsel %vm3043, %v3046, %v3049
        %v3051 = vsel %vm3040, nan, %v3050
        %v3052 = vand.u32 2147483647, %v710
        %vm3053 = vcmp.le.f32.partialorder %v3052, 0.7853982
        %vm3054 = vcmp.lt.s32.totalorder %v710, 0
        %v3055 = vand.u32 %v710, 2139095040
        %v3056 = vshrl.u32 %v3055, 23
        %v3057 = vsub.s32 %v3056, 127
        %v3058 = vand.u32 2147483647, %v710
        %v3059 = vand.u32 %v3058, 8388607
        %v3060 = vor.u32 %v3059, 8388608
        %v3061 = vsub.s32 0, %v3060
        %v3062 = vadd.s32 %v3057, 1
        %vm3063 = vcmp.gt.s32.totalorder %v3062, 0
        %v3064 = vsel %vm3063, %v3062, 0
        %v3065 = vshrl.u32 %v3064, 5
        %v3066 = vand.u32 %v3064, 31
        %v3067 = vsub.s32 32, %v3066
        %v3068 = vshrl.u32 683565275, %v3067
        %v3069 = vshll.u32 683565275, %v3066
        %v3070 = vshrl.u32 2475754826, %v3067
        %v3071 = vor.u32 %v3069, %v3070
        %v3072 = vshll.u32 2475754826, %v3066
        %v3073 = vshrl.u32 2131351028, %v3067
        %v3074 = vor.u32 %v3072, %v3073
        %v3075 = vshll.u32 2131351028, %v3066
        %v3076 = vshrl.u32 2102212464, %v3067
        %v3077 = vor.u32 %v3075, %v3076
        %v3078 = vshll.u32 2102212464, %v3066
        %v3079 = vshrl.u32 920167782, %v3067
        %v3080 = vor.u32 %v3078, %v3079
        %v3081 = vshll.u32 920167782, %v3066
        %v3082 = vshrl.u32 1326507024, %v3067
        %v3083 = vor.u32 %v3081, %v3082
        %vm3084 = vcmp.lt.s32.totalorder %v3065, 1
        %vm3085 = vcmp.lt.s32.totalorder %v3065, 2
        %vm3086 = vcmp.lt.s32.totalorder %v3065, 3
        %vm3087 = vcmp.lt.s32.totalorder %v3065, 4
        %v3088 = vsel %vm3084, %v3068, %v3071
        %v3089 = vsel %vm3087, %v3077, 2102212464
        %v3090 = vsel %vm3086, %v3074, %v3089
        %v3091 = vsel %vm3085, %v3088, %v3090
        %v3092 = vsel %vm3084, %v3071, %v3074
        %v3093 = vsel %vm3087, %v3080, 920167782
        %v3094 = vsel %vm3086, %v3077, %v3093
        %v3095 = vsel %vm3085, %v3092, %v3094
        %v3096 = vsel %vm3084, %v3074, %v3077
        %v3097 = vsel %vm3087, %v3083, 1326507024
        %v3098 = vsel %vm3086, %v3080, %v3097
        %v3099 = vsel %vm3085, %v3096, %v3098
        %v3100 = vshll.u32 %v3060, 8
        %v3101 = vand.u32 %v3100, 65535
        %v3102 = vshrl.u32 %v3100, 16
        %v3103 = vand.u32 %v3099, 65535
        %v3104 = vshrl.u32 %v3099, 16
        %v3105 = vmul.u32 %v3101, %v3103
        %v3106 = vmul.u32 %v3101, %v3104
        %v3107 = vmul.u32 %v3102, %v3103
        %v3108 = vmul.u32 %v3102, %v3104
        %v3109 = vshll.u32 %v3106, 16
        %v3110 = vshrl.u32 %v3106, 16
        %v3111 = vshll.u32 %v3107, 16
        %v3112 = vshrl.u32 %v3107, 16
        %vm3113 = vc.u32 %v3105, %v3109
        %v3114 = vsel %vm3113, 1, 0
        %v3115 = vadd.s32 %v3105, %v3109
        %v3116 = vadd.s32 %v3108, %v3114
        %vm3117 = vc.u32 %v3115, %v3111
        %v3118 = vsel %vm3117, 1, 0
        %v3119 = vadd.s32 %v3115, %v3111
        %v3120 = vadd.s32 %v3116, %v3118
        %v3121 = vadd.s32 %v3120, %v3110
        %v3122 = vadd.s32 %v3121, %v3112
        %v3123 = vand.u32 %v3100, 65535
        %v3124 = vshrl.u32 %v3100, 16
        %v3125 = vand.u32 %v3095, 65535
        %v3126 = vshrl.u32 %v3095, 16
        %v3127 = vmul.u32 %v3123, %v3125
        %v3128 = vmul.u32 %v3123, %v3126
        %v3129 = vmul.u32 %v3124, %v3125
        %v3130 = vmul.u32 %v3124, %v3126
        %v3131 = vshll.u32 %v3128, 16
        %v3132 = vshrl.u32 %v3128, 16
        %v3133 = vshll.u32 %v3129, 16
        %v3134 = vshrl.u32 %v3129, 16
        %vm3135 = vc.u32 %v3127, %v3131
        %v3136 = vsel %vm3135, 1, 0
        %v3137 = vadd.s32 %v3127, %v3131
        %v3138 = vadd.s32 %v3130, %v3136
        %vm3139 = vc.u32 %v3137, %v3133
        %v3140 = vsel %vm3139, 1, 0
        %v3141 = vadd.s32 %v3137, %v3133
        %v3142 = vadd.s32 %v3138, %v3140
        %v3143 = vadd.s32 %v3142, %v3132
        %v3144 = vadd.s32 %v3143, %v3134
        %v3145 = vmul.u32 %v3100, %v3091
        %v3146 = vadd.s32 %v3122, %v3141
        %vm3147 = vc.u32 %v3122, %v3141
        %v3148 = vadd.s32 %v3144, 1
        %v3149 = vsel %vm3147, %v3148, %v3144
        %v3150 = vadd.s32 %v3145, %v3149
        %v3151 = vadd.s32 %v3150, 536870912
        %v3152 = vshrl.u32 %v3151, 30
        %v3153 = vshll.u32 %v3152, 30
        %v3154 = vsub.s32 %v3150, %v3153
        %vm3155 = vcmp.lt.s32.totalorder %v3154, 0
        %v3156 = vsub.s32 0, %v3154
        %v3157 = vsel %vm3155, %v3156, %v3154
        %v3158 = vclz %v3157
        %v3159 = vsub.s32 %v3158, 2
        %vm3160 = vcmp.gt.s32.totalorder 0, %v3159
        %v3161 = vsel %vm3160, 0, %v3159
        %v3162 = vsub.s32 32, %v3161
        %v3163 = vshll.u32 %v3154, %v3161
        %v3164 = vshrl.u32 %v3146, %v3162
        %v3165 = vor.u32 %v3163, %v3164
        %v3166 = vsub.s32 4294967266, %v3161
        %v3167 = vadd.s32 %v3166, 127
        %v3168 = vshll.u32 %v3167, 23
        %v3169 = vor.u32 4788187, %v3168
        %v3170 = vand.u32 2147483647, %v3169
        %v3172 = vcvt.s32.f32 %v3165
        %v3173 = vmul.f32 %v3172, %v3170
        %v3174 = vxor.u32 %v3173, 2147483648
        %v3175 = vsel %vm3054, %v3174, %v3173
        %v3176 = vsub.s32 4, %v3152
        %v3177 = vsel %vm3054, %v3176, %v3152
        %v3178 = vsel %vm3053, %v710, %v3175
        %v3179 = vsel %vm3053, 0, %v3177
        %v3180 = vmul.f32 %v3178, %v3178
        %v3181 = vmul.f32 %v3180, -0.001358992
        %v3182 = vadd.f32 %v3181, 0.041655596
        %v3183 = vmul.f32 %v3180, %v3182
        %v3184 = vadd.f32 %v3183, -0.4999988
        %v3185 = vmul.f32 %v3180, %v3184
        %v3186 = vadd.f32 1.0, %v3185
        %v3187 = vmul.f32 %v3178, %v3178
        %v3188 = vmul.f32 %v3187, -0.00019511016
        %v3189 = vadd.f32 %v3188, 0.008332121
        %v3190 = vmul.f32 %v3187, %v3189
        %v3191 = vadd.f32 %v3190, -0.16666654
        %v3192 = vmul.f32 %v3187, %v3191
        %v3193 = vadd.f32 %v3192, 1.0
        %v3194 = vmul.f32 %v3193, %v3178
        %vm3195 = vweird.f32 %v710
        %v3196 = vadd.s32 %v3179, 3
        %v3197 = vand.u32 %v3196, 3
        %vm3198 = vcmp.lt.s32.totalorder %v3197, 2
        %vm3199 = vcmp.eq.s32.totalorder %v3197, 0
        %v3200 = vxor.u32 %v3194, 2147483648
        %v3201 = vsel %vm3199, %v3186, %v3200
        %vm3202 = vcmp.eq.s32.totalorder %v3197, 2
        %v3203 = vxor.u32 %v3186, 2147483648
        %v3204 = vsel %vm3202, %v3203, %v3194
        %v3205 = vsel %vm3198, %v3201, %v3204
        %v3206 = vsel %vm3195, nan, %v3205
        %v3207 = vand.u32 2147483647, %v711
        %vm3208 = vcmp.le.f32.partialorder %v3207, 0.7853982
        %vm3209 = vcmp.lt.s32.totalorder %v711, 0
        %v3210 = vand.u32 %v711, 2139095040
        %v3211 = vshrl.u32 %v3210, 23
        %v3212 = vsub.s32 %v3211, 127
        %v3213 = vand.u32 2147483647, %v711
        %v3214 = vand.u32 %v3213, 8388607
        %v3215 = vor.u32 %v3214, 8388608
        %v3216 = vsub.s32 0, %v3215
        %v3217 = vadd.s32 %v3212, 1
        %vm3218 = vcmp.gt.s32.totalorder %v3217, 0
        %v3219 = vsel %vm3218, %v3217, 0
        %v3220 = vshrl.u32 %v3219, 5
        %v3221 = vand.u32 %v3219, 31
        %v3222 = vsub.s32 32, %v3221
        %v3223 = vshrl.u32 683565275, %v3222
        %v3224 = vshll.u32 683565275, %v3221
        %v3225 = vshrl.u32 2475754826, %v3222
        %v3226 = vor.u32 %v3224, %v3225
        %v3227 = vshll.u32 2475754826, %v3221
        %v3228 = vshrl.u32 2131351028, %v3222
        %v3229 = vor.u32 %v3227, %v3228
        %v3230 = vshll.u32 2131351028, %v3221
        %v3231 = vshrl.u32 2102212464, %v3222
        %v3232 = vor.u32 %v3230, %v3231
        %v3233 = vshll.u32 2102212464, %v3221
        %v3234 = vshrl.u32 920167782, %v3222
        %v3235 = vor.u32 %v3233, %v3234
        %v3236 = vshll.u32 920167782, %v3221
        %v3237 = vshrl.u32 1326507024, %v3222
        %v3238 = vor.u32 %v3236, %v3237
        %vm3239 = vcmp.lt.s32.totalorder %v3220, 1
        %vm3240 = vcmp.lt.s32.totalorder %v3220, 2
        %vm3241 = vcmp.lt.s32.totalorder %v3220, 3
        %vm3242 = vcmp.lt.s32.totalorder %v3220, 4
        %v3243 = vsel %vm3239, %v3223, %v3226
        %v3244 = vsel %vm3242, %v3232, 2102212464
        %v3245 = vsel %vm3241, %v3229, %v3244
        %v3246 = vsel %vm3240, %v3243, %v3245
        %v3247 = vsel %vm3239, %v3226, %v3229
        %v3248 = vsel %vm3242, %v3235, 920167782
        %v3249 = vsel %vm3241, %v3232, %v3248
        %v3250 = vsel %vm3240, %v3247, %v3249
        %v3251 = vsel %vm3239, %v3229, %v3232
        %v3252 = vsel %vm3242, %v3238, 1326507024
        %v3253 = vsel %vm3241, %v3235, %v3252
        %v3254 = vsel %vm3240, %v3251, %v3253
        %v3255 = vshll.u32 %v3215, 8
        %v3256 = vand.u32 %v3255, 65535
        %v3257 = vshrl.u32 %v3255, 16
        %v3258 = vand.u32 %v3254, 65535
        %v3259 = vshrl.u32 %v3254, 16
        %v3260 = vmul.u32 %v3256, %v3258
        %v3261 = vmul.u32 %v3256, %v3259
        %v3262 = vmul.u32 %v3257, %v3258
        %v3263 = vmul.u32 %v3257, %v3259
        %v3264 = vshll.u32 %v3261, 16
        %v3265 = vshrl.u32 %v3261, 16
        %v3266 = vshll.u32 %v3262, 16
        %v3267 = vshrl.u32 %v3262, 16
        %vm3268 = vc.u32 %v3260, %v3264
        %v3269 = vsel %vm3268, 1, 0
        %v3270 = vadd.s32 %v3260, %v3264
        %v3271 = vadd.s32 %v3263, %v3269
        %vm3272 = vc.u32 %v3270, %v3266
        %v3273 = vsel %vm3272, 1, 0
        %v3274 = vadd.s32 %v3270, %v3266
        %v3275 = vadd.s32 %v3271, %v3273
        %v3276 = vadd.s32 %v3275, %v3265
        %v3277 = vadd.s32 %v3276, %v3267
        %v3278 = vand.u32 %v3255, 65535
        %v3279 = vshrl.u32 %v3255, 16
        %v3280 = vand.u32 %v3250, 65535
        %v3281 = vshrl.u32 %v3250, 16
        %v3282 = vmul.u32 %v3278, %v3280
        %v3283 = vmul.u32 %v3278, %v3281
        %v3284 = vmul.u32 %v3279, %v3280
        %v3285 = vmul.u32 %v3279, %v3281
        %v3286 = vshll.u32 %v3283, 16
        %v3287 = vshrl.u32 %v3283, 16
        %v3288 = vshll.u32 %v3284, 16
        %v3289 = vshrl.u32 %v3284, 16
        %vm3290 = vc.u32 %v3282, %v3286
        %v3291 = vsel %vm3290, 1, 0
        %v3292 = vadd.s32 %v3282, %v3286
        %v3293 = vadd.s32 %v3285, %v3291
        %vm3294 = vc.u32 %v3292, %v3288
        %v3295 = vsel %vm3294, 1, 0
        %v3296 = vadd.s32 %v3292, %v3288
        %v3297 = vadd.s32 %v3293, %v3295
        %v3298 = vadd.s32 %v3297, %v3287
        %v3299 = vadd.s32 %v3298, %v3289
        %v3300 = vmul.u32 %v3255, %v3246
        %v3301 = vadd.s32 %v3277, %v3296
        %vm3302 = vc.u32 %v3277, %v3296
        %v3303 = vadd.s32 %v3299, 1
        %v3304 = vsel %vm3302, %v3303, %v3299
        %v3305 = vadd.s32 %v3300, %v3304
        %v3306 = vadd.s32 %v3305, 536870912
        %v3307 = vshrl.u32 %v3306, 30
        %v3308 = vshll.u32 %v3307, 30
        %v3309 = vsub.s32 %v3305, %v3308
        %vm3310 = vcmp.lt.s32.totalorder %v3309, 0
        %v3311 = vsub.s32 0, %v3309
        %v3312 = vsel %vm3310, %v3311, %v3309
        %v3313 = vclz %v3312
        %v3314 = vsub.s32 %v3313, 2
        %vm3315 = vcmp.gt.s32.totalorder 0, %v3314
        %v3316 = vsel %vm3315, 0, %v3314
        %v3317 = vsub.s32 32, %v3316
        %v3318 = vshll.u32 %v3309, %v3316
        %v3319 = vshrl.u32 %v3301, %v3317
        %v3320 = vor.u32 %v3318, %v3319
        %v3321 = vsub.s32 4294967266, %v3316
        %v3322 = vadd.s32 %v3321, 127
        %v3323 = vshll.u32 %v3322, 23
        %v3324 = vor.u32 4788187, %v3323
        %v3325 = vand.u32 2147483647, %v3324
        %v3327 = vcvt.s32.f32 %v3320
        %v3328 = vmul.f32 %v3327, %v3325
        %v3329 = vxor.u32 %v3328, 2147483648
        %v3330 = vsel %vm3209, %v3329, %v3328
        %v3331 = vsub.s32 4, %v3307
        %v3332 = vsel %vm3209, %v3331, %v3307
        %v3333 = vsel %vm3208, %v711, %v3330
        %v3334 = vsel %vm3208, 0, %v3332
        %v3335 = vmul.f32 %v3333, %v3333
        %v3336 = vmul.f32 %v3335, -0.001358992
        %v3337 = vadd.f32 %v3336, 0.041655596
        %v3338 = vmul.f32 %v3335, %v3337
        %v3339 = vadd.f32 %v3338, -0.4999988
        %v3340 = vmul.f32 %v3335, %v3339
        %v3341 = vadd.f32 1.0, %v3340
        %v3342 = vmul.f32 %v3333, %v3333
        %v3343 = vmul.f32 %v3342, -0.00019511016
        %v3344 = vadd.f32 %v3343, 0.008332121
        %v3345 = vmul.f32 %v3342, %v3344
        %v3346 = vadd.f32 %v3345, -0.16666654
        %v3347 = vmul.f32 %v3342, %v3346
        %v3348 = vadd.f32 %v3347, 1.0
        %v3349 = vmul.f32 %v3348, %v3333
        %vm3350 = vweird.f32 %v711
        %v3351 = vadd.s32 %v3334, 3
        %v3352 = vand.u32 %v3351, 3
        %vm3353 = vcmp.lt.s32.totalorder %v3352, 2
        %vm3354 = vcmp.eq.s32.totalorder %v3352, 0
        %v3355 = vxor.u32 %v3349, 2147483648
        %v3356 = vsel %vm3354, %v3341, %v3355
        %vm3357 = vcmp.eq.s32.totalorder %v3352, 2
        %v3358 = vxor.u32 %v3341, 2147483648
        %v3359 = vsel %vm3357, %v3358, %v3349
        %v3360 = vsel %vm3353, %v3356, %v3359
        %v3361 = vsel %vm3350, nan, %v3360
        %v3362 = vand.u32 2147483647, %v712
        %vm3363 = vcmp.le.f32.partialorder %v3362, 0.7853982
        %vm3364 = vcmp.lt.s32.totalorder %v712, 0
        %v3365 = vand.u32 %v712, 2139095040
        %v3366 = vshrl.u32 %v3365, 23
        %v3367 = vsub.s32 %v3366, 127
        %v3368 = vand.u32 2147483647, %v712
        %v3369 = vand.u32 %v3368, 8388607
        %v3370 = vor.u32 %v3369, 8388608
        %v3371 = vsub.s32 0, %v3370
        %v3372 = vadd.s32 %v3367, 1
        %vm3373 = vcmp.gt.s32.totalorder %v3372, 0
        %v3374 = vsel %vm3373, %v3372, 0
        %v3375 = vshrl.u32 %v3374, 5
        %v3376 = vand.u32 %v3374, 31
        %v3377 = vsub.s32 32, %v3376
        %v3378 = vshrl.u32 683565275, %v3377
        %v3379 = vshll.u32 683565275, %v3376
        %v3380 = vshrl.u32 2475754826, %v3377
        %v3381 = vor.u32 %v3379, %v3380
        %v3382 = vshll.u32 2475754826, %v3376
        %v3383 = vshrl.u32 2131351028, %v3377
        %v3384 = vor.u32 %v3382, %v3383
        %v3385 = vshll.u32 2131351028, %v3376
        %v3386 = vshrl.u32 2102212464, %v3377
        %v3387 = vor.u32 %v3385, %v3386
        %v3388 = vshll.u32 2102212464, %v3376
        %v3389 = vshrl.u32 920167782, %v3377
        %v3390 = vor.u32 %v3388, %v3389
        %v3391 = vshll.u32 920167782, %v3376
        %v3392 = vshrl.u32 1326507024, %v3377
        %v3393 = vor.u32 %v3391, %v3392
        %vm3394 = vcmp.lt.s32.totalorder %v3375, 1
        %vm3395 = vcmp.lt.s32.totalorder %v3375, 2
        %vm3396 = vcmp.lt.s32.totalorder %v3375, 3
        %vm3397 = vcmp.lt.s32.totalorder %v3375, 4
        %v3398 = vsel %vm3394, %v3378, %v3381
        %v3399 = vsel %vm3397, %v3387, 2102212464
        %v3400 = vsel %vm3396, %v3384, %v3399
        %v3401 = vsel %vm3395, %v3398, %v3400
        %v3402 = vsel %vm3394, %v3381, %v3384
        %v3403 = vsel %vm3397, %v3390, 920167782
        %v3404 = vsel %vm3396, %v3387, %v3403
        %v3405 = vsel %vm3395, %v3402, %v3404
        %v3406 = vsel %vm3394, %v3384, %v3387
        %v3407 = vsel %vm3397, %v3393, 1326507024
        %v3408 = vsel %vm3396, %v3390, %v3407
        %v3409 = vsel %vm3395, %v3406, %v3408
        %v3410 = vshll.u32 %v3370, 8
        %v3411 = vand.u32 %v3410, 65535
        %v3412 = vshrl.u32 %v3410, 16
        %v3413 = vand.u32 %v3409, 65535
        %v3414 = vshrl.u32 %v3409, 16
        %v3415 = vmul.u32 %v3411, %v3413
        %v3416 = vmul.u32 %v3411, %v3414
        %v3417 = vmul.u32 %v3412, %v3413
        %v3418 = vmul.u32 %v3412, %v3414
        %v3419 = vshll.u32 %v3416, 16
        %v3420 = vshrl.u32 %v3416, 16
        %v3421 = vshll.u32 %v3417, 16
        %v3422 = vshrl.u32 %v3417, 16
        %vm3423 = vc.u32 %v3415, %v3419
        %v3424 = vsel %vm3423, 1, 0
        %v3425 = vadd.s32 %v3415, %v3419
        %v3426 = vadd.s32 %v3418, %v3424
        %vm3427 = vc.u32 %v3425, %v3421
        %v3428 = vsel %vm3427, 1, 0
        %v3429 = vadd.s32 %v3425, %v3421
        %v3430 = vadd.s32 %v3426, %v3428
        %v3431 = vadd.s32 %v3430, %v3420
        %v3432 = vadd.s32 %v3431, %v3422
        %v3433 = vand.u32 %v3410, 65535
        %v3434 = vshrl.u32 %v3410, 16
        %v3435 = vand.u32 %v3405, 65535
        %v3436 = vshrl.u32 %v3405, 16
        %v3437 = vmul.u32 %v3433, %v3435
        %v3438 = vmul.u32 %v3433, %v3436
        %v3439 = vmul.u32 %v3434, %v3435
        %v3440 = vmul.u32 %v3434, %v3436
        %v3441 = vshll.u32 %v3438, 16
        %v3442 = vshrl.u32 %v3438, 16
        %v3443 = vshll.u32 %v3439, 16
        %v3444 = vshrl.u32 %v3439, 16
        %vm3445 = vc.u32 %v3437, %v3441
        %v3446 = vsel %vm3445, 1, 0
        %v3447 = vadd.s32 %v3437, %v3441
        %v3448 = vadd.s32 %v3440, %v3446
        %vm3449 = vc.u32 %v3447, %v3443
        %v3450 = vsel %vm3449, 1, 0
        %v3451 = vadd.s32 %v3447, %v3443
        %v3452 = vadd.s32 %v3448, %v3450
        %v3453 = vadd.s32 %v3452, %v3442
        %v3454 = vadd.s32 %v3453, %v3444
        %v3455 = vmul.u32 %v3410, %v3401
        %v3456 = vadd.s32 %v3432, %v3451
        %vm3457 = vc.u32 %v3432, %v3451
        %v3458 = vadd.s32 %v3454, 1
        %v3459 = vsel %vm3457, %v3458, %v3454
        %v3460 = vadd.s32 %v3455, %v3459
        %v3461 = vadd.s32 %v3460, 536870912
        %v3462 = vshrl.u32 %v3461, 30
        %v3463 = vshll.u32 %v3462, 30
        %v3464 = vsub.s32 %v3460, %v3463
        %vm3465 = vcmp.lt.s32.totalorder %v3464, 0
        %v3466 = vsub.s32 0, %v3464
        %v3467 = vsel %vm3465, %v3466, %v3464
        %v3468 = vclz %v3467
        %v3469 = vsub.s32 %v3468, 2
        %vm3470 = vcmp.gt.s32.totalorder 0, %v3469
        %v3471 = vsel %vm3470, 0, %v3469
        %v3472 = vsub.s32 32, %v3471
        %v3473 = vshll.u32 %v3464, %v3471
        %v3474 = vshrl.u32 %v3456, %v3472
        %v3475 = vor.u32 %v3473, %v3474
        %v3476 = vsub.s32 4294967266, %v3471
        %v3477 = vadd.s32 %v3476, 127
        %v3478 = vshll.u32 %v3477, 23
        %v3479 = vor.u32 4788187, %v3478
        %v3480 = vand.u32 2147483647, %v3479
        %v3482 = vcvt.s32.f32 %v3475
        %v3483 = vmul.f32 %v3482, %v3480
        %v3484 = vxor.u32 %v3483, 2147483648
        %v3485 = vsel %vm3364, %v3484, %v3483
        %v3486 = vsub.s32 4, %v3462
        %v3487 = vsel %vm3364, %v3486, %v3462
        %v3488 = vsel %vm3363, %v712, %v3485
        %v3489 = vsel %vm3363, 0, %v3487
        %v3490 = vmul.f32 %v3488, %v3488
        %v3491 = vmul.f32 %v3490, -0.001358992
        %v3492 = vadd.f32 %v3491, 0.041655596
        %v3493 = vmul.f32 %v3490, %v3492
        %v3494 = vadd.f32 %v3493, -0.4999988
        %v3495 = vmul.f32 %v3490, %v3494
        %v3496 = vadd.f32 1.0, %v3495
        %v3497 = vmul.f32 %v3488, %v3488
        %v3498 = vmul.f32 %v3497, -0.00019511016
        %v3499 = vadd.f32 %v3498, 0.008332121
        %v3500 = vmul.f32 %v3497, %v3499
        %v3501 = vadd.f32 %v3500, -0.16666654
        %v3502 = vmul.f32 %v3497, %v3501
        %v3503 = vadd.f32 %v3502, 1.0
        %v3504 = vmul.f32 %v3503, %v3488
        %vm3505 = vweird.f32 %v712
        %v3506 = vadd.s32 %v3489, 3
        %v3507 = vand.u32 %v3506, 3
        %vm3508 = vcmp.lt.s32.totalorder %v3507, 2
        %vm3509 = vcmp.eq.s32.totalorder %v3507, 0
        %v3510 = vxor.u32 %v3504, 2147483648
        %v3511 = vsel %vm3509, %v3496, %v3510
        %vm3512 = vcmp.eq.s32.totalorder %v3507, 2
        %v3513 = vxor.u32 %v3496, 2147483648
        %v3514 = vsel %vm3512, %v3513, %v3504
        %v3515 = vsel %vm3508, %v3511, %v3514
        %v3516 = vsel %vm3505, nan, %v3515
        %v3517 = vand.u32 2147483647, %v713
        %vm3518 = vcmp.le.f32.partialorder %v3517, 0.7853982
        %vm3519 = vcmp.lt.s32.totalorder %v713, 0
        %v3520 = vand.u32 %v713, 2139095040
        %v3521 = vshrl.u32 %v3520, 23
        %v3522 = vsub.s32 %v3521, 127
        %v3523 = vand.u32 2147483647, %v713
        %v3524 = vand.u32 %v3523, 8388607
        %v3525 = vor.u32 %v3524, 8388608
        %v3526 = vsub.s32 0, %v3525
        %v3527 = vadd.s32 %v3522, 1
        %vm3528 = vcmp.gt.s32.totalorder %v3527, 0
        %v3529 = vsel %vm3528, %v3527, 0
        %v3530 = vshrl.u32 %v3529, 5
        %v3531 = vand.u32 %v3529, 31
        %v3532 = vsub.s32 32, %v3531
        %v3533 = vshrl.u32 683565275, %v3532
        %v3534 = vshll.u32 683565275, %v3531
        %v3535 = vshrl.u32 2475754826, %v3532
        %v3536 = vor.u32 %v3534, %v3535
        %v3537 = vshll.u32 2475754826, %v3531
        %v3538 = vshrl.u32 2131351028, %v3532
        %v3539 = vor.u32 %v3537, %v3538
        %v3540 = vshll.u32 2131351028, %v3531
        %v3541 = vshrl.u32 2102212464, %v3532
        %v3542 = vor.u32 %v3540, %v3541
        %v3543 = vshll.u32 2102212464, %v3531
        %v3544 = vshrl.u32 920167782, %v3532
        %v3545 = vor.u32 %v3543, %v3544
        %v3546 = vshll.u32 920167782, %v3531
        %v3547 = vshrl.u32 1326507024, %v3532
        %v3548 = vor.u32 %v3546, %v3547
        %vm3549 = vcmp.lt.s32.totalorder %v3530, 1
        %vm3550 = vcmp.lt.s32.totalorder %v3530, 2
        %vm3551 = vcmp.lt.s32.totalorder %v3530, 3
        %vm3552 = vcmp.lt.s32.totalorder %v3530, 4
        %v3553 = vsel %vm3549, %v3533, %v3536
        %v3554 = vsel %vm3552, %v3542, 2102212464
        %v3555 = vsel %vm3551, %v3539, %v3554
        %v3556 = vsel %vm3550, %v3553, %v3555
        %v3557 = vsel %vm3549, %v3536, %v3539
        %v3558 = vsel %vm3552, %v3545, 920167782
        %v3559 = vsel %vm3551, %v3542, %v3558
        %v3560 = vsel %vm3550, %v3557, %v3559
        %v3561 = vsel %vm3549, %v3539, %v3542
        %v3562 = vsel %vm3552, %v3548, 1326507024
        %v3563 = vsel %vm3551, %v3545, %v3562
        %v3564 = vsel %vm3550, %v3561, %v3563
        %v3565 = vshll.u32 %v3525, 8
        %v3566 = vand.u32 %v3565, 65535
        %v3567 = vshrl.u32 %v3565, 16
        %v3568 = vand.u32 %v3564, 65535
        %v3569 = vshrl.u32 %v3564, 16
        %v3570 = vmul.u32 %v3566, %v3568
        %v3571 = vmul.u32 %v3566, %v3569
        %v3572 = vmul.u32 %v3567, %v3568
        %v3573 = vmul.u32 %v3567, %v3569
        %v3574 = vshll.u32 %v3571, 16
        %v3575 = vshrl.u32 %v3571, 16
        %v3576 = vshll.u32 %v3572, 16
        %v3577 = vshrl.u32 %v3572, 16
        %vm3578 = vc.u32 %v3570, %v3574
        %v3579 = vsel %vm3578, 1, 0
        %v3580 = vadd.s32 %v3570, %v3574
        %v3581 = vadd.s32 %v3573, %v3579
        %vm3582 = vc.u32 %v3580, %v3576
        %v3583 = vsel %vm3582, 1, 0
        %v3584 = vadd.s32 %v3580, %v3576
        %v3585 = vadd.s32 %v3581, %v3583
        %v3586 = vadd.s32 %v3585, %v3575
        %v3587 = vadd.s32 %v3586, %v3577
        %v3588 = vand.u32 %v3565, 65535
        %v3589 = vshrl.u32 %v3565, 16
        %v3590 = vand.u32 %v3560, 65535
        %v3591 = vshrl.u32 %v3560, 16
        %v3592 = vmul.u32 %v3588, %v3590
        %v3593 = vmul.u32 %v3588, %v3591
        %v3594 = vmul.u32 %v3589, %v3590
        %v3595 = vmul.u32 %v3589, %v3591
        %v3596 = vshll.u32 %v3593, 16
        %v3597 = vshrl.u32 %v3593, 16
        %v3598 = vshll.u32 %v3594, 16
        %v3599 = vshrl.u32 %v3594, 16
        %vm3600 = vc.u32 %v3592, %v3596
        %v3601 = vsel %vm3600, 1, 0
        %v3602 = vadd.s32 %v3592, %v3596
        %v3603 = vadd.s32 %v3595, %v3601
        %vm3604 = vc.u32 %v3602, %v3598
        %v3605 = vsel %vm3604, 1, 0
        %v3606 = vadd.s32 %v3602, %v3598
        %v3607 = vadd.s32 %v3603, %v3605
        %v3608 = vadd.s32 %v3607, %v3597
        %v3609 = vadd.s32 %v3608, %v3599
        %v3610 = vmul.u32 %v3565, %v3556
        %v3611 = vadd.s32 %v3587, %v3606
        %vm3612 = vc.u32 %v3587, %v3606
        %v3613 = vadd.s32 %v3609, 1
        %v3614 = vsel %vm3612, %v3613, %v3609
        %v3615 = vadd.s32 %v3610, %v3614
        %v3616 = vadd.s32 %v3615, 536870912
        %v3617 = vshrl.u32 %v3616, 30
        %v3618 = vshll.u32 %v3617, 30
        %v3619 = vsub.s32 %v3615, %v3618
        %vm3620 = vcmp.lt.s32.totalorder %v3619, 0
        %v3621 = vsub.s32 0, %v3619
        %v3622 = vsel %vm3620, %v3621, %v3619
        %v3623 = vclz %v3622
        %v3624 = vsub.s32 %v3623, 2
        %vm3625 = vcmp.gt.s32.totalorder 0, %v3624
        %v3626 = vsel %vm3625, 0, %v3624
        %v3627 = vsub.s32 32, %v3626
        %v3628 = vshll.u32 %v3619, %v3626
        %v3629 = vshrl.u32 %v3611, %v3627
        %v3630 = vor.u32 %v3628, %v3629
        %v3631 = vsub.s32 4294967266, %v3626
        %v3632 = vadd.s32 %v3631, 127
        %v3633 = vshll.u32 %v3632, 23
        %v3634 = vor.u32 4788187, %v3633
        %v3635 = vand.u32 2147483647, %v3634
        %v3637 = vcvt.s32.f32 %v3630
        %v3638 = vmul.f32 %v3637, %v3635
        %v3639 = vxor.u32 %v3638, 2147483648
        %v3640 = vsel %vm3519, %v3639, %v3638
        %v3641 = vsub.s32 4, %v3617
        %v3642 = vsel %vm3519, %v3641, %v3617
        %v3643 = vsel %vm3518, %v713, %v3640
        %v3644 = vsel %vm3518, 0, %v3642
        %v3645 = vmul.f32 %v3643, %v3643
        %v3646 = vmul.f32 %v3645, -0.001358992
        %v3647 = vadd.f32 %v3646, 0.041655596
        %v3648 = vmul.f32 %v3645, %v3647
        %v3649 = vadd.f32 %v3648, -0.4999988
        %v3650 = vmul.f32 %v3645, %v3649
        %v3651 = vadd.f32 1.0, %v3650
        %v3652 = vmul.f32 %v3643, %v3643
        %v3653 = vmul.f32 %v3652, -0.00019511016
        %v3654 = vadd.f32 %v3653, 0.008332121
        %v3655 = vmul.f32 %v3652, %v3654
        %v3656 = vadd.f32 %v3655, -0.16666654
        %v3657 = vmul.f32 %v3652, %v3656
        %v3658 = vadd.f32 %v3657, 1.0
        %v3659 = vmul.f32 %v3658, %v3643
        %vm3660 = vweird.f32 %v713
        %v3661 = vadd.s32 %v3644, 3
        %v3662 = vand.u32 %v3661, 3
        %vm3663 = vcmp.lt.s32.totalorder %v3662, 2
        %vm3664 = vcmp.eq.s32.totalorder %v3662, 0
        %v3665 = vxor.u32 %v3659, 2147483648
        %v3666 = vsel %vm3664, %v3651, %v3665
        %vm3667 = vcmp.eq.s32.totalorder %v3662, 2
        %v3668 = vxor.u32 %v3651, 2147483648
        %v3669 = vsel %vm3667, %v3668, %v3659
        %v3670 = vsel %vm3663, %v3666, %v3669
        %v3671 = vsel %vm3660, nan, %v3670
        %v3672 = vand.u32 2147483647, %v714
        %vm3673 = vcmp.le.f32.partialorder %v3672, 0.7853982
        %vm3674 = vcmp.lt.s32.totalorder %v714, 0
        %v3675 = vand.u32 %v714, 2139095040
        %v3676 = vshrl.u32 %v3675, 23
        %v3677 = vsub.s32 %v3676, 127
        %v3678 = vand.u32 2147483647, %v714
        %v3679 = vand.u32 %v3678, 8388607
        %v3680 = vor.u32 %v3679, 8388608
        %v3681 = vsub.s32 0, %v3680
        %v3682 = vadd.s32 %v3677, 1
        %vm3683 = vcmp.gt.s32.totalorder %v3682, 0
        %v3684 = vsel %vm3683, %v3682, 0
        %v3685 = vshrl.u32 %v3684, 5
        %v3686 = vand.u32 %v3684, 31
        %v3687 = vsub.s32 32, %v3686
        %v3688 = vshrl.u32 683565275, %v3687
        %v3689 = vshll.u32 683565275, %v3686
        %v3690 = vshrl.u32 2475754826, %v3687
        %v3691 = vor.u32 %v3689, %v3690
        %v3692 = vshll.u32 2475754826, %v3686
        %v3693 = vshrl.u32 2131351028, %v3687
        %v3694 = vor.u32 %v3692, %v3693
        %v3695 = vshll.u32 2131351028, %v3686
        %v3696 = vshrl.u32 2102212464, %v3687
        %v3697 = vor.u32 %v3695, %v3696
        %v3698 = vshll.u32 2102212464, %v3686
        %v3699 = vshrl.u32 920167782, %v3687
        %v3700 = vor.u32 %v3698, %v3699
        %v3701 = vshll.u32 920167782, %v3686
        %v3702 = vshrl.u32 1326507024, %v3687
        %v3703 = vor.u32 %v3701, %v3702
        %vm3704 = vcmp.lt.s32.totalorder %v3685, 1
        %vm3705 = vcmp.lt.s32.totalorder %v3685, 2
        %vm3706 = vcmp.lt.s32.totalorder %v3685, 3
        %vm3707 = vcmp.lt.s32.totalorder %v3685, 4
        %v3708 = vsel %vm3704, %v3688, %v3691
        %v3709 = vsel %vm3707, %v3697, 2102212464
        %v3710 = vsel %vm3706, %v3694, %v3709
        %v3711 = vsel %vm3705, %v3708, %v3710
        %v3712 = vsel %vm3704, %v3691, %v3694
        %v3713 = vsel %vm3707, %v3700, 920167782
        %v3714 = vsel %vm3706, %v3697, %v3713
        %v3715 = vsel %vm3705, %v3712, %v3714
        %v3716 = vsel %vm3704, %v3694, %v3697
        %v3717 = vsel %vm3707, %v3703, 1326507024
        %v3718 = vsel %vm3706, %v3700, %v3717
        %v3719 = vsel %vm3705, %v3716, %v3718
        %v3720 = vshll.u32 %v3680, 8
        %v3721 = vand.u32 %v3720, 65535
        %v3722 = vshrl.u32 %v3720, 16
        %v3723 = vand.u32 %v3719, 65535
        %v3724 = vshrl.u32 %v3719, 16
        %v3725 = vmul.u32 %v3721, %v3723
        %v3726 = vmul.u32 %v3721, %v3724
        %v3727 = vmul.u32 %v3722, %v3723
        %v3728 = vmul.u32 %v3722, %v3724
        %v3729 = vshll.u32 %v3726, 16
        %v3730 = vshrl.u32 %v3726, 16
        %v3731 = vshll.u32 %v3727, 16
        %v3732 = vshrl.u32 %v3727, 16
        %vm3733 = vc.u32 %v3725, %v3729
        %v3734 = vsel %vm3733, 1, 0
        %v3735 = vadd.s32 %v3725, %v3729
        %v3736 = vadd.s32 %v3728, %v3734
        %vm3737 = vc.u32 %v3735, %v3731
        %v3738 = vsel %vm3737, 1, 0
        %v3739 = vadd.s32 %v3735, %v3731
        %v3740 = vadd.s32 %v3736, %v3738
        %v3741 = vadd.s32 %v3740, %v3730
        %v3742 = vadd.s32 %v3741, %v3732
        %v3743 = vand.u32 %v3720, 65535
        %v3744 = vshrl.u32 %v3720, 16
        %v3745 = vand.u32 %v3715, 65535
        %v3746 = vshrl.u32 %v3715, 16
        %v3747 = vmul.u32 %v3743, %v3745
        %v3748 = vmul.u32 %v3743, %v3746
        %v3749 = vmul.u32 %v3744, %v3745
        %v3750 = vmul.u32 %v3744, %v3746
        %v3751 = vshll.u32 %v3748, 16
        %v3752 = vshrl.u32 %v3748, 16
        %v3753 = vshll.u32 %v3749, 16
        %v3754 = vshrl.u32 %v3749, 16
        %vm3755 = vc.u32 %v3747, %v3751
        %v3756 = vsel %vm3755, 1, 0
        %v3757 = vadd.s32 %v3747, %v3751
        %v3758 = vadd.s32 %v3750, %v3756
        %vm3759 = vc.u32 %v3757, %v3753
        %v3760 = vsel %vm3759, 1, 0
        %v3761 = vadd.s32 %v3757, %v3753
        %v3762 = vadd.s32 %v3758, %v3760
        %v3763 = vadd.s32 %v3762, %v3752
        %v3764 = vadd.s32 %v3763, %v3754
        %v3765 = vmul.u32 %v3720, %v3711
        %v3766 = vadd.s32 %v3742, %v3761
        %vm3767 = vc.u32 %v3742, %v3761
        %v3768 = vadd.s32 %v3764, 1
        %v3769 = vsel %vm3767, %v3768, %v3764
        %v3770 = vadd.s32 %v3765, %v3769
        %v3771 = vadd.s32 %v3770, 536870912
        %v3772 = vshrl.u32 %v3771, 30
        %v3773 = vshll.u32 %v3772, 30
        %v3774 = vsub.s32 %v3770, %v3773
        %vm3775 = vcmp.lt.s32.totalorder %v3774, 0
        %v3776 = vsub.s32 0, %v3774
        %v3777 = vsel %vm3775, %v3776, %v3774
        %v3778 = vclz %v3777
        %v3779 = vsub.s32 %v3778, 2
        %vm3780 = vcmp.gt.s32.totalorder 0, %v3779
        %v3781 = vsel %vm3780, 0, %v3779
        %v3782 = vsub.s32 32, %v3781
        %v3783 = vshll.u32 %v3774, %v3781
        %v3784 = vshrl.u32 %v3766, %v3782
        %v3785 = vor.u32 %v3783, %v3784
        %v3786 = vsub.s32 4294967266, %v3781
        %v3787 = vadd.s32 %v3786, 127
        %v3788 = vshll.u32 %v3787, 23
        %v3789 = vor.u32 4788187, %v3788
        %v3790 = vand.u32 2147483647, %v3789
        %v3792 = vcvt.s32.f32 %v3785
        %v3793 = vmul.f32 %v3792, %v3790
        %v3794 = vxor.u32 %v3793, 2147483648
        %v3795 = vsel %vm3674, %v3794, %v3793
        %v3796 = vsub.s32 4, %v3772
        %v3797 = vsel %vm3674, %v3796, %v3772
        %v3798 = vsel %vm3673, %v714, %v3795
        %v3799 = vsel %vm3673, 0, %v3797
        %v3800 = vmul.f32 %v3798, %v3798
        %v3801 = vmul.f32 %v3800, -0.001358992
        %v3802 = vadd.f32 %v3801, 0.041655596
        %v3803 = vmul.f32 %v3800, %v3802
        %v3804 = vadd.f32 %v3803, -0.4999988
        %v3805 = vmul.f32 %v3800, %v3804
        %v3806 = vadd.f32 1.0, %v3805
        %v3807 = vmul.f32 %v3798, %v3798
        %v3808 = vmul.f32 %v3807, -0.00019511016
        %v3809 = vadd.f32 %v3808, 0.008332121
        %v3810 = vmul.f32 %v3807, %v3809
        %v3811 = vadd.f32 %v3810, -0.16666654
        %v3812 = vmul.f32 %v3807, %v3811
        %v3813 = vadd.f32 %v3812, 1.0
        %v3814 = vmul.f32 %v3813, %v3798
        %vm3815 = vweird.f32 %v714
        %v3816 = vadd.s32 %v3799, 3
        %v3817 = vand.u32 %v3816, 3
        %vm3818 = vcmp.lt.s32.totalorder %v3817, 2
        %vm3819 = vcmp.eq.s32.totalorder %v3817, 0
        %v3820 = vxor.u32 %v3814, 2147483648
        %v3821 = vsel %vm3819, %v3806, %v3820
        %vm3822 = vcmp.eq.s32.totalorder %v3817, 2
        %v3823 = vxor.u32 %v3806, 2147483648
        %v3824 = vsel %vm3822, %v3823, %v3814
        %v3825 = vsel %vm3818, %v3821, %v3824
        %v3826 = vsel %vm3815, nan, %v3825
        %v3827 = vand.u32 2147483647, %v715
        %vm3828 = vcmp.le.f32.partialorder %v3827, 0.7853982
        %vm3829 = vcmp.lt.s32.totalorder %v715, 0
        %v3830 = vand.u32 %v715, 2139095040
        %v3831 = vshrl.u32 %v3830, 23
        %v3832 = vsub.s32 %v3831, 127
        %v3833 = vand.u32 2147483647, %v715
        %v3834 = vand.u32 %v3833, 8388607
        %v3835 = vor.u32 %v3834, 8388608
        %v3836 = vsub.s32 0, %v3835
        %v3837 = vadd.s32 %v3832, 1
        %vm3838 = vcmp.gt.s32.totalorder %v3837, 0
        %v3839 = vsel %vm3838, %v3837, 0
        %v3840 = vshrl.u32 %v3839, 5
        %v3841 = vand.u32 %v3839, 31
        %v3842 = vsub.s32 32, %v3841
        %v3843 = vshrl.u32 683565275, %v3842
        %v3844 = vshll.u32 683565275, %v3841
        %v3845 = vshrl.u32 2475754826, %v3842
        %v3846 = vor.u32 %v3844, %v3845
        %v3847 = vshll.u32 2475754826, %v3841
        %v3848 = vshrl.u32 2131351028, %v3842
        %v3849 = vor.u32 %v3847, %v3848
        %v3850 = vshll.u32 2131351028, %v3841
        %v3851 = vshrl.u32 2102212464, %v3842
        %v3852 = vor.u32 %v3850, %v3851
        %v3853 = vshll.u32 2102212464, %v3841
        %v3854 = vshrl.u32 920167782, %v3842
        %v3855 = vor.u32 %v3853, %v3854
        %v3856 = vshll.u32 920167782, %v3841
        %v3857 = vshrl.u32 1326507024, %v3842
        %v3858 = vor.u32 %v3856, %v3857
        %vm3859 = vcmp.lt.s32.totalorder %v3840, 1
        %vm3860 = vcmp.lt.s32.totalorder %v3840, 2
        %vm3861 = vcmp.lt.s32.totalorder %v3840, 3
        %vm3862 = vcmp.lt.s32.totalorder %v3840, 4
        %v3863 = vsel %vm3859, %v3843, %v3846
        %v3864 = vsel %vm3862, %v3852, 2102212464
        %v3865 = vsel %vm3861, %v3849, %v3864
        %v3866 = vsel %vm3860, %v3863, %v3865
        %v3867 = vsel %vm3859, %v3846, %v3849
        %v3868 = vsel %vm3862, %v3855, 920167782
        %v3869 = vsel %vm3861, %v3852, %v3868
        %v3870 = vsel %vm3860, %v3867, %v3869
        %v3871 = vsel %vm3859, %v3849, %v3852
        %v3872 = vsel %vm3862, %v3858, 1326507024
        %v3873 = vsel %vm3861, %v3855, %v3872
        %v3874 = vsel %vm3860, %v3871, %v3873
        %v3875 = vshll.u32 %v3835, 8
        %v3876 = vand.u32 %v3875, 65535
        %v3877 = vshrl.u32 %v3875, 16
        %v3878 = vand.u32 %v3874, 65535
        %v3879 = vshrl.u32 %v3874, 16
        %v3880 = vmul.u32 %v3876, %v3878
        %v3881 = vmul.u32 %v3876, %v3879
        %v3882 = vmul.u32 %v3877, %v3878
        %v3883 = vmul.u32 %v3877, %v3879
        %v3884 = vshll.u32 %v3881, 16
        %v3885 = vshrl.u32 %v3881, 16
        %v3886 = vshll.u32 %v3882, 16
        %v3887 = vshrl.u32 %v3882, 16
        %vm3888 = vc.u32 %v3880, %v3884
        %v3889 = vsel %vm3888, 1, 0
        %v3890 = vadd.s32 %v3880, %v3884
        %v3891 = vadd.s32 %v3883, %v3889
        %vm3892 = vc.u32 %v3890, %v3886
        %v3893 = vsel %vm3892, 1, 0
        %v3894 = vadd.s32 %v3890, %v3886
        %v3895 = vadd.s32 %v3891, %v3893
        %v3896 = vadd.s32 %v3895, %v3885
        %v3897 = vadd.s32 %v3896, %v3887
        %v3898 = vand.u32 %v3875, 65535
        %v3899 = vshrl.u32 %v3875, 16
        %v3900 = vand.u32 %v3870, 65535
        %v3901 = vshrl.u32 %v3870, 16
        %v3902 = vmul.u32 %v3898, %v3900
        %v3903 = vmul.u32 %v3898, %v3901
        %v3904 = vmul.u32 %v3899, %v3900
        %v3905 = vmul.u32 %v3899, %v3901
        %v3906 = vshll.u32 %v3903, 16
        %v3907 = vshrl.u32 %v3903, 16
        %v3908 = vshll.u32 %v3904, 16
        %v3909 = vshrl.u32 %v3904, 16
        %vm3910 = vc.u32 %v3902, %v3906
        %v3911 = vsel %vm3910, 1, 0
        %v3912 = vadd.s32 %v3902, %v3906
        %v3913 = vadd.s32 %v3905, %v3911
        %vm3914 = vc.u32 %v3912, %v3908
        %v3915 = vsel %vm3914, 1, 0
        %v3916 = vadd.s32 %v3912, %v3908
        %v3917 = vadd.s32 %v3913, %v3915
        %v3918 = vadd.s32 %v3917, %v3907
        %v3919 = vadd.s32 %v3918, %v3909
        %v3920 = vmul.u32 %v3875, %v3866
        %v3921 = vadd.s32 %v3897, %v3916
        %vm3922 = vc.u32 %v3897, %v3916
        %v3923 = vadd.s32 %v3919, 1
        %v3924 = vsel %vm3922, %v3923, %v3919
        %v3925 = vadd.s32 %v3920, %v3924
        %v3926 = vadd.s32 %v3925, 536870912
        %v3927 = vshrl.u32 %v3926, 30
        %v3928 = vshll.u32 %v3927, 30
        %v3929 = vsub.s32 %v3925, %v3928
        %vm3930 = vcmp.lt.s32.totalorder %v3929, 0
        %v3931 = vsub.s32 0, %v3929
        %v3932 = vsel %vm3930, %v3931, %v3929
        %v3933 = vclz %v3932
        %v3934 = vsub.s32 %v3933, 2
        %vm3935 = vcmp.gt.s32.totalorder 0, %v3934
        %v3936 = vsel %vm3935, 0, %v3934
        %v3937 = vsub.s32 32, %v3936
        %v3938 = vshll.u32 %v3929, %v3936
        %v3939 = vshrl.u32 %v3921, %v3937
        %v3940 = vor.u32 %v3938, %v3939
        %v3941 = vsub.s32 4294967266, %v3936
        %v3942 = vadd.s32 %v3941, 127
        %v3943 = vshll.u32 %v3942, 23
        %v3944 = vor.u32 4788187, %v3943
        %v3945 = vand.u32 2147483647, %v3944
        %v3947 = vcvt.s32.f32 %v3940
        %v3948 = vmul.f32 %v3947, %v3945
        %v3949 = vxor.u32 %v3948, 2147483648
        %v3950 = vsel %vm3829, %v3949, %v3948
        %v3951 = vsub.s32 4, %v3927
        %v3952 = vsel %vm3829, %v3951, %v3927
        %v3953 = vsel %vm3828, %v715, %v3950
        %v3954 = vsel %vm3828, 0, %v3952
        %v3955 = vmul.f32 %v3953, %v3953
        %v3956 = vmul.f32 %v3955, -0.001358992
        %v3957 = vadd.f32 %v3956, 0.041655596
        %v3958 = vmul.f32 %v3955, %v3957
        %v3959 = vadd.f32 %v3958, -0.4999988
        %v3960 = vmul.f32 %v3955, %v3959
        %v3961 = vadd.f32 1.0, %v3960
        %v3962 = vmul.f32 %v3953, %v3953
        %v3963 = vmul.f32 %v3962, -0.00019511016
        %v3964 = vadd.f32 %v3963, 0.008332121
        %v3965 = vmul.f32 %v3962, %v3964
        %v3966 = vadd.f32 %v3965, -0.16666654
        %v3967 = vmul.f32 %v3962, %v3966
        %v3968 = vadd.f32 %v3967, 1.0
        %v3969 = vmul.f32 %v3968, %v3953
        %vm3970 = vweird.f32 %v715
        %v3971 = vadd.s32 %v3954, 3
        %v3972 = vand.u32 %v3971, 3
        %vm3973 = vcmp.lt.s32.totalorder %v3972, 2
        %vm3974 = vcmp.eq.s32.totalorder %v3972, 0
        %v3975 = vxor.u32 %v3969, 2147483648
        %v3976 = vsel %vm3974, %v3961, %v3975
        %vm3977 = vcmp.eq.s32.totalorder %v3972, 2
        %v3978 = vxor.u32 %v3961, 2147483648
        %v3979 = vsel %vm3977, %v3978, %v3969
        %v3980 = vsel %vm3973, %v3976, %v3979
        %v3981 = vsel %vm3970, nan, %v3980
        %v3982 = vand.u32 2147483647, %v716
        %vm3983 = vcmp.le.f32.partialorder %v3982, 0.7853982
        %vm3984 = vcmp.lt.s32.totalorder %v716, 0
        %v3985 = vand.u32 %v716, 2139095040
        %v3986 = vshrl.u32 %v3985, 23
        %v3987 = vsub.s32 %v3986, 127
        %v3988 = vand.u32 2147483647, %v716
        %v3989 = vand.u32 %v3988, 8388607
        %v3990 = vor.u32 %v3989, 8388608
        %v3991 = vsub.s32 0, %v3990
        %v3992 = vadd.s32 %v3987, 1
        %vm3993 = vcmp.gt.s32.totalorder %v3992, 0
        %v3994 = vsel %vm3993, %v3992, 0
        %v3995 = vshrl.u32 %v3994, 5
        %v3996 = vand.u32 %v3994, 31
        %v3997 = vsub.s32 32, %v3996
        %v3998 = vshrl.u32 683565275, %v3997
        %v3999 = vshll.u32 683565275, %v3996
        %v4000 = vshrl.u32 2475754826, %v3997
        %v4001 = vor.u32 %v3999, %v4000
        %v4002 = vshll.u32 2475754826, %v3996
        %v4003 = vshrl.u32 2131351028, %v3997
        %v4004 = vor.u32 %v4002, %v4003
        %v4005 = vshll.u32 2131351028, %v3996
        %v4006 = vshrl.u32 2102212464, %v3997
        %v4007 = vor.u32 %v4005, %v4006
        %v4008 = vshll.u32 2102212464, %v3996
        %v4009 = vshrl.u32 920167782, %v3997
        %v4010 = vor.u32 %v4008, %v4009
        %v4011 = vshll.u32 920167782, %v3996
        %v4012 = vshrl.u32 1326507024, %v3997
        %v4013 = vor.u32 %v4011, %v4012
        %vm4014 = vcmp.lt.s32.totalorder %v3995, 1
        %vm4015 = vcmp.lt.s32.totalorder %v3995, 2
        %vm4016 = vcmp.lt.s32.totalorder %v3995, 3
        %vm4017 = vcmp.lt.s32.totalorder %v3995, 4
        %v4018 = vsel %vm4014, %v3998, %v4001
        %v4019 = vsel %vm4017, %v4007, 2102212464
        %v4020 = vsel %vm4016, %v4004, %v4019
        %v4021 = vsel %vm4015, %v4018, %v4020
        %v4022 = vsel %vm4014, %v4001, %v4004
        %v4023 = vsel %vm4017, %v4010, 920167782
        %v4024 = vsel %vm4016, %v4007, %v4023
        %v4025 = vsel %vm4015, %v4022, %v4024
        %v4026 = vsel %vm4014, %v4004, %v4007
        %v4027 = vsel %vm4017, %v4013, 1326507024
        %v4028 = vsel %vm4016, %v4010, %v4027
        %v4029 = vsel %vm4015, %v4026, %v4028
        %v4030 = vshll.u32 %v3990, 8
        %v4031 = vand.u32 %v4030, 65535
        %v4032 = vshrl.u32 %v4030, 16
        %v4033 = vand.u32 %v4029, 65535
        %v4034 = vshrl.u32 %v4029, 16
        %v4035 = vmul.u32 %v4031, %v4033
        %v4036 = vmul.u32 %v4031, %v4034
        %v4037 = vmul.u32 %v4032, %v4033
        %v4038 = vmul.u32 %v4032, %v4034
        %v4039 = vshll.u32 %v4036, 16
        %v4040 = vshrl.u32 %v4036, 16
        %v4041 = vshll.u32 %v4037, 16
        %v4042 = vshrl.u32 %v4037, 16
        %vm4043 = vc.u32 %v4035, %v4039
        %v4044 = vsel %vm4043, 1, 0
        %v4045 = vadd.s32 %v4035, %v4039
        %v4046 = vadd.s32 %v4038, %v4044
        %vm4047 = vc.u32 %v4045, %v4041
        %v4048 = vsel %vm4047, 1, 0
        %v4049 = vadd.s32 %v4045, %v4041
        %v4050 = vadd.s32 %v4046, %v4048
        %v4051 = vadd.s32 %v4050, %v4040
        %v4052 = vadd.s32 %v4051, %v4042
        %v4053 = vand.u32 %v4030, 65535
        %v4054 = vshrl.u32 %v4030, 16
        %v4055 = vand.u32 %v4025, 65535
        %v4056 = vshrl.u32 %v4025, 16
        %v4057 = vmul.u32 %v4053, %v4055
        %v4058 = vmul.u32 %v4053, %v4056
        %v4059 = vmul.u32 %v4054, %v4055
        %v4060 = vmul.u32 %v4054, %v4056
        %v4061 = vshll.u32 %v4058, 16
        %v4062 = vshrl.u32 %v4058, 16
        %v4063 = vshll.u32 %v4059, 16
        %v4064 = vshrl.u32 %v4059, 16
        %vm4065 = vc.u32 %v4057, %v4061
        %v4066 = vsel %vm4065, 1, 0
        %v4067 = vadd.s32 %v4057, %v4061
        %v4068 = vadd.s32 %v4060, %v4066
        %vm4069 = vc.u32 %v4067, %v4063
        %v4070 = vsel %vm4069, 1, 0
        %v4071 = vadd.s32 %v4067, %v4063
        %v4072 = vadd.s32 %v4068, %v4070
        %v4073 = vadd.s32 %v4072, %v4062
        %v4074 = vadd.s32 %v4073, %v4064
        %v4075 = vmul.u32 %v4030, %v4021
        %v4076 = vadd.s32 %v4052, %v4071
        %vm4077 = vc.u32 %v4052, %v4071
        %v4078 = vadd.s32 %v4074, 1
        %v4079 = vsel %vm4077, %v4078, %v4074
        %v4080 = vadd.s32 %v4075, %v4079
        %v4081 = vadd.s32 %v4080, 536870912
        %v4082 = vshrl.u32 %v4081, 30
        %v4083 = vshll.u32 %v4082, 30
        %v4084 = vsub.s32 %v4080, %v4083
        %vm4085 = vcmp.lt.s32.totalorder %v4084, 0
        %v4086 = vsub.s32 0, %v4084
        %v4087 = vsel %vm4085, %v4086, %v4084
        %v4088 = vclz %v4087
        %v4089 = vsub.s32 %v4088, 2
        %vm4090 = vcmp.gt.s32.totalorder 0, %v4089
        %v4091 = vsel %vm4090, 0, %v4089
        %v4092 = vsub.s32 32, %v4091
        %v4093 = vshll.u32 %v4084, %v4091
        %v4094 = vshrl.u32 %v4076, %v4092
        %v4095 = vor.u32 %v4093, %v4094
        %v4096 = vsub.s32 4294967266, %v4091
        %v4097 = vadd.s32 %v4096, 127
        %v4098 = vshll.u32 %v4097, 23
        %v4099 = vor.u32 4788187, %v4098
        %v4100 = vand.u32 2147483647, %v4099
        %v4102 = vcvt.s32.f32 %v4095
        %v4103 = vmul.f32 %v4102, %v4100
        %v4104 = vxor.u32 %v4103, 2147483648
        %v4105 = vsel %vm3984, %v4104, %v4103
        %v4106 = vsub.s32 4, %v4082
        %v4107 = vsel %vm3984, %v4106, %v4082
        %v4108 = vsel %vm3983, %v716, %v4105
        %v4109 = vsel %vm3983, 0, %v4107
        %v4110 = vmul.f32 %v4108, %v4108
        %v4111 = vmul.f32 %v4110, -0.001358992
        %v4112 = vadd.f32 %v4111, 0.041655596
        %v4113 = vmul.f32 %v4110, %v4112
        %v4114 = vadd.f32 %v4113, -0.4999988
        %v4115 = vmul.f32 %v4110, %v4114
        %v4116 = vadd.f32 1.0, %v4115
        %v4117 = vmul.f32 %v4108, %v4108
        %v4118 = vmul.f32 %v4117, -0.00019511016
        %v4119 = vadd.f32 %v4118, 0.008332121
        %v4120 = vmul.f32 %v4117, %v4119
        %v4121 = vadd.f32 %v4120, -0.16666654
        %v4122 = vmul.f32 %v4117, %v4121
        %v4123 = vadd.f32 %v4122, 1.0
        %v4124 = vmul.f32 %v4123, %v4108
        %vm4125 = vweird.f32 %v716
        %v4126 = vadd.s32 %v4109, 3
        %v4127 = vand.u32 %v4126, 3
        %vm4128 = vcmp.lt.s32.totalorder %v4127, 2
        %vm4129 = vcmp.eq.s32.totalorder %v4127, 0
        %v4130 = vxor.u32 %v4124, 2147483648
        %v4131 = vsel %vm4129, %v4116, %v4130
        %vm4132 = vcmp.eq.s32.totalorder %v4127, 2
        %v4133 = vxor.u32 %v4116, 2147483648
        %v4134 = vsel %vm4132, %v4133, %v4124
        %v4135 = vsel %vm4128, %v4131, %v4134
        %v4136 = vsel %vm4125, nan, %v4135
        %v4137 = vand.u32 2147483647, %v717
        %vm4138 = vcmp.le.f32.partialorder %v4137, 0.7853982
        %vm4139 = vcmp.lt.s32.totalorder %v717, 0
        %v4140 = vand.u32 %v717, 2139095040
        %v4141 = vshrl.u32 %v4140, 23
        %v4142 = vsub.s32 %v4141, 127
        %v4143 = vand.u32 2147483647, %v717
        %v4144 = vand.u32 %v4143, 8388607
        %v4145 = vor.u32 %v4144, 8388608
        %v4146 = vsub.s32 0, %v4145
        %v4147 = vadd.s32 %v4142, 1
        %vm4148 = vcmp.gt.s32.totalorder %v4147, 0
        %v4149 = vsel %vm4148, %v4147, 0
        %v4150 = vshrl.u32 %v4149, 5
        %v4151 = vand.u32 %v4149, 31
        %v4152 = vsub.s32 32, %v4151
        %v4153 = vshrl.u32 683565275, %v4152
        %v4154 = vshll.u32 683565275, %v4151
        %v4155 = vshrl.u32 2475754826, %v4152
        %v4156 = vor.u32 %v4154, %v4155
        %v4157 = vshll.u32 2475754826, %v4151
        %v4158 = vshrl.u32 2131351028, %v4152
        %v4159 = vor.u32 %v4157, %v4158
        %v4160 = vshll.u32 2131351028, %v4151
        %v4161 = vshrl.u32 2102212464, %v4152
        %v4162 = vor.u32 %v4160, %v4161
        %v4163 = vshll.u32 2102212464, %v4151
        %v4164 = vshrl.u32 920167782, %v4152
        %v4165 = vor.u32 %v4163, %v4164
        %v4166 = vshll.u32 920167782, %v4151
        %v4167 = vshrl.u32 1326507024, %v4152
        %v4168 = vor.u32 %v4166, %v4167
        %vm4169 = vcmp.lt.s32.totalorder %v4150, 1
        %vm4170 = vcmp.lt.s32.totalorder %v4150, 2
        %vm4171 = vcmp.lt.s32.totalorder %v4150, 3
        %vm4172 = vcmp.lt.s32.totalorder %v4150, 4
        %v4173 = vsel %vm4169, %v4153, %v4156
        %v4174 = vsel %vm4172, %v4162, 2102212464
        %v4175 = vsel %vm4171, %v4159, %v4174
        %v4176 = vsel %vm4170, %v4173, %v4175
        %v4177 = vsel %vm4169, %v4156, %v4159
        %v4178 = vsel %vm4172, %v4165, 920167782
        %v4179 = vsel %vm4171, %v4162, %v4178
        %v4180 = vsel %vm4170, %v4177, %v4179
        %v4181 = vsel %vm4169, %v4159, %v4162
        %v4182 = vsel %vm4172, %v4168, 1326507024
        %v4183 = vsel %vm4171, %v4165, %v4182
        %v4184 = vsel %vm4170, %v4181, %v4183
        %v4185 = vshll.u32 %v4145, 8
        %v4186 = vand.u32 %v4185, 65535
        %v4187 = vshrl.u32 %v4185, 16
        %v4188 = vand.u32 %v4184, 65535
        %v4189 = vshrl.u32 %v4184, 16
        %v4190 = vmul.u32 %v4186, %v4188
        %v4191 = vmul.u32 %v4186, %v4189
        %v4192 = vmul.u32 %v4187, %v4188
        %v4193 = vmul.u32 %v4187, %v4189
        %v4194 = vshll.u32 %v4191, 16
        %v4195 = vshrl.u32 %v4191, 16
        %v4196 = vshll.u32 %v4192, 16
        %v4197 = vshrl.u32 %v4192, 16
        %vm4198 = vc.u32 %v4190, %v4194
        %v4199 = vsel %vm4198, 1, 0
        %v4200 = vadd.s32 %v4190, %v4194
        %v4201 = vadd.s32 %v4193, %v4199
        %vm4202 = vc.u32 %v4200, %v4196
        %v4203 = vsel %vm4202, 1, 0
        %v4204 = vadd.s32 %v4200, %v4196
        %v4205 = vadd.s32 %v4201, %v4203
        %v4206 = vadd.s32 %v4205, %v4195
        %v4207 = vadd.s32 %v4206, %v4197
        %v4208 = vand.u32 %v4185, 65535
        %v4209 = vshrl.u32 %v4185, 16
        %v4210 = vand.u32 %v4180, 65535
        %v4211 = vshrl.u32 %v4180, 16
        %v4212 = vmul.u32 %v4208, %v4210
        %v4213 = vmul.u32 %v4208, %v4211
        %v4214 = vmul.u32 %v4209, %v4210
        %v4215 = vmul.u32 %v4209, %v4211
        %v4216 = vshll.u32 %v4213, 16
        %v4217 = vshrl.u32 %v4213, 16
        %v4218 = vshll.u32 %v4214, 16
        %v4219 = vshrl.u32 %v4214, 16
        %vm4220 = vc.u32 %v4212, %v4216
        %v4221 = vsel %vm4220, 1, 0
        %v4222 = vadd.s32 %v4212, %v4216
        %v4223 = vadd.s32 %v4215, %v4221
        %vm4224 = vc.u32 %v4222, %v4218
        %v4225 = vsel %vm4224, 1, 0
        %v4226 = vadd.s32 %v4222, %v4218
        %v4227 = vadd.s32 %v4223, %v4225
        %v4228 = vadd.s32 %v4227, %v4217
        %v4229 = vadd.s32 %v4228, %v4219
        %v4230 = vmul.u32 %v4185, %v4176
        %v4231 = vadd.s32 %v4207, %v4226
        %vm4232 = vc.u32 %v4207, %v4226
        %v4233 = vadd.s32 %v4229, 1
        %v4234 = vsel %vm4232, %v4233, %v4229
        %v4235 = vadd.s32 %v4230, %v4234
        %v4236 = vadd.s32 %v4235, 536870912
        %v4237 = vshrl.u32 %v4236, 30
        %v4238 = vshll.u32 %v4237, 30
        %v4239 = vsub.s32 %v4235, %v4238
        %vm4240 = vcmp.lt.s32.totalorder %v4239, 0
        %v4241 = vsub.s32 0, %v4239
        %v4242 = vsel %vm4240, %v4241, %v4239
        %v4243 = vclz %v4242
        %v4244 = vsub.s32 %v4243, 2
        %vm4245 = vcmp.gt.s32.totalorder 0, %v4244
        %v4246 = vsel %vm4245, 0, %v4244
        %v4247 = vsub.s32 32, %v4246
        %v4248 = vshll.u32 %v4239, %v4246
        %v4249 = vshrl.u32 %v4231, %v4247
        %v4250 = vor.u32 %v4248, %v4249
        %v4251 = vsub.s32 4294967266, %v4246
        %v4252 = vadd.s32 %v4251, 127
        %v4253 = vshll.u32 %v4252, 23
        %v4254 = vor.u32 4788187, %v4253
        %v4255 = vand.u32 2147483647, %v4254
        %v4257 = vcvt.s32.f32 %v4250
        %v4258 = vmul.f32 %v4257, %v4255
        %v4259 = vxor.u32 %v4258, 2147483648
        %v4260 = vsel %vm4139, %v4259, %v4258
        %v4261 = vsub.s32 4, %v4237
        %v4262 = vsel %vm4139, %v4261, %v4237
        %v4263 = vsel %vm4138, %v717, %v4260
        %v4264 = vsel %vm4138, 0, %v4262
        %v4265 = vmul.f32 %v4263, %v4263
        %v4266 = vmul.f32 %v4265, -0.001358992
        %v4267 = vadd.f32 %v4266, 0.041655596
        %v4268 = vmul.f32 %v4265, %v4267
        %v4269 = vadd.f32 %v4268, -0.4999988
        %v4270 = vmul.f32 %v4265, %v4269
        %v4271 = vadd.f32 1.0, %v4270
        %v4272 = vmul.f32 %v4263, %v4263
        %v4273 = vmul.f32 %v4272, -0.00019511016
        %v4274 = vadd.f32 %v4273, 0.008332121
        %v4275 = vmul.f32 %v4272, %v4274
        %v4276 = vadd.f32 %v4275, -0.16666654
        %v4277 = vmul.f32 %v4272, %v4276
        %v4278 = vadd.f32 %v4277, 1.0
        %v4279 = vmul.f32 %v4278, %v4263
        %vm4280 = vweird.f32 %v717
        %v4281 = vadd.s32 %v4264, 3
        %v4282 = vand.u32 %v4281, 3
        %vm4283 = vcmp.lt.s32.totalorder %v4282, 2
        %vm4284 = vcmp.eq.s32.totalorder %v4282, 0
        %v4285 = vxor.u32 %v4279, 2147483648
        %v4286 = vsel %vm4284, %v4271, %v4285
        %vm4287 = vcmp.eq.s32.totalorder %v4282, 2
        %v4288 = vxor.u32 %v4271, 2147483648
        %v4289 = vsel %vm4287, %v4288, %v4279
        %v4290 = vsel %vm4283, %v4286, %v4289
        %v4291 = vsel %vm4280, nan, %v4290
        %v4292 = vand.u32 2147483647, %v718
        %vm4293 = vcmp.le.f32.partialorder %v4292, 0.7853982
        %vm4294 = vcmp.lt.s32.totalorder %v718, 0
        %v4295 = vand.u32 %v718, 2139095040
        %v4296 = vshrl.u32 %v4295, 23
        %v4297 = vsub.s32 %v4296, 127
        %v4298 = vand.u32 2147483647, %v718
        %v4299 = vand.u32 %v4298, 8388607
        %v4300 = vor.u32 %v4299, 8388608
        %v4301 = vsub.s32 0, %v4300
        %v4302 = vadd.s32 %v4297, 1
        %vm4303 = vcmp.gt.s32.totalorder %v4302, 0
        %v4304 = vsel %vm4303, %v4302, 0
        %v4305 = vshrl.u32 %v4304, 5
        %v4306 = vand.u32 %v4304, 31
        %v4307 = vsub.s32 32, %v4306
        %v4308 = vshrl.u32 683565275, %v4307
        %v4309 = vshll.u32 683565275, %v4306
        %v4310 = vshrl.u32 2475754826, %v4307
        %v4311 = vor.u32 %v4309, %v4310
        %v4312 = vshll.u32 2475754826, %v4306
        %v4313 = vshrl.u32 2131351028, %v4307
        %v4314 = vor.u32 %v4312, %v4313
        %v4315 = vshll.u32 2131351028, %v4306
        %v4316 = vshrl.u32 2102212464, %v4307
        %v4317 = vor.u32 %v4315, %v4316
        %v4318 = vshll.u32 2102212464, %v4306
        %v4319 = vshrl.u32 920167782, %v4307
        %v4320 = vor.u32 %v4318, %v4319
        %v4321 = vshll.u32 920167782, %v4306
        %v4322 = vshrl.u32 1326507024, %v4307
        %v4323 = vor.u32 %v4321, %v4322
        %vm4324 = vcmp.lt.s32.totalorder %v4305, 1
        %vm4325 = vcmp.lt.s32.totalorder %v4305, 2
        %vm4326 = vcmp.lt.s32.totalorder %v4305, 3
        %vm4327 = vcmp.lt.s32.totalorder %v4305, 4
        %v4328 = vsel %vm4324, %v4308, %v4311
        %v4329 = vsel %vm4327, %v4317, 2102212464
        %v4330 = vsel %vm4326, %v4314, %v4329
        %v4331 = vsel %vm4325, %v4328, %v4330
        %v4332 = vsel %vm4324, %v4311, %v4314
        %v4333 = vsel %vm4327, %v4320, 920167782
        %v4334 = vsel %vm4326, %v4317, %v4333
        %v4335 = vsel %vm4325, %v4332, %v4334
        %v4336 = vsel %vm4324, %v4314, %v4317
        %v4337 = vsel %vm4327, %v4323, 1326507024
        %v4338 = vsel %vm4326, %v4320, %v4337
        %v4339 = vsel %vm4325, %v4336, %v4338
        %v4340 = vshll.u32 %v4300, 8
        %v4341 = vand.u32 %v4340, 65535
        %v4342 = vshrl.u32 %v4340, 16
        %v4343 = vand.u32 %v4339, 65535
        %v4344 = vshrl.u32 %v4339, 16
        %v4345 = vmul.u32 %v4341, %v4343
        %v4346 = vmul.u32 %v4341, %v4344
        %v4347 = vmul.u32 %v4342, %v4343
        %v4348 = vmul.u32 %v4342, %v4344
        %v4349 = vshll.u32 %v4346, 16
        %v4350 = vshrl.u32 %v4346, 16
        %v4351 = vshll.u32 %v4347, 16
        %v4352 = vshrl.u32 %v4347, 16
        %vm4353 = vc.u32 %v4345, %v4349
        %v4354 = vsel %vm4353, 1, 0
        %v4355 = vadd.s32 %v4345, %v4349
        %v4356 = vadd.s32 %v4348, %v4354
        %vm4357 = vc.u32 %v4355, %v4351
        %v4358 = vsel %vm4357, 1, 0
        %v4359 = vadd.s32 %v4355, %v4351
        %v4360 = vadd.s32 %v4356, %v4358
        %v4361 = vadd.s32 %v4360, %v4350
        %v4362 = vadd.s32 %v4361, %v4352
        %v4363 = vand.u32 %v4340, 65535
        %v4364 = vshrl.u32 %v4340, 16
        %v4365 = vand.u32 %v4335, 65535
        %v4366 = vshrl.u32 %v4335, 16
        %v4367 = vmul.u32 %v4363, %v4365
        %v4368 = vmul.u32 %v4363, %v4366
        %v4369 = vmul.u32 %v4364, %v4365
        %v4370 = vmul.u32 %v4364, %v4366
        %v4371 = vshll.u32 %v4368, 16
        %v4372 = vshrl.u32 %v4368, 16
        %v4373 = vshll.u32 %v4369, 16
        %v4374 = vshrl.u32 %v4369, 16
        %vm4375 = vc.u32 %v4367, %v4371
        %v4376 = vsel %vm4375, 1, 0
        %v4377 = vadd.s32 %v4367, %v4371
        %v4378 = vadd.s32 %v4370, %v4376
        %vm4379 = vc.u32 %v4377, %v4373
        %v4380 = vsel %vm4379, 1, 0
        %v4381 = vadd.s32 %v4377, %v4373
        %v4382 = vadd.s32 %v4378, %v4380
        %v4383 = vadd.s32 %v4382, %v4372
        %v4384 = vadd.s32 %v4383, %v4374
        %v4385 = vmul.u32 %v4340, %v4331
        %v4386 = vadd.s32 %v4362, %v4381
        %vm4387 = vc.u32 %v4362, %v4381
        %v4388 = vadd.s32 %v4384, 1
        %v4389 = vsel %vm4387, %v4388, %v4384
        %v4390 = vadd.s32 %v4385, %v4389
        %v4391 = vadd.s32 %v4390, 536870912
        %v4392 = vshrl.u32 %v4391, 30
        %v4393 = vshll.u32 %v4392, 30
        %v4394 = vsub.s32 %v4390, %v4393
        %vm4395 = vcmp.lt.s32.totalorder %v4394, 0
        %v4396 = vsub.s32 0, %v4394
        %v4397 = vsel %vm4395, %v4396, %v4394
        %v4398 = vclz %v4397
        %v4399 = vsub.s32 %v4398, 2
        %vm4400 = vcmp.gt.s32.totalorder 0, %v4399
        %v4401 = vsel %vm4400, 0, %v4399
        %v4402 = vsub.s32 32, %v4401
        %v4403 = vshll.u32 %v4394, %v4401
        %v4404 = vshrl.u32 %v4386, %v4402
        %v4405 = vor.u32 %v4403, %v4404
        %v4406 = vsub.s32 4294967266, %v4401
        %v4407 = vadd.s32 %v4406, 127
        %v4408 = vshll.u32 %v4407, 23
        %v4409 = vor.u32 4788187, %v4408
        %v4410 = vand.u32 2147483647, %v4409
        %v4412 = vcvt.s32.f32 %v4405
        %v4413 = vmul.f32 %v4412, %v4410
        %v4414 = vxor.u32 %v4413, 2147483648
        %v4415 = vsel %vm4294, %v4414, %v4413
        %v4416 = vsub.s32 4, %v4392
        %v4417 = vsel %vm4294, %v4416, %v4392
        %v4418 = vsel %vm4293, %v718, %v4415
        %v4419 = vsel %vm4293, 0, %v4417
        %v4420 = vmul.f32 %v4418, %v4418
        %v4421 = vmul.f32 %v4420, -0.001358992
        %v4422 = vadd.f32 %v4421, 0.041655596
        %v4423 = vmul.f32 %v4420, %v4422
        %v4424 = vadd.f32 %v4423, -0.4999988
        %v4425 = vmul.f32 %v4420, %v4424
        %v4426 = vadd.f32 1.0, %v4425
        %v4427 = vmul.f32 %v4418, %v4418
        %v4428 = vmul.f32 %v4427, -0.00019511016
        %v4429 = vadd.f32 %v4428, 0.008332121
        %v4430 = vmul.f32 %v4427, %v4429
        %v4431 = vadd.f32 %v4430, -0.16666654
        %v4432 = vmul.f32 %v4427, %v4431
        %v4433 = vadd.f32 %v4432, 1.0
        %v4434 = vmul.f32 %v4433, %v4418
        %vm4435 = vweird.f32 %v718
        %v4436 = vadd.s32 %v4419, 3
        %v4437 = vand.u32 %v4436, 3
        %vm4438 = vcmp.lt.s32.totalorder %v4437, 2
        %vm4439 = vcmp.eq.s32.totalorder %v4437, 0
        %v4440 = vxor.u32 %v4434, 2147483648
        %v4441 = vsel %vm4439, %v4426, %v4440
        %vm4442 = vcmp.eq.s32.totalorder %v4437, 2
        %v4443 = vxor.u32 %v4426, 2147483648
        %v4444 = vsel %vm4442, %v4443, %v4434
        %v4445 = vsel %vm4438, %v4441, %v4444
        %v4446 = vsel %vm4435, nan, %v4445
        %v4447 = vand.u32 2147483647, %v719
        %vm4448 = vcmp.le.f32.partialorder %v4447, 0.7853982
        %vm4449 = vcmp.lt.s32.totalorder %v719, 0
        %v4450 = vand.u32 %v719, 2139095040
        %v4451 = vshrl.u32 %v4450, 23
        %v4452 = vsub.s32 %v4451, 127
        %v4453 = vand.u32 2147483647, %v719
        %v4454 = vand.u32 %v4453, 8388607
        %v4455 = vor.u32 %v4454, 8388608
        %v4456 = vsub.s32 0, %v4455
        %v4457 = vadd.s32 %v4452, 1
        %vm4458 = vcmp.gt.s32.totalorder %v4457, 0
        %v4459 = vsel %vm4458, %v4457, 0
        %v4460 = vshrl.u32 %v4459, 5
        %v4461 = vand.u32 %v4459, 31
        %v4462 = vsub.s32 32, %v4461
        %v4463 = vshrl.u32 683565275, %v4462
        %v4464 = vshll.u32 683565275, %v4461
        %v4465 = vshrl.u32 2475754826, %v4462
        %v4466 = vor.u32 %v4464, %v4465
        %v4467 = vshll.u32 2475754826, %v4461
        %v4468 = vshrl.u32 2131351028, %v4462
        %v4469 = vor.u32 %v4467, %v4468
        %v4470 = vshll.u32 2131351028, %v4461
        %v4471 = vshrl.u32 2102212464, %v4462
        %v4472 = vor.u32 %v4470, %v4471
        %v4473 = vshll.u32 2102212464, %v4461
        %v4474 = vshrl.u32 920167782, %v4462
        %v4475 = vor.u32 %v4473, %v4474
        %v4476 = vshll.u32 920167782, %v4461
        %v4477 = vshrl.u32 1326507024, %v4462
        %v4478 = vor.u32 %v4476, %v4477
        %vm4479 = vcmp.lt.s32.totalorder %v4460, 1
        %vm4480 = vcmp.lt.s32.totalorder %v4460, 2
        %vm4481 = vcmp.lt.s32.totalorder %v4460, 3
        %vm4482 = vcmp.lt.s32.totalorder %v4460, 4
        %v4483 = vsel %vm4479, %v4463, %v4466
        %v4484 = vsel %vm4482, %v4472, 2102212464
        %v4485 = vsel %vm4481, %v4469, %v4484
        %v4486 = vsel %vm4480, %v4483, %v4485
        %v4487 = vsel %vm4479, %v4466, %v4469
        %v4488 = vsel %vm4482, %v4475, 920167782
        %v4489 = vsel %vm4481, %v4472, %v4488
        %v4490 = vsel %vm4480, %v4487, %v4489
        %v4491 = vsel %vm4479, %v4469, %v4472
        %v4492 = vsel %vm4482, %v4478, 1326507024
        %v4493 = vsel %vm4481, %v4475, %v4492
        %v4494 = vsel %vm4480, %v4491, %v4493
        %v4495 = vshll.u32 %v4455, 8
        %v4496 = vand.u32 %v4495, 65535
        %v4497 = vshrl.u32 %v4495, 16
        %v4498 = vand.u32 %v4494, 65535
        %v4499 = vshrl.u32 %v4494, 16
        %v4500 = vmul.u32 %v4496, %v4498
        %v4501 = vmul.u32 %v4496, %v4499
        %v4502 = vmul.u32 %v4497, %v4498
        %v4503 = vmul.u32 %v4497, %v4499
        %v4504 = vshll.u32 %v4501, 16
        %v4505 = vshrl.u32 %v4501, 16
        %v4506 = vshll.u32 %v4502, 16
        %v4507 = vshrl.u32 %v4502, 16
        %vm4508 = vc.u32 %v4500, %v4504
        %v4509 = vsel %vm4508, 1, 0
        %v4510 = vadd.s32 %v4500, %v4504
        %v4511 = vadd.s32 %v4503, %v4509
        %vm4512 = vc.u32 %v4510, %v4506
        %v4513 = vsel %vm4512, 1, 0
        %v4514 = vadd.s32 %v4510, %v4506
        %v4515 = vadd.s32 %v4511, %v4513
        %v4516 = vadd.s32 %v4515, %v4505
        %v4517 = vadd.s32 %v4516, %v4507
        %v4518 = vand.u32 %v4495, 65535
        %v4519 = vshrl.u32 %v4495, 16
        %v4520 = vand.u32 %v4490, 65535
        %v4521 = vshrl.u32 %v4490, 16
        %v4522 = vmul.u32 %v4518, %v4520
        %v4523 = vmul.u32 %v4518, %v4521
        %v4524 = vmul.u32 %v4519, %v4520
        %v4525 = vmul.u32 %v4519, %v4521
        %v4526 = vshll.u32 %v4523, 16
        %v4527 = vshrl.u32 %v4523, 16
        %v4528 = vshll.u32 %v4524, 16
        %v4529 = vshrl.u32 %v4524, 16
        %vm4530 = vc.u32 %v4522, %v4526
        %v4531 = vsel %vm4530, 1, 0
        %v4532 = vadd.s32 %v4522, %v4526
        %v4533 = vadd.s32 %v4525, %v4531
        %vm4534 = vc.u32 %v4532, %v4528
        %v4535 = vsel %vm4534, 1, 0
        %v4536 = vadd.s32 %v4532, %v4528
        %v4537 = vadd.s32 %v4533, %v4535
        %v4538 = vadd.s32 %v4537, %v4527
        %v4539 = vadd.s32 %v4538, %v4529
        %v4540 = vmul.u32 %v4495, %v4486
        %v4541 = vadd.s32 %v4517, %v4536
        %vm4542 = vc.u32 %v4517, %v4536
        %v4543 = vadd.s32 %v4539, 1
        %v4544 = vsel %vm4542, %v4543, %v4539
        %v4545 = vadd.s32 %v4540, %v4544
        %v4546 = vadd.s32 %v4545, 536870912
        %v4547 = vshrl.u32 %v4546, 30
        %v4548 = vshll.u32 %v4547, 30
        %v4549 = vsub.s32 %v4545, %v4548
        %vm4550 = vcmp.lt.s32.totalorder %v4549, 0
        %v4551 = vsub.s32 0, %v4549
        %v4552 = vsel %vm4550, %v4551, %v4549
        %v4553 = vclz %v4552
        %v4554 = vsub.s32 %v4553, 2
        %vm4555 = vcmp.gt.s32.totalorder 0, %v4554
        %v4556 = vsel %vm4555, 0, %v4554
        %v4557 = vsub.s32 32, %v4556
        %v4558 = vshll.u32 %v4549, %v4556
        %v4559 = vshrl.u32 %v4541, %v4557
        %v4560 = vor.u32 %v4558, %v4559
        %v4561 = vsub.s32 4294967266, %v4556
        %v4562 = vadd.s32 %v4561, 127
        %v4563 = vshll.u32 %v4562, 23
        %v4564 = vor.u32 4788187, %v4563
        %v4565 = vand.u32 2147483647, %v4564
        %v4567 = vcvt.s32.f32 %v4560
        %v4568 = vmul.f32 %v4567, %v4565
        %v4569 = vxor.u32 %v4568, 2147483648
        %v4570 = vsel %vm4449, %v4569, %v4568
        %v4571 = vsub.s32 4, %v4547
        %v4572 = vsel %vm4449, %v4571, %v4547
        %v4573 = vsel %vm4448, %v719, %v4570
        %v4574 = vsel %vm4448, 0, %v4572
        %v4575 = vmul.f32 %v4573, %v4573
        %v4576 = vmul.f32 %v4575, -0.001358992
        %v4577 = vadd.f32 %v4576, 0.041655596
        %v4578 = vmul.f32 %v4575, %v4577
        %v4579 = vadd.f32 %v4578, -0.4999988
        %v4580 = vmul.f32 %v4575, %v4579
        %v4581 = vadd.f32 1.0, %v4580
        %v4582 = vmul.f32 %v4573, %v4573
        %v4583 = vmul.f32 %v4582, -0.00019511016
        %v4584 = vadd.f32 %v4583, 0.008332121
        %v4585 = vmul.f32 %v4582, %v4584
        %v4586 = vadd.f32 %v4585, -0.16666654
        %v4587 = vmul.f32 %v4582, %v4586
        %v4588 = vadd.f32 %v4587, 1.0
        %v4589 = vmul.f32 %v4588, %v4573
        %vm4590 = vweird.f32 %v719
        %v4591 = vadd.s32 %v4574, 3
        %v4592 = vand.u32 %v4591, 3
        %vm4593 = vcmp.lt.s32.totalorder %v4592, 2
        %vm4594 = vcmp.eq.s32.totalorder %v4592, 0
        %v4595 = vxor.u32 %v4589, 2147483648
        %v4596 = vsel %vm4594, %v4581, %v4595
        %vm4597 = vcmp.eq.s32.totalorder %v4592, 2
        %v4598 = vxor.u32 %v4581, 2147483648
        %v4599 = vsel %vm4597, %v4598, %v4589
        %v4600 = vsel %vm4593, %v4596, %v4599
        %v4601 = vsel %vm4590, nan, %v4600
        %v4602 = vand.u32 2147483647, %v720
        %vm4603 = vcmp.le.f32.partialorder %v4602, 0.7853982
        %vm4604 = vcmp.lt.s32.totalorder %v720, 0
        %v4605 = vand.u32 %v720, 2139095040
        %v4606 = vshrl.u32 %v4605, 23
        %v4607 = vsub.s32 %v4606, 127
        %v4608 = vand.u32 2147483647, %v720
        %v4609 = vand.u32 %v4608, 8388607
        %v4610 = vor.u32 %v4609, 8388608
        %v4611 = vsub.s32 0, %v4610
        %v4612 = vadd.s32 %v4607, 1
        %vm4613 = vcmp.gt.s32.totalorder %v4612, 0
        %v4614 = vsel %vm4613, %v4612, 0
        %v4615 = vshrl.u32 %v4614, 5
        %v4616 = vand.u32 %v4614, 31
        %v4617 = vsub.s32 32, %v4616
        %v4618 = vshrl.u32 683565275, %v4617
        %v4619 = vshll.u32 683565275, %v4616
        %v4620 = vshrl.u32 2475754826, %v4617
        %v4621 = vor.u32 %v4619, %v4620
        %v4622 = vshll.u32 2475754826, %v4616
        %v4623 = vshrl.u32 2131351028, %v4617
        %v4624 = vor.u32 %v4622, %v4623
        %v4625 = vshll.u32 2131351028, %v4616
        %v4626 = vshrl.u32 2102212464, %v4617
        %v4627 = vor.u32 %v4625, %v4626
        %v4628 = vshll.u32 2102212464, %v4616
        %v4629 = vshrl.u32 920167782, %v4617
        %v4630 = vor.u32 %v4628, %v4629
        %v4631 = vshll.u32 920167782, %v4616
        %v4632 = vshrl.u32 1326507024, %v4617
        %v4633 = vor.u32 %v4631, %v4632
        %vm4634 = vcmp.lt.s32.totalorder %v4615, 1
        %vm4635 = vcmp.lt.s32.totalorder %v4615, 2
        %vm4636 = vcmp.lt.s32.totalorder %v4615, 3
        %vm4637 = vcmp.lt.s32.totalorder %v4615, 4
        %v4638 = vsel %vm4634, %v4618, %v4621
        %v4639 = vsel %vm4637, %v4627, 2102212464
        %v4640 = vsel %vm4636, %v4624, %v4639
        %v4641 = vsel %vm4635, %v4638, %v4640
        %v4642 = vsel %vm4634, %v4621, %v4624
        %v4643 = vsel %vm4637, %v4630, 920167782
        %v4644 = vsel %vm4636, %v4627, %v4643
        %v4645 = vsel %vm4635, %v4642, %v4644
        %v4646 = vsel %vm4634, %v4624, %v4627
        %v4647 = vsel %vm4637, %v4633, 1326507024
        %v4648 = vsel %vm4636, %v4630, %v4647
        %v4649 = vsel %vm4635, %v4646, %v4648
        %v4650 = vshll.u32 %v4610, 8
        %v4651 = vand.u32 %v4650, 65535
        %v4652 = vshrl.u32 %v4650, 16
        %v4653 = vand.u32 %v4649, 65535
        %v4654 = vshrl.u32 %v4649, 16
        %v4655 = vmul.u32 %v4651, %v4653
        %v4656 = vmul.u32 %v4651, %v4654
        %v4657 = vmul.u32 %v4652, %v4653
        %v4658 = vmul.u32 %v4652, %v4654
        %v4659 = vshll.u32 %v4656, 16
        %v4660 = vshrl.u32 %v4656, 16
        %v4661 = vshll.u32 %v4657, 16
        %v4662 = vshrl.u32 %v4657, 16
        %vm4663 = vc.u32 %v4655, %v4659
        %v4664 = vsel %vm4663, 1, 0
        %v4665 = vadd.s32 %v4655, %v4659
        %v4666 = vadd.s32 %v4658, %v4664
        %vm4667 = vc.u32 %v4665, %v4661
        %v4668 = vsel %vm4667, 1, 0
        %v4669 = vadd.s32 %v4665, %v4661
        %v4670 = vadd.s32 %v4666, %v4668
        %v4671 = vadd.s32 %v4670, %v4660
        %v4672 = vadd.s32 %v4671, %v4662
        %v4673 = vand.u32 %v4650, 65535
        %v4674 = vshrl.u32 %v4650, 16
        %v4675 = vand.u32 %v4645, 65535
        %v4676 = vshrl.u32 %v4645, 16
        %v4677 = vmul.u32 %v4673, %v4675
        %v4678 = vmul.u32 %v4673, %v4676
        %v4679 = vmul.u32 %v4674, %v4675
        %v4680 = vmul.u32 %v4674, %v4676
        %v4681 = vshll.u32 %v4678, 16
        %v4682 = vshrl.u32 %v4678, 16
        %v4683 = vshll.u32 %v4679, 16
        %v4684 = vshrl.u32 %v4679, 16
        %vm4685 = vc.u32 %v4677, %v4681
        %v4686 = vsel %vm4685, 1, 0
        %v4687 = vadd.s32 %v4677, %v4681
        %v4688 = vadd.s32 %v4680, %v4686
        %vm4689 = vc.u32 %v4687, %v4683
        %v4690 = vsel %vm4689, 1, 0
        %v4691 = vadd.s32 %v4687, %v4683
        %v4692 = vadd.s32 %v4688, %v4690
        %v4693 = vadd.s32 %v4692, %v4682
        %v4694 = vadd.s32 %v4693, %v4684
        %v4695 = vmul.u32 %v4650, %v4641
        %v4696 = vadd.s32 %v4672, %v4691
        %vm4697 = vc.u32 %v4672, %v4691
        %v4698 = vadd.s32 %v4694, 1
        %v4699 = vsel %vm4697, %v4698, %v4694
        %v4700 = vadd.s32 %v4695, %v4699
        %v4701 = vadd.s32 %v4700, 536870912
        %v4702 = vshrl.u32 %v4701, 30
        %v4703 = vshll.u32 %v4702, 30
        %v4704 = vsub.s32 %v4700, %v4703
        %vm4705 = vcmp.lt.s32.totalorder %v4704, 0
        %v4706 = vsub.s32 0, %v4704
        %v4707 = vsel %vm4705, %v4706, %v4704
        %v4708 = vclz %v4707
        %v4709 = vsub.s32 %v4708, 2
        %vm4710 = vcmp.gt.s32.totalorder 0, %v4709
        %v4711 = vsel %vm4710, 0, %v4709
        %v4712 = vsub.s32 32, %v4711
        %v4713 = vshll.u32 %v4704, %v4711
        %v4714 = vshrl.u32 %v4696, %v4712
        %v4715 = vor.u32 %v4713, %v4714
        %v4716 = vsub.s32 4294967266, %v4711
        %v4717 = vadd.s32 %v4716, 127
        %v4718 = vshll.u32 %v4717, 23
        %v4719 = vor.u32 4788187, %v4718
        %v4720 = vand.u32 2147483647, %v4719
        %v4722 = vcvt.s32.f32 %v4715
        %v4723 = vmul.f32 %v4722, %v4720
        %v4724 = vxor.u32 %v4723, 2147483648
        %v4725 = vsel %vm4604, %v4724, %v4723
        %v4726 = vsub.s32 4, %v4702
        %v4727 = vsel %vm4604, %v4726, %v4702
        %v4728 = vsel %vm4603, %v720, %v4725
        %v4729 = vsel %vm4603, 0, %v4727
        %v4730 = vmul.f32 %v4728, %v4728
        %v4731 = vmul.f32 %v4730, -0.001358992
        %v4732 = vadd.f32 %v4731, 0.041655596
        %v4733 = vmul.f32 %v4730, %v4732
        %v4734 = vadd.f32 %v4733, -0.4999988
        %v4735 = vmul.f32 %v4730, %v4734
        %v4736 = vadd.f32 1.0, %v4735
        %v4737 = vmul.f32 %v4728, %v4728
        %v4738 = vmul.f32 %v4737, -0.00019511016
        %v4739 = vadd.f32 %v4738, 0.008332121
        %v4740 = vmul.f32 %v4737, %v4739
        %v4741 = vadd.f32 %v4740, -0.16666654
        %v4742 = vmul.f32 %v4737, %v4741
        %v4743 = vadd.f32 %v4742, 1.0
        %v4744 = vmul.f32 %v4743, %v4728
        %vm4745 = vweird.f32 %v720
        %v4746 = vadd.s32 %v4729, 3
        %v4747 = vand.u32 %v4746, 3
        %vm4748 = vcmp.lt.s32.totalorder %v4747, 2
        %vm4749 = vcmp.eq.s32.totalorder %v4747, 0
        %v4750 = vxor.u32 %v4744, 2147483648
        %v4751 = vsel %vm4749, %v4736, %v4750
        %vm4752 = vcmp.eq.s32.totalorder %v4747, 2
        %v4753 = vxor.u32 %v4736, 2147483648
        %v4754 = vsel %vm4752, %v4753, %v4744
        %v4755 = vsel %vm4748, %v4751, %v4754
        %v4756 = vsel %vm4745, nan, %v4755
        %v4757 = vand.u32 2147483647, %v721
        %vm4758 = vcmp.le.f32.partialorder %v4757, 0.7853982
        %vm4759 = vcmp.lt.s32.totalorder %v721, 0
        %v4760 = vand.u32 %v721, 2139095040
        %v4761 = vshrl.u32 %v4760, 23
        %v4762 = vsub.s32 %v4761, 127
        %v4763 = vand.u32 2147483647, %v721
        %v4764 = vand.u32 %v4763, 8388607
        %v4765 = vor.u32 %v4764, 8388608
        %v4766 = vsub.s32 0, %v4765
        %v4767 = vadd.s32 %v4762, 1
        %vm4768 = vcmp.gt.s32.totalorder %v4767, 0
        %v4769 = vsel %vm4768, %v4767, 0
        %v4770 = vshrl.u32 %v4769, 5
        %v4771 = vand.u32 %v4769, 31
        %v4772 = vsub.s32 32, %v4771
        %v4773 = vshrl.u32 683565275, %v4772
        %v4774 = vshll.u32 683565275, %v4771
        %v4775 = vshrl.u32 2475754826, %v4772
        %v4776 = vor.u32 %v4774, %v4775
        %v4777 = vshll.u32 2475754826, %v4771
        %v4778 = vshrl.u32 2131351028, %v4772
        %v4779 = vor.u32 %v4777, %v4778
        %v4780 = vshll.u32 2131351028, %v4771
        %v4781 = vshrl.u32 2102212464, %v4772
        %v4782 = vor.u32 %v4780, %v4781
        %v4783 = vshll.u32 2102212464, %v4771
        %v4784 = vshrl.u32 920167782, %v4772
        %v4785 = vor.u32 %v4783, %v4784
        %v4786 = vshll.u32 920167782, %v4771
        %v4787 = vshrl.u32 1326507024, %v4772
        %v4788 = vor.u32 %v4786, %v4787
        %vm4789 = vcmp.lt.s32.totalorder %v4770, 1
        %vm4790 = vcmp.lt.s32.totalorder %v4770, 2
        %vm4791 = vcmp.lt.s32.totalorder %v4770, 3
        %vm4792 = vcmp.lt.s32.totalorder %v4770, 4
        %v4793 = vsel %vm4789, %v4773, %v4776
        %v4794 = vsel %vm4792, %v4782, 2102212464
        %v4795 = vsel %vm4791, %v4779, %v4794
        %v4796 = vsel %vm4790, %v4793, %v4795
        %v4797 = vsel %vm4789, %v4776, %v4779
        %v4798 = vsel %vm4792, %v4785, 920167782
        %v4799 = vsel %vm4791, %v4782, %v4798
        %v4800 = vsel %vm4790, %v4797, %v4799
        %v4801 = vsel %vm4789, %v4779, %v4782
        %v4802 = vsel %vm4792, %v4788, 1326507024
        %v4803 = vsel %vm4791, %v4785, %v4802
        %v4804 = vsel %vm4790, %v4801, %v4803
        %v4805 = vshll.u32 %v4765, 8
        %v4806 = vand.u32 %v4805, 65535
        %v4807 = vshrl.u32 %v4805, 16
        %v4808 = vand.u32 %v4804, 65535
        %v4809 = vshrl.u32 %v4804, 16
        %v4810 = vmul.u32 %v4806, %v4808
        %v4811 = vmul.u32 %v4806, %v4809
        %v4812 = vmul.u32 %v4807, %v4808
        %v4813 = vmul.u32 %v4807, %v4809
        %v4814 = vshll.u32 %v4811, 16
        %v4815 = vshrl.u32 %v4811, 16
        %v4816 = vshll.u32 %v4812, 16
        %v4817 = vshrl.u32 %v4812, 16
        %vm4818 = vc.u32 %v4810, %v4814
        %v4819 = vsel %vm4818, 1, 0
        %v4820 = vadd.s32 %v4810, %v4814
        %v4821 = vadd.s32 %v4813, %v4819
        %vm4822 = vc.u32 %v4820, %v4816
        %v4823 = vsel %vm4822, 1, 0
        %v4824 = vadd.s32 %v4820, %v4816
        %v4825 = vadd.s32 %v4821, %v4823
        %v4826 = vadd.s32 %v4825, %v4815
        %v4827 = vadd.s32 %v4826, %v4817
        %v4828 = vand.u32 %v4805, 65535
        %v4829 = vshrl.u32 %v4805, 16
        %v4830 = vand.u32 %v4800, 65535
        %v4831 = vshrl.u32 %v4800, 16
        %v4832 = vmul.u32 %v4828, %v4830
        %v4833 = vmul.u32 %v4828, %v4831
        %v4834 = vmul.u32 %v4829, %v4830
        %v4835 = vmul.u32 %v4829, %v4831
        %v4836 = vshll.u32 %v4833, 16
        %v4837 = vshrl.u32 %v4833, 16
        %v4838 = vshll.u32 %v4834, 16
        %v4839 = vshrl.u32 %v4834, 16
        %vm4840 = vc.u32 %v4832, %v4836
        %v4841 = vsel %vm4840, 1, 0
        %v4842 = vadd.s32 %v4832, %v4836
        %v4843 = vadd.s32 %v4835, %v4841
        %vm4844 = vc.u32 %v4842, %v4838
        %v4845 = vsel %vm4844, 1, 0
        %v4846 = vadd.s32 %v4842, %v4838
        %v4847 = vadd.s32 %v4843, %v4845
        %v4848 = vadd.s32 %v4847, %v4837
        %v4849 = vadd.s32 %v4848, %v4839
        %v4850 = vmul.u32 %v4805, %v4796
        %v4851 = vadd.s32 %v4827, %v4846
        %vm4852 = vc.u32 %v4827, %v4846
        %v4853 = vadd.s32 %v4849, 1
        %v4854 = vsel %vm4852, %v4853, %v4849
        %v4855 = vadd.s32 %v4850, %v4854
        %v4856 = vadd.s32 %v4855, 536870912
        %v4857 = vshrl.u32 %v4856, 30
        %v4858 = vshll.u32 %v4857, 30
        %v4859 = vsub.s32 %v4855, %v4858
        %vm4860 = vcmp.lt.s32.totalorder %v4859, 0
        %v4861 = vsub.s32 0, %v4859
        %v4862 = vsel %vm4860, %v4861, %v4859
        %v4863 = vclz %v4862
        %v4864 = vsub.s32 %v4863, 2
        %vm4865 = vcmp.gt.s32.totalorder 0, %v4864
        %v4866 = vsel %vm4865, 0, %v4864
        %v4867 = vsub.s32 32, %v4866
        %v4868 = vshll.u32 %v4859, %v4866
        %v4869 = vshrl.u32 %v4851, %v4867
        %v4870 = vor.u32 %v4868, %v4869
        %v4871 = vsub.s32 4294967266, %v4866
        %v4872 = vadd.s32 %v4871, 127
        %v4873 = vshll.u32 %v4872, 23
        %v4874 = vor.u32 4788187, %v4873
        %v4875 = vand.u32 2147483647, %v4874
        %v4877 = vcvt.s32.f32 %v4870
        %v4878 = vmul.f32 %v4877, %v4875
        %v4879 = vxor.u32 %v4878, 2147483648
        %v4880 = vsel %vm4759, %v4879, %v4878
        %v4881 = vsub.s32 4, %v4857
        %v4882 = vsel %vm4759, %v4881, %v4857
        %v4883 = vsel %vm4758, %v721, %v4880
        %v4884 = vsel %vm4758, 0, %v4882
        %v4885 = vmul.f32 %v4883, %v4883
        %v4886 = vmul.f32 %v4885, -0.001358992
        %v4887 = vadd.f32 %v4886, 0.041655596
        %v4888 = vmul.f32 %v4885, %v4887
        %v4889 = vadd.f32 %v4888, -0.4999988
        %v4890 = vmul.f32 %v4885, %v4889
        %v4891 = vadd.f32 1.0, %v4890
        %v4892 = vmul.f32 %v4883, %v4883
        %v4893 = vmul.f32 %v4892, -0.00019511016
        %v4894 = vadd.f32 %v4893, 0.008332121
        %v4895 = vmul.f32 %v4892, %v4894
        %v4896 = vadd.f32 %v4895, -0.16666654
        %v4897 = vmul.f32 %v4892, %v4896
        %v4898 = vadd.f32 %v4897, 1.0
        %v4899 = vmul.f32 %v4898, %v4883
        %vm4900 = vweird.f32 %v721
        %v4901 = vadd.s32 %v4884, 3
        %v4902 = vand.u32 %v4901, 3
        %vm4903 = vcmp.lt.s32.totalorder %v4902, 2
        %vm4904 = vcmp.eq.s32.totalorder %v4902, 0
        %v4905 = vxor.u32 %v4899, 2147483648
        %v4906 = vsel %vm4904, %v4891, %v4905
        %vm4907 = vcmp.eq.s32.totalorder %v4902, 2
        %v4908 = vxor.u32 %v4891, 2147483648
        %v4909 = vsel %vm4907, %v4908, %v4899
        %v4910 = vsel %vm4903, %v4906, %v4909
        %v4911 = vsel %vm4900, nan, %v4910
        %v4912 = vand.u32 2147483647, %v722
        %vm4913 = vcmp.le.f32.partialorder %v4912, 0.7853982
        %vm4914 = vcmp.lt.s32.totalorder %v722, 0
        %v4915 = vand.u32 %v722, 2139095040
        %v4916 = vshrl.u32 %v4915, 23
        %v4917 = vsub.s32 %v4916, 127
        %v4918 = vand.u32 2147483647, %v722
        %v4919 = vand.u32 %v4918, 8388607
        %v4920 = vor.u32 %v4919, 8388608
        %v4921 = vsub.s32 0, %v4920
        %v4922 = vadd.s32 %v4917, 1
        %vm4923 = vcmp.gt.s32.totalorder %v4922, 0
        %v4924 = vsel %vm4923, %v4922, 0
        %v4925 = vshrl.u32 %v4924, 5
        %v4926 = vand.u32 %v4924, 31
        %v4927 = vsub.s32 32, %v4926
        %v4928 = vshrl.u32 683565275, %v4927
        %v4929 = vshll.u32 683565275, %v4926
        %v4930 = vshrl.u32 2475754826, %v4927
        %v4931 = vor.u32 %v4929, %v4930
        %v4932 = vshll.u32 2475754826, %v4926
        %v4933 = vshrl.u32 2131351028, %v4927
        %v4934 = vor.u32 %v4932, %v4933
        %v4935 = vshll.u32 2131351028, %v4926
        %v4936 = vshrl.u32 2102212464, %v4927
        %v4937 = vor.u32 %v4935, %v4936
        %v4938 = vshll.u32 2102212464, %v4926
        %v4939 = vshrl.u32 920167782, %v4927
        %v4940 = vor.u32 %v4938, %v4939
        %v4941 = vshll.u32 920167782, %v4926
        %v4942 = vshrl.u32 1326507024, %v4927
        %v4943 = vor.u32 %v4941, %v4942
        %vm4944 = vcmp.lt.s32.totalorder %v4925, 1
        %vm4945 = vcmp.lt.s32.totalorder %v4925, 2
        %vm4946 = vcmp.lt.s32.totalorder %v4925, 3
        %vm4947 = vcmp.lt.s32.totalorder %v4925, 4
        %v4948 = vsel %vm4944, %v4928, %v4931
        %v4949 = vsel %vm4947, %v4937, 2102212464
        %v4950 = vsel %vm4946, %v4934, %v4949
        %v4951 = vsel %vm4945, %v4948, %v4950
        %v4952 = vsel %vm4944, %v4931, %v4934
        %v4953 = vsel %vm4947, %v4940, 920167782
        %v4954 = vsel %vm4946, %v4937, %v4953
        %v4955 = vsel %vm4945, %v4952, %v4954
        %v4956 = vsel %vm4944, %v4934, %v4937
        %v4957 = vsel %vm4947, %v4943, 1326507024
        %v4958 = vsel %vm4946, %v4940, %v4957
        %v4959 = vsel %vm4945, %v4956, %v4958
        %v4960 = vshll.u32 %v4920, 8
        %v4961 = vand.u32 %v4960, 65535
        %v4962 = vshrl.u32 %v4960, 16
        %v4963 = vand.u32 %v4959, 65535
        %v4964 = vshrl.u32 %v4959, 16
        %v4965 = vmul.u32 %v4961, %v4963
        %v4966 = vmul.u32 %v4961, %v4964
        %v4967 = vmul.u32 %v4962, %v4963
        %v4968 = vmul.u32 %v4962, %v4964
        %v4969 = vshll.u32 %v4966, 16
        %v4970 = vshrl.u32 %v4966, 16
        %v4971 = vshll.u32 %v4967, 16
        %v4972 = vshrl.u32 %v4967, 16
        %vm4973 = vc.u32 %v4965, %v4969
        %v4974 = vsel %vm4973, 1, 0
        %v4975 = vadd.s32 %v4965, %v4969
        %v4976 = vadd.s32 %v4968, %v4974
        %vm4977 = vc.u32 %v4975, %v4971
        %v4978 = vsel %vm4977, 1, 0
        %v4979 = vadd.s32 %v4975, %v4971
        %v4980 = vadd.s32 %v4976, %v4978
        %v4981 = vadd.s32 %v4980, %v4970
        %v4982 = vadd.s32 %v4981, %v4972
        %v4983 = vand.u32 %v4960, 65535
        %v4984 = vshrl.u32 %v4960, 16
        %v4985 = vand.u32 %v4955, 65535
        %v4986 = vshrl.u32 %v4955, 16
        %v4987 = vmul.u32 %v4983, %v4985
        %v4988 = vmul.u32 %v4983, %v4986
        %v4989 = vmul.u32 %v4984, %v4985
        %v4990 = vmul.u32 %v4984, %v4986
        %v4991 = vshll.u32 %v4988, 16
        %v4992 = vshrl.u32 %v4988, 16
        %v4993 = vshll.u32 %v4989, 16
        %v4994 = vshrl.u32 %v4989, 16
        %vm4995 = vc.u32 %v4987, %v4991
        %v4996 = vsel %vm4995, 1, 0
        %v4997 = vadd.s32 %v4987, %v4991
        %v4998 = vadd.s32 %v4990, %v4996
        %vm4999 = vc.u32 %v4997, %v4993
        %v5000 = vsel %vm4999, 1, 0
        %v5001 = vadd.s32 %v4997, %v4993
        %v5002 = vadd.s32 %v4998, %v5000
        %v5003 = vadd.s32 %v5002, %v4992
        %v5004 = vadd.s32 %v5003, %v4994
        %v5005 = vmul.u32 %v4960, %v4951
        %v5006 = vadd.s32 %v4982, %v5001
        %vm5007 = vc.u32 %v4982, %v5001
        %v5008 = vadd.s32 %v5004, 1
        %v5009 = vsel %vm5007, %v5008, %v5004
        %v5010 = vadd.s32 %v5005, %v5009
        %v5011 = vadd.s32 %v5010, 536870912
        %v5012 = vshrl.u32 %v5011, 30
        %v5013 = vshll.u32 %v5012, 30
        %v5014 = vsub.s32 %v5010, %v5013
        %vm5015 = vcmp.lt.s32.totalorder %v5014, 0
        %v5016 = vsub.s32 0, %v5014
        %v5017 = vsel %vm5015, %v5016, %v5014
        %v5018 = vclz %v5017
        %v5019 = vsub.s32 %v5018, 2
        %vm5020 = vcmp.gt.s32.totalorder 0, %v5019
        %v5021 = vsel %vm5020, 0, %v5019
        %v5022 = vsub.s32 32, %v5021
        %v5023 = vshll.u32 %v5014, %v5021
        %v5024 = vshrl.u32 %v5006, %v5022
        %v5025 = vor.u32 %v5023, %v5024
        %v5026 = vsub.s32 4294967266, %v5021
        %v5027 = vadd.s32 %v5026, 127
        %v5028 = vshll.u32 %v5027, 23
        %v5029 = vor.u32 4788187, %v5028
        %v5030 = vand.u32 2147483647, %v5029
        %v5032 = vcvt.s32.f32 %v5025
        %v5033 = vmul.f32 %v5032, %v5030
        %v5034 = vxor.u32 %v5033, 2147483648
        %v5035 = vsel %vm4914, %v5034, %v5033
        %v5036 = vsub.s32 4, %v5012
        %v5037 = vsel %vm4914, %v5036, %v5012
        %v5038 = vsel %vm4913, %v722, %v5035
        %v5039 = vsel %vm4913, 0, %v5037
        %v5040 = vmul.f32 %v5038, %v5038
        %v5041 = vmul.f32 %v5040, -0.001358992
        %v5042 = vadd.f32 %v5041, 0.041655596
        %v5043 = vmul.f32 %v5040, %v5042
        %v5044 = vadd.f32 %v5043, -0.4999988
        %v5045 = vmul.f32 %v5040, %v5044
        %v5046 = vadd.f32 1.0, %v5045
        %v5047 = vmul.f32 %v5038, %v5038
        %v5048 = vmul.f32 %v5047, -0.00019511016
        %v5049 = vadd.f32 %v5048, 0.008332121
        %v5050 = vmul.f32 %v5047, %v5049
        %v5051 = vadd.f32 %v5050, -0.16666654
        %v5052 = vmul.f32 %v5047, %v5051
        %v5053 = vadd.f32 %v5052, 1.0
        %v5054 = vmul.f32 %v5053, %v5038
        %vm5055 = vweird.f32 %v722
        %v5056 = vadd.s32 %v5039, 3
        %v5057 = vand.u32 %v5056, 3
        %vm5058 = vcmp.lt.s32.totalorder %v5057, 2
        %vm5059 = vcmp.eq.s32.totalorder %v5057, 0
        %v5060 = vxor.u32 %v5054, 2147483648
        %v5061 = vsel %vm5059, %v5046, %v5060
        %vm5062 = vcmp.eq.s32.totalorder %v5057, 2
        %v5063 = vxor.u32 %v5046, 2147483648
        %v5064 = vsel %vm5062, %v5063, %v5054
        %v5065 = vsel %vm5058, %v5061, %v5064
        %v5066 = vsel %vm5055, nan, %v5065
        %v5067 = vand.u32 2147483647, %v723
        %vm5068 = vcmp.le.f32.partialorder %v5067, 0.7853982
        %vm5069 = vcmp.lt.s32.totalorder %v723, 0
        %v5070 = vand.u32 %v723, 2139095040
        %v5071 = vshrl.u32 %v5070, 23
        %v5072 = vsub.s32 %v5071, 127
        %v5073 = vand.u32 2147483647, %v723
        %v5074 = vand.u32 %v5073, 8388607
        %v5075 = vor.u32 %v5074, 8388608
        %v5076 = vsub.s32 0, %v5075
        %v5077 = vadd.s32 %v5072, 1
        %vm5078 = vcmp.gt.s32.totalorder %v5077, 0
        %v5079 = vsel %vm5078, %v5077, 0
        %v5080 = vshrl.u32 %v5079, 5
        %v5081 = vand.u32 %v5079, 31
        %v5082 = vsub.s32 32, %v5081
        %v5083 = vshrl.u32 683565275, %v5082
        %v5084 = vshll.u32 683565275, %v5081
        %v5085 = vshrl.u32 2475754826, %v5082
        %v5086 = vor.u32 %v5084, %v5085
        %v5087 = vshll.u32 2475754826, %v5081
        %v5088 = vshrl.u32 2131351028, %v5082
        %v5089 = vor.u32 %v5087, %v5088
        %v5090 = vshll.u32 2131351028, %v5081
        %v5091 = vshrl.u32 2102212464, %v5082
        %v5092 = vor.u32 %v5090, %v5091
        %v5093 = vshll.u32 2102212464, %v5081
        %v5094 = vshrl.u32 920167782, %v5082
        %v5095 = vor.u32 %v5093, %v5094
        %v5096 = vshll.u32 920167782, %v5081
        %v5097 = vshrl.u32 1326507024, %v5082
        %v5098 = vor.u32 %v5096, %v5097
        %vm5099 = vcmp.lt.s32.totalorder %v5080, 1
        %vm5100 = vcmp.lt.s32.totalorder %v5080, 2
        %vm5101 = vcmp.lt.s32.totalorder %v5080, 3
        %vm5102 = vcmp.lt.s32.totalorder %v5080, 4
        %v5103 = vsel %vm5099, %v5083, %v5086
        %v5104 = vsel %vm5102, %v5092, 2102212464
        %v5105 = vsel %vm5101, %v5089, %v5104
        %v5106 = vsel %vm5100, %v5103, %v5105
        %v5107 = vsel %vm5099, %v5086, %v5089
        %v5108 = vsel %vm5102, %v5095, 920167782
        %v5109 = vsel %vm5101, %v5092, %v5108
        %v5110 = vsel %vm5100, %v5107, %v5109
        %v5111 = vsel %vm5099, %v5089, %v5092
        %v5112 = vsel %vm5102, %v5098, 1326507024
        %v5113 = vsel %vm5101, %v5095, %v5112
        %v5114 = vsel %vm5100, %v5111, %v5113
        %v5115 = vshll.u32 %v5075, 8
        %v5116 = vand.u32 %v5115, 65535
        %v5117 = vshrl.u32 %v5115, 16
        %v5118 = vand.u32 %v5114, 65535
        %v5119 = vshrl.u32 %v5114, 16
        %v5120 = vmul.u32 %v5116, %v5118
        %v5121 = vmul.u32 %v5116, %v5119
        %v5122 = vmul.u32 %v5117, %v5118
        %v5123 = vmul.u32 %v5117, %v5119
        %v5124 = vshll.u32 %v5121, 16
        %v5125 = vshrl.u32 %v5121, 16
        %v5126 = vshll.u32 %v5122, 16
        %v5127 = vshrl.u32 %v5122, 16
        %vm5128 = vc.u32 %v5120, %v5124
        %v5129 = vsel %vm5128, 1, 0
        %v5130 = vadd.s32 %v5120, %v5124
        %v5131 = vadd.s32 %v5123, %v5129
        %vm5132 = vc.u32 %v5130, %v5126
        %v5133 = vsel %vm5132, 1, 0
        %v5134 = vadd.s32 %v5130, %v5126
        %v5135 = vadd.s32 %v5131, %v5133
        %v5136 = vadd.s32 %v5135, %v5125
        %v5137 = vadd.s32 %v5136, %v5127
        %v5138 = vand.u32 %v5115, 65535
        %v5139 = vshrl.u32 %v5115, 16
        %v5140 = vand.u32 %v5110, 65535
        %v5141 = vshrl.u32 %v5110, 16
        %v5142 = vmul.u32 %v5138, %v5140
        %v5143 = vmul.u32 %v5138, %v5141
        %v5144 = vmul.u32 %v5139, %v5140
        %v5145 = vmul.u32 %v5139, %v5141
        %v5146 = vshll.u32 %v5143, 16
        %v5147 = vshrl.u32 %v5143, 16
        %v5148 = vshll.u32 %v5144, 16
        %v5149 = vshrl.u32 %v5144, 16
        %vm5150 = vc.u32 %v5142, %v5146
        %v5151 = vsel %vm5150, 1, 0
        %v5152 = vadd.s32 %v5142, %v5146
        %v5153 = vadd.s32 %v5145, %v5151
        %vm5154 = vc.u32 %v5152, %v5148
        %v5155 = vsel %vm5154, 1, 0
        %v5156 = vadd.s32 %v5152, %v5148
        %v5157 = vadd.s32 %v5153, %v5155
        %v5158 = vadd.s32 %v5157, %v5147
        %v5159 = vadd.s32 %v5158, %v5149
        %v5160 = vmul.u32 %v5115, %v5106
        %v5161 = vadd.s32 %v5137, %v5156
        %vm5162 = vc.u32 %v5137, %v5156
        %v5163 = vadd.s32 %v5159, 1
        %v5164 = vsel %vm5162, %v5163, %v5159
        %v5165 = vadd.s32 %v5160, %v5164
        %v5166 = vadd.s32 %v5165, 536870912
        %v5167 = vshrl.u32 %v5166, 30
        %v5168 = vshll.u32 %v5167, 30
        %v5169 = vsub.s32 %v5165, %v5168
        %vm5170 = vcmp.lt.s32.totalorder %v5169, 0
        %v5171 = vsub.s32 0, %v5169
        %v5172 = vsel %vm5170, %v5171, %v5169
        %v5173 = vclz %v5172
        %v5174 = vsub.s32 %v5173, 2
        %vm5175 = vcmp.gt.s32.totalorder 0, %v5174
        %v5176 = vsel %vm5175, 0, %v5174
        %v5177 = vsub.s32 32, %v5176
        %v5178 = vshll.u32 %v5169, %v5176
        %v5179 = vshrl.u32 %v5161, %v5177
        %v5180 = vor.u32 %v5178, %v5179
        %v5181 = vsub.s32 4294967266, %v5176
        %v5182 = vadd.s32 %v5181, 127
        %v5183 = vshll.u32 %v5182, 23
        %v5184 = vor.u32 4788187, %v5183
        %v5185 = vand.u32 2147483647, %v5184
        %v5187 = vcvt.s32.f32 %v5180
        %v5188 = vmul.f32 %v5187, %v5185
        %v5189 = vxor.u32 %v5188, 2147483648
        %v5190 = vsel %vm5069, %v5189, %v5188
        %v5191 = vsub.s32 4, %v5167
        %v5192 = vsel %vm5069, %v5191, %v5167
        %v5193 = vsel %vm5068, %v723, %v5190
        %v5194 = vsel %vm5068, 0, %v5192
        %v5195 = vmul.f32 %v5193, %v5193
        %v5196 = vmul.f32 %v5195, -0.001358992
        %v5197 = vadd.f32 %v5196, 0.041655596
        %v5198 = vmul.f32 %v5195, %v5197
        %v5199 = vadd.f32 %v5198, -0.4999988
        %v5200 = vmul.f32 %v5195, %v5199
        %v5201 = vadd.f32 1.0, %v5200
        %v5202 = vmul.f32 %v5193, %v5193
        %v5203 = vmul.f32 %v5202, -0.00019511016
        %v5204 = vadd.f32 %v5203, 0.008332121
        %v5205 = vmul.f32 %v5202, %v5204
        %v5206 = vadd.f32 %v5205, -0.16666654
        %v5207 = vmul.f32 %v5202, %v5206
        %v5208 = vadd.f32 %v5207, 1.0
        %v5209 = vmul.f32 %v5208, %v5193
        %vm5210 = vweird.f32 %v723
        %v5211 = vadd.s32 %v5194, 3
        %v5212 = vand.u32 %v5211, 3
        %vm5213 = vcmp.lt.s32.totalorder %v5212, 2
        %vm5214 = vcmp.eq.s32.totalorder %v5212, 0
        %v5215 = vxor.u32 %v5209, 2147483648
        %v5216 = vsel %vm5214, %v5201, %v5215
        %vm5217 = vcmp.eq.s32.totalorder %v5212, 2
        %v5218 = vxor.u32 %v5201, 2147483648
        %v5219 = vsel %vm5217, %v5218, %v5209
        %v5220 = vsel %vm5213, %v5216, %v5219
        %v5221 = vsel %vm5210, nan, %v5220
        %v5222 = vand.u32 2147483647, %v724
        %vm5223 = vcmp.le.f32.partialorder %v5222, 0.7853982
        %vm5224 = vcmp.lt.s32.totalorder %v724, 0
        %v5225 = vand.u32 %v724, 2139095040
        %v5226 = vshrl.u32 %v5225, 23
        %v5227 = vsub.s32 %v5226, 127
        %v5228 = vand.u32 2147483647, %v724
        %v5229 = vand.u32 %v5228, 8388607
        %v5230 = vor.u32 %v5229, 8388608
        %v5231 = vsub.s32 0, %v5230
        %v5232 = vadd.s32 %v5227, 1
        %vm5233 = vcmp.gt.s32.totalorder %v5232, 0
        %v5234 = vsel %vm5233, %v5232, 0
        %v5235 = vshrl.u32 %v5234, 5
        %v5236 = vand.u32 %v5234, 31
        %v5237 = vsub.s32 32, %v5236
        %v5238 = vshrl.u32 683565275, %v5237
        %v5239 = vshll.u32 683565275, %v5236
        %v5240 = vshrl.u32 2475754826, %v5237
        %v5241 = vor.u32 %v5239, %v5240
        %v5242 = vshll.u32 2475754826, %v5236
        %v5243 = vshrl.u32 2131351028, %v5237
        %v5244 = vor.u32 %v5242, %v5243
        %v5245 = vshll.u32 2131351028, %v5236
        %v5246 = vshrl.u32 2102212464, %v5237
        %v5247 = vor.u32 %v5245, %v5246
        %v5248 = vshll.u32 2102212464, %v5236
        %v5249 = vshrl.u32 920167782, %v5237
        %v5250 = vor.u32 %v5248, %v5249
        %v5251 = vshll.u32 920167782, %v5236
        %v5252 = vshrl.u32 1326507024, %v5237
        %v5253 = vor.u32 %v5251, %v5252
        %vm5254 = vcmp.lt.s32.totalorder %v5235, 1
        %vm5255 = vcmp.lt.s32.totalorder %v5235, 2
        %vm5256 = vcmp.lt.s32.totalorder %v5235, 3
        %vm5257 = vcmp.lt.s32.totalorder %v5235, 4
        %v5258 = vsel %vm5254, %v5238, %v5241
        %v5259 = vsel %vm5257, %v5247, 2102212464
        %v5260 = vsel %vm5256, %v5244, %v5259
        %v5261 = vsel %vm5255, %v5258, %v5260
        %v5262 = vsel %vm5254, %v5241, %v5244
        %v5263 = vsel %vm5257, %v5250, 920167782
        %v5264 = vsel %vm5256, %v5247, %v5263
        %v5265 = vsel %vm5255, %v5262, %v5264
        %v5266 = vsel %vm5254, %v5244, %v5247
        %v5267 = vsel %vm5257, %v5253, 1326507024
        %v5268 = vsel %vm5256, %v5250, %v5267
        %v5269 = vsel %vm5255, %v5266, %v5268
        %v5270 = vshll.u32 %v5230, 8
        %v5271 = vand.u32 %v5270, 65535
        %v5272 = vshrl.u32 %v5270, 16
        %v5273 = vand.u32 %v5269, 65535
        %v5274 = vshrl.u32 %v5269, 16
        %v5275 = vmul.u32 %v5271, %v5273
        %v5276 = vmul.u32 %v5271, %v5274
        %v5277 = vmul.u32 %v5272, %v5273
        %v5278 = vmul.u32 %v5272, %v5274
        %v5279 = vshll.u32 %v5276, 16
        %v5280 = vshrl.u32 %v5276, 16
        %v5281 = vshll.u32 %v5277, 16
        %v5282 = vshrl.u32 %v5277, 16
        %vm5283 = vc.u32 %v5275, %v5279
        %v5284 = vsel %vm5283, 1, 0
        %v5285 = vadd.s32 %v5275, %v5279
        %v5286 = vadd.s32 %v5278, %v5284
        %vm5287 = vc.u32 %v5285, %v5281
        %v5288 = vsel %vm5287, 1, 0
        %v5289 = vadd.s32 %v5285, %v5281
        %v5290 = vadd.s32 %v5286, %v5288
        %v5291 = vadd.s32 %v5290, %v5280
        %v5292 = vadd.s32 %v5291, %v5282
        %v5293 = vand.u32 %v5270, 65535
        %v5294 = vshrl.u32 %v5270, 16
        %v5295 = vand.u32 %v5265, 65535
        %v5296 = vshrl.u32 %v5265, 16
        %v5297 = vmul.u32 %v5293, %v5295
        %v5298 = vmul.u32 %v5293, %v5296
        %v5299 = vmul.u32 %v5294, %v5295
        %v5300 = vmul.u32 %v5294, %v5296
        %v5301 = vshll.u32 %v5298, 16
        %v5302 = vshrl.u32 %v5298, 16
        %v5303 = vshll.u32 %v5299, 16
        %v5304 = vshrl.u32 %v5299, 16
        %vm5305 = vc.u32 %v5297, %v5301
        %v5306 = vsel %vm5305, 1, 0
        %v5307 = vadd.s32 %v5297, %v5301
        %v5308 = vadd.s32 %v5300, %v5306
        %vm5309 = vc.u32 %v5307, %v5303
        %v5310 = vsel %vm5309, 1, 0
        %v5311 = vadd.s32 %v5307, %v5303
        %v5312 = vadd.s32 %v5308, %v5310
        %v5313 = vadd.s32 %v5312, %v5302
        %v5314 = vadd.s32 %v5313, %v5304
        %v5315 = vmul.u32 %v5270, %v5261
        %v5316 = vadd.s32 %v5292, %v5311
        %vm5317 = vc.u32 %v5292, %v5311
        %v5318 = vadd.s32 %v5314, 1
        %v5319 = vsel %vm5317, %v5318, %v5314
        %v5320 = vadd.s32 %v5315, %v5319
        %v5321 = vadd.s32 %v5320, 536870912
        %v5322 = vshrl.u32 %v5321, 30
        %v5323 = vshll.u32 %v5322, 30
        %v5324 = vsub.s32 %v5320, %v5323
        %vm5325 = vcmp.lt.s32.totalorder %v5324, 0
        %v5326 = vsub.s32 0, %v5324
        %v5327 = vsel %vm5325, %v5326, %v5324
        %v5328 = vclz %v5327
        %v5329 = vsub.s32 %v5328, 2
        %vm5330 = vcmp.gt.s32.totalorder 0, %v5329
        %v5331 = vsel %vm5330, 0, %v5329
        %v5332 = vsub.s32 32, %v5331
        %v5333 = vshll.u32 %v5324, %v5331
        %v5334 = vshrl.u32 %v5316, %v5332
        %v5335 = vor.u32 %v5333, %v5334
        %v5336 = vsub.s32 4294967266, %v5331
        %v5337 = vadd.s32 %v5336, 127
        %v5338 = vshll.u32 %v5337, 23
        %v5339 = vor.u32 4788187, %v5338
        %v5340 = vand.u32 2147483647, %v5339
        %v5342 = vcvt.s32.f32 %v5335
        %v5343 = vmul.f32 %v5342, %v5340
        %v5344 = vxor.u32 %v5343, 2147483648
        %v5345 = vsel %vm5224, %v5344, %v5343
        %v5346 = vsub.s32 4, %v5322
        %v5347 = vsel %vm5224, %v5346, %v5322
        %v5348 = vsel %vm5223, %v724, %v5345
        %v5349 = vsel %vm5223, 0, %v5347
        %v5350 = vmul.f32 %v5348, %v5348
        %v5351 = vmul.f32 %v5350, -0.001358992
        %v5352 = vadd.f32 %v5351, 0.041655596
        %v5353 = vmul.f32 %v5350, %v5352
        %v5354 = vadd.f32 %v5353, -0.4999988
        %v5355 = vmul.f32 %v5350, %v5354
        %v5356 = vadd.f32 1.0, %v5355
        %v5357 = vmul.f32 %v5348, %v5348
        %v5358 = vmul.f32 %v5357, -0.00019511016
        %v5359 = vadd.f32 %v5358, 0.008332121
        %v5360 = vmul.f32 %v5357, %v5359
        %v5361 = vadd.f32 %v5360, -0.16666654
        %v5362 = vmul.f32 %v5357, %v5361
        %v5363 = vadd.f32 %v5362, 1.0
        %v5364 = vmul.f32 %v5363, %v5348
        %vm5365 = vweird.f32 %v724
        %v5366 = vadd.s32 %v5349, 3
        %v5367 = vand.u32 %v5366, 3
        %vm5368 = vcmp.lt.s32.totalorder %v5367, 2
        %vm5369 = vcmp.eq.s32.totalorder %v5367, 0
        %v5370 = vxor.u32 %v5364, 2147483648
        %v5371 = vsel %vm5369, %v5356, %v5370
        %vm5372 = vcmp.eq.s32.totalorder %v5367, 2
        %v5373 = vxor.u32 %v5356, 2147483648
        %v5374 = vsel %vm5372, %v5373, %v5364
        %v5375 = vsel %vm5368, %v5371, %v5374
        %v5376 = vsel %vm5365, nan, %v5375
        %v5377 = vand.u32 2147483647, %v725
        %vm5378 = vcmp.le.f32.partialorder %v5377, 0.7853982
        %vm5379 = vcmp.lt.s32.totalorder %v725, 0
        %v5380 = vand.u32 %v725, 2139095040
        %v5381 = vshrl.u32 %v5380, 23
        %v5382 = vsub.s32 %v5381, 127
        %v5383 = vand.u32 2147483647, %v725
        %v5384 = vand.u32 %v5383, 8388607
        %v5385 = vor.u32 %v5384, 8388608
        %v5386 = vsub.s32 0, %v5385
        %v5387 = vadd.s32 %v5382, 1
        %vm5388 = vcmp.gt.s32.totalorder %v5387, 0
        %v5389 = vsel %vm5388, %v5387, 0
        %v5390 = vshrl.u32 %v5389, 5
        %v5391 = vand.u32 %v5389, 31
        %v5392 = vsub.s32 32, %v5391
        %v5393 = vshrl.u32 683565275, %v5392
        %v5394 = vshll.u32 683565275, %v5391
        %v5395 = vshrl.u32 2475754826, %v5392
        %v5396 = vor.u32 %v5394, %v5395
        %v5397 = vshll.u32 2475754826, %v5391
        %v5398 = vshrl.u32 2131351028, %v5392
        %v5399 = vor.u32 %v5397, %v5398
        %v5400 = vshll.u32 2131351028, %v5391
        %v5401 = vshrl.u32 2102212464, %v5392
        %v5402 = vor.u32 %v5400, %v5401
        %v5403 = vshll.u32 2102212464, %v5391
        %v5404 = vshrl.u32 920167782, %v5392
        %v5405 = vor.u32 %v5403, %v5404
        %v5406 = vshll.u32 920167782, %v5391
        %v5407 = vshrl.u32 1326507024, %v5392
        %v5408 = vor.u32 %v5406, %v5407
        %vm5409 = vcmp.lt.s32.totalorder %v5390, 1
        %vm5410 = vcmp.lt.s32.totalorder %v5390, 2
        %vm5411 = vcmp.lt.s32.totalorder %v5390, 3
        %vm5412 = vcmp.lt.s32.totalorder %v5390, 4
        %v5413 = vsel %vm5409, %v5393, %v5396
        %v5414 = vsel %vm5412, %v5402, 2102212464
        %v5415 = vsel %vm5411, %v5399, %v5414
        %v5416 = vsel %vm5410, %v5413, %v5415
        %v5417 = vsel %vm5409, %v5396, %v5399
        %v5418 = vsel %vm5412, %v5405, 920167782
        %v5419 = vsel %vm5411, %v5402, %v5418
        %v5420 = vsel %vm5410, %v5417, %v5419
        %v5421 = vsel %vm5409, %v5399, %v5402
        %v5422 = vsel %vm5412, %v5408, 1326507024
        %v5423 = vsel %vm5411, %v5405, %v5422
        %v5424 = vsel %vm5410, %v5421, %v5423
        %v5425 = vshll.u32 %v5385, 8
        %v5426 = vand.u32 %v5425, 65535
        %v5427 = vshrl.u32 %v5425, 16
        %v5428 = vand.u32 %v5424, 65535
        %v5429 = vshrl.u32 %v5424, 16
        %v5430 = vmul.u32 %v5426, %v5428
        %v5431 = vmul.u32 %v5426, %v5429
        %v5432 = vmul.u32 %v5427, %v5428
        %v5433 = vmul.u32 %v5427, %v5429
        %v5434 = vshll.u32 %v5431, 16
        %v5435 = vshrl.u32 %v5431, 16
        %v5436 = vshll.u32 %v5432, 16
        %v5437 = vshrl.u32 %v5432, 16
        %vm5438 = vc.u32 %v5430, %v5434
        %v5439 = vsel %vm5438, 1, 0
        %v5440 = vadd.s32 %v5430, %v5434
        %v5441 = vadd.s32 %v5433, %v5439
        %vm5442 = vc.u32 %v5440, %v5436
        %v5443 = vsel %vm5442, 1, 0
        %v5444 = vadd.s32 %v5440, %v5436
        %v5445 = vadd.s32 %v5441, %v5443
        %v5446 = vadd.s32 %v5445, %v5435
        %v5447 = vadd.s32 %v5446, %v5437
        %v5448 = vand.u32 %v5425, 65535
        %v5449 = vshrl.u32 %v5425, 16
        %v5450 = vand.u32 %v5420, 65535
        %v5451 = vshrl.u32 %v5420, 16
        %v5452 = vmul.u32 %v5448, %v5450
        %v5453 = vmul.u32 %v5448, %v5451
        %v5454 = vmul.u32 %v5449, %v5450
        %v5455 = vmul.u32 %v5449, %v5451
        %v5456 = vshll.u32 %v5453, 16
        %v5457 = vshrl.u32 %v5453, 16
        %v5458 = vshll.u32 %v5454, 16
        %v5459 = vshrl.u32 %v5454, 16
        %vm5460 = vc.u32 %v5452, %v5456
        %v5461 = vsel %vm5460, 1, 0
        %v5462 = vadd.s32 %v5452, %v5456
        %v5463 = vadd.s32 %v5455, %v5461
        %vm5464 = vc.u32 %v5462, %v5458
        %v5465 = vsel %vm5464, 1, 0
        %v5466 = vadd.s32 %v5462, %v5458
        %v5467 = vadd.s32 %v5463, %v5465
        %v5468 = vadd.s32 %v5467, %v5457
        %v5469 = vadd.s32 %v5468, %v5459
        %v5470 = vmul.u32 %v5425, %v5416
        %v5471 = vadd.s32 %v5447, %v5466
        %vm5472 = vc.u32 %v5447, %v5466
        %v5473 = vadd.s32 %v5469, 1
        %v5474 = vsel %vm5472, %v5473, %v5469
        %v5475 = vadd.s32 %v5470, %v5474
        %v5476 = vadd.s32 %v5475, 536870912
        %v5477 = vshrl.u32 %v5476, 30
        %v5478 = vshll.u32 %v5477, 30
        %v5479 = vsub.s32 %v5475, %v5478
        %vm5480 = vcmp.lt.s32.totalorder %v5479, 0
        %v5481 = vsub.s32 0, %v5479
        %v5482 = vsel %vm5480, %v5481, %v5479
        %v5483 = vclz %v5482
        %v5484 = vsub.s32 %v5483, 2
        %vm5485 = vcmp.gt.s32.totalorder 0, %v5484
        %v5486 = vsel %vm5485, 0, %v5484
        %v5487 = vsub.s32 32, %v5486
        %v5488 = vshll.u32 %v5479, %v5486
        %v5489 = vshrl.u32 %v5471, %v5487
        %v5490 = vor.u32 %v5488, %v5489
        %v5491 = vsub.s32 4294967266, %v5486
        %v5492 = vadd.s32 %v5491, 127
        %v5493 = vshll.u32 %v5492, 23
        %v5494 = vor.u32 4788187, %v5493
        %v5495 = vand.u32 2147483647, %v5494
        %v5497 = vcvt.s32.f32 %v5490
        %v5498 = vmul.f32 %v5497, %v5495
        %v5499 = vxor.u32 %v5498, 2147483648
        %v5500 = vsel %vm5379, %v5499, %v5498
        %v5501 = vsub.s32 4, %v5477
        %v5502 = vsel %vm5379, %v5501, %v5477
        %v5503 = vsel %vm5378, %v725, %v5500
        %v5504 = vsel %vm5378, 0, %v5502
        %v5505 = vmul.f32 %v5503, %v5503
        %v5506 = vmul.f32 %v5505, -0.001358992
        %v5507 = vadd.f32 %v5506, 0.041655596
        %v5508 = vmul.f32 %v5505, %v5507
        %v5509 = vadd.f32 %v5508, -0.4999988
        %v5510 = vmul.f32 %v5505, %v5509
        %v5511 = vadd.f32 1.0, %v5510
        %v5512 = vmul.f32 %v5503, %v5503
        %v5513 = vmul.f32 %v5512, -0.00019511016
        %v5514 = vadd.f32 %v5513, 0.008332121
        %v5515 = vmul.f32 %v5512, %v5514
        %v5516 = vadd.f32 %v5515, -0.16666654
        %v5517 = vmul.f32 %v5512, %v5516
        %v5518 = vadd.f32 %v5517, 1.0
        %v5519 = vmul.f32 %v5518, %v5503
        %vm5520 = vweird.f32 %v725
        %v5521 = vadd.s32 %v5504, 3
        %v5522 = vand.u32 %v5521, 3
        %vm5523 = vcmp.lt.s32.totalorder %v5522, 2
        %vm5524 = vcmp.eq.s32.totalorder %v5522, 0
        %v5525 = vxor.u32 %v5519, 2147483648
        %v5526 = vsel %vm5524, %v5511, %v5525
        %vm5527 = vcmp.eq.s32.totalorder %v5522, 2
        %v5528 = vxor.u32 %v5511, 2147483648
        %v5529 = vsel %vm5527, %v5528, %v5519
        %v5530 = vsel %vm5523, %v5526, %v5529
        %v5531 = vsel %vm5520, nan, %v5530
        %v5532 = vand.u32 2147483647, %v726
        %vm5533 = vcmp.le.f32.partialorder %v5532, 0.7853982
        %vm5534 = vcmp.lt.s32.totalorder %v726, 0
        %v5535 = vand.u32 %v726, 2139095040
        %v5536 = vshrl.u32 %v5535, 23
        %v5537 = vsub.s32 %v5536, 127
        %v5538 = vand.u32 2147483647, %v726
        %v5539 = vand.u32 %v5538, 8388607
        %v5540 = vor.u32 %v5539, 8388608
        %v5541 = vsub.s32 0, %v5540
        %v5542 = vadd.s32 %v5537, 1
        %vm5543 = vcmp.gt.s32.totalorder %v5542, 0
        %v5544 = vsel %vm5543, %v5542, 0
        %v5545 = vshrl.u32 %v5544, 5
        %v5546 = vand.u32 %v5544, 31
        %v5547 = vsub.s32 32, %v5546
        %v5548 = vshrl.u32 683565275, %v5547
        %v5549 = vshll.u32 683565275, %v5546
        %v5550 = vshrl.u32 2475754826, %v5547
        %v5551 = vor.u32 %v5549, %v5550
        %v5552 = vshll.u32 2475754826, %v5546
        %v5553 = vshrl.u32 2131351028, %v5547
        %v5554 = vor.u32 %v5552, %v5553
        %v5555 = vshll.u32 2131351028, %v5546
        %v5556 = vshrl.u32 2102212464, %v5547
        %v5557 = vor.u32 %v5555, %v5556
        %v5558 = vshll.u32 2102212464, %v5546
        %v5559 = vshrl.u32 920167782, %v5547
        %v5560 = vor.u32 %v5558, %v5559
        %v5561 = vshll.u32 920167782, %v5546
        %v5562 = vshrl.u32 1326507024, %v5547
        %v5563 = vor.u32 %v5561, %v5562
        %vm5564 = vcmp.lt.s32.totalorder %v5545, 1
        %vm5565 = vcmp.lt.s32.totalorder %v5545, 2
        %vm5566 = vcmp.lt.s32.totalorder %v5545, 3
        %vm5567 = vcmp.lt.s32.totalorder %v5545, 4
        %v5568 = vsel %vm5564, %v5548, %v5551
        %v5569 = vsel %vm5567, %v5557, 2102212464
        %v5570 = vsel %vm5566, %v5554, %v5569
        %v5571 = vsel %vm5565, %v5568, %v5570
        %v5572 = vsel %vm5564, %v5551, %v5554
        %v5573 = vsel %vm5567, %v5560, 920167782
        %v5574 = vsel %vm5566, %v5557, %v5573
        %v5575 = vsel %vm5565, %v5572, %v5574
        %v5576 = vsel %vm5564, %v5554, %v5557
        %v5577 = vsel %vm5567, %v5563, 1326507024
        %v5578 = vsel %vm5566, %v5560, %v5577
        %v5579 = vsel %vm5565, %v5576, %v5578
        %v5580 = vshll.u32 %v5540, 8
        %v5581 = vand.u32 %v5580, 65535
        %v5582 = vshrl.u32 %v5580, 16
        %v5583 = vand.u32 %v5579, 65535
        %v5584 = vshrl.u32 %v5579, 16
        %v5585 = vmul.u32 %v5581, %v5583
        %v5586 = vmul.u32 %v5581, %v5584
        %v5587 = vmul.u32 %v5582, %v5583
        %v5588 = vmul.u32 %v5582, %v5584
        %v5589 = vshll.u32 %v5586, 16
        %v5590 = vshrl.u32 %v5586, 16
        %v5591 = vshll.u32 %v5587, 16
        %v5592 = vshrl.u32 %v5587, 16
        %vm5593 = vc.u32 %v5585, %v5589
        %v5594 = vsel %vm5593, 1, 0
        %v5595 = vadd.s32 %v5585, %v5589
        %v5596 = vadd.s32 %v5588, %v5594
        %vm5597 = vc.u32 %v5595, %v5591
        %v5598 = vsel %vm5597, 1, 0
        %v5599 = vadd.s32 %v5595, %v5591
        %v5600 = vadd.s32 %v5596, %v5598
        %v5601 = vadd.s32 %v5600, %v5590
        %v5602 = vadd.s32 %v5601, %v5592
        %v5603 = vand.u32 %v5580, 65535
        %v5604 = vshrl.u32 %v5580, 16
        %v5605 = vand.u32 %v5575, 65535
        %v5606 = vshrl.u32 %v5575, 16
        %v5607 = vmul.u32 %v5603, %v5605
        %v5608 = vmul.u32 %v5603, %v5606
        %v5609 = vmul.u32 %v5604, %v5605
        %v5610 = vmul.u32 %v5604, %v5606
        %v5611 = vshll.u32 %v5608, 16
        %v5612 = vshrl.u32 %v5608, 16
        %v5613 = vshll.u32 %v5609, 16
        %v5614 = vshrl.u32 %v5609, 16
        %vm5615 = vc.u32 %v5607, %v5611
        %v5616 = vsel %vm5615, 1, 0
        %v5617 = vadd.s32 %v5607, %v5611
        %v5618 = vadd.s32 %v5610, %v5616
        %vm5619 = vc.u32 %v5617, %v5613
        %v5620 = vsel %vm5619, 1, 0
        %v5621 = vadd.s32 %v5617, %v5613
        %v5622 = vadd.s32 %v5618, %v5620
        %v5623 = vadd.s32 %v5622, %v5612
        %v5624 = vadd.s32 %v5623, %v5614
        %v5625 = vmul.u32 %v5580, %v5571
        %v5626 = vadd.s32 %v5602, %v5621
        %vm5627 = vc.u32 %v5602, %v5621
        %v5628 = vadd.s32 %v5624, 1
        %v5629 = vsel %vm5627, %v5628, %v5624
        %v5630 = vadd.s32 %v5625, %v5629
        %v5631 = vadd.s32 %v5630, 536870912
        %v5632 = vshrl.u32 %v5631, 30
        %v5633 = vshll.u32 %v5632, 30
        %v5634 = vsub.s32 %v5630, %v5633
        %vm5635 = vcmp.lt.s32.totalorder %v5634, 0
        %v5636 = vsub.s32 0, %v5634
        %v5637 = vsel %vm5635, %v5636, %v5634
        %v5638 = vclz %v5637
        %v5639 = vsub.s32 %v5638, 2
        %vm5640 = vcmp.gt.s32.totalorder 0, %v5639
        %v5641 = vsel %vm5640, 0, %v5639
        %v5642 = vsub.s32 32, %v5641
        %v5643 = vshll.u32 %v5634, %v5641
        %v5644 = vshrl.u32 %v5626, %v5642
        %v5645 = vor.u32 %v5643, %v5644
        %v5646 = vsub.s32 4294967266, %v5641
        %v5647 = vadd.s32 %v5646, 127
        %v5648 = vshll.u32 %v5647, 23
        %v5649 = vor.u32 4788187, %v5648
        %v5650 = vand.u32 2147483647, %v5649
        %v5652 = vcvt.s32.f32 %v5645
        %v5653 = vmul.f32 %v5652, %v5650
        %v5654 = vxor.u32 %v5653, 2147483648
        %v5655 = vsel %vm5534, %v5654, %v5653
        %v5656 = vsub.s32 4, %v5632
        %v5657 = vsel %vm5534, %v5656, %v5632
        %v5658 = vsel %vm5533, %v726, %v5655
        %v5659 = vsel %vm5533, 0, %v5657
        %v5660 = vmul.f32 %v5658, %v5658
        %v5661 = vmul.f32 %v5660, -0.001358992
        %v5662 = vadd.f32 %v5661, 0.041655596
        %v5663 = vmul.f32 %v5660, %v5662
        %v5664 = vadd.f32 %v5663, -0.4999988
        %v5665 = vmul.f32 %v5660, %v5664
        %v5666 = vadd.f32 1.0, %v5665
        %v5667 = vmul.f32 %v5658, %v5658
        %v5668 = vmul.f32 %v5667, -0.00019511016
        %v5669 = vadd.f32 %v5668, 0.008332121
        %v5670 = vmul.f32 %v5667, %v5669
        %v5671 = vadd.f32 %v5670, -0.16666654
        %v5672 = vmul.f32 %v5667, %v5671
        %v5673 = vadd.f32 %v5672, 1.0
        %v5674 = vmul.f32 %v5673, %v5658
        %vm5675 = vweird.f32 %v726
        %v5676 = vadd.s32 %v5659, 3
        %v5677 = vand.u32 %v5676, 3
        %vm5678 = vcmp.lt.s32.totalorder %v5677, 2
        %vm5679 = vcmp.eq.s32.totalorder %v5677, 0
        %v5680 = vxor.u32 %v5674, 2147483648
        %v5681 = vsel %vm5679, %v5666, %v5680
        %vm5682 = vcmp.eq.s32.totalorder %v5677, 2
        %v5683 = vxor.u32 %v5666, 2147483648
        %v5684 = vsel %vm5682, %v5683, %v5674
        %v5685 = vsel %vm5678, %v5681, %v5684
        %v5686 = vsel %vm5675, nan, %v5685
        %5687 = vst [vmem:[%s94] sm:$0xff] %v881
        %5688 = vst [vmem:[%s94 + $0x8] sm:$0xff] %v1036
        %5689 = vst [vmem:[%s94 + $0x10] sm:$0xff] %v1191
        %5690 = vst [vmem:[%s94 + $0x18] sm:$0xff] %v1346
        %5691 = vst [vmem:[%s94 + $0x20] sm:$0xff] %v1501
        %5692 = vst [vmem:[%s94 + $0x28] sm:$0xff] %v1656
        %5693 = vst [vmem:[%s94 + $0x30] sm:$0xff] %v1811
        %5694 = vst [vmem:[%s94 + $0x38] sm:$0xff] %v1966
        %5695 = vst [vmem:[%s94 + $0x40] sm:$0xff] %v2121
        %5696 = vst [vmem:[%s94 + $0x48] sm:$0xff] %v2276
        %5697 = vst [vmem:[%s94 + $0x50] sm:$0xff] %v2431
        %5698 = vst [vmem:[%s94 + $0x58] sm:$0xff] %v2586
        %5699 = vst [vmem:[%s94 + $0x60] sm:$0xff] %v2741
        %5700 = vst [vmem:[%s94 + $0x68] sm:$0xff] %v2896
        %5701 = vst [vmem:[%s94 + $0x70] sm:$0xff] %v3051
        %5702 = vst [vmem:[%s94 + $0x78] sm:$0xff] %v3206
        %5703 = vst [vmem:[%s94 + $0x80] sm:$0xf] %v3361
        %5704 = vst [vmem:[%s94 + $0x88] sm:$0xf] %v3516
        %5705 = vst [vmem:[%s94 + $0x90] sm:$0xf] %v3671
        %5706 = vst [vmem:[%s94 + $0x98] sm:$0xf] %v3826
        %5707 = vst [vmem:[%s94 + $0xa0] sm:$0xf] %v3981
        %5708 = vst [vmem:[%s94 + $0xa8] sm:$0xf] %v4136
        %5709 = vst [vmem:[%s94 + $0xb0] sm:$0xf] %v4291
        %5710 = vst [vmem:[%s94 + $0xb8] sm:$0xf] %v4446
        %5711 = vst [vmem:[%s94 + $0xc0] sm:$0xf] %v4601
        %5712 = vst [vmem:[%s94 + $0xc8] sm:$0xf] %v4756
        %5713 = vst [vmem:[%s94 + $0xd0] sm:$0xf] %v4911
        %5714 = vst [vmem:[%s94 + $0xd8] sm:$0xf] %v5066
        %5715 = vst [vmem:[%s94 + $0xe0] sm:$0xf] %v5221
        %5716 = vst [vmem:[%s94 + $0xe8] sm:$0xf] %v5376
        %5717 = vst [vmem:[%s94 + $0xf0] sm:$0xf] %v5531
        %5718 = vst [vmem:[%s94 + $0xf8] sm:$0xf] %v5686
        %s5719 = sand.u32 %s44, 1
        %s5720 = scalar_lea.sflag [#allocation3], %s5719
        %s5721 = sand.u32 %s44, 1
        %s5722 = smul.addr %s5721, 256
        %s5723 = scalar_lea.vmem [#allocation2], %s5722
        // Predicated region
        $region25: #{tpu_custom_call.1} parent=23 // pred_check
          %p5724 = pneg %p54
        $region26: #{tpu_custom_call.1} parent=23 // pred_check_branch
          %5726 = sbr.rel (%p5724) target = $region28
        $region27: #{tpu_custom_call.1} parent=23 // pred_region
          %s5727 = smul.u32 16, %s15
          %5729 = vsyncadd %s5720, 0
          %s5730 = smul.addr %s5727, 8
          %s5731 = scalar_lea.hbm %s1, %s5730
          %s5732 = sshll.u32 %s5723, 4
          %s5733 = int_to_ptr.vmem [resolvable:$true] %s5732
          %s5734 = sshll.u32 %s5731, 4
          %s5735 = int_to_ptr.hbm [resolvable:$true] %s5734
          %5740 = dma.vmem_to_hbm [thread:$0]  %s5733, 4096, %s5735, %s5720, 2048, 4096, 128
        $region28: #{tpu_custom_call.1} parent=23 // pred_fallthru
          _
      $region24: #{tpu_custom_call.1} parent=5 // pred_fallthru
        _
      %p5741 = scmp.le.s32.totalorder 2, %s10
      // Predicated region
      $region29: #{tpu_custom_call.1} parent=5 // pred_check
        %p5742 = pneg %p5741
      $region30: #{tpu_custom_call.1} parent=5 // pred_check_branch
        %5744 = sbr.rel (%p5742) target = $region32
      $region31: #{tpu_custom_call.1} parent=5 // pred_region
        %s5745 = ssub.s32 %s10, 2
        // Predicated region
        $region33: #{tpu_custom_call.1} parent=31 // pred_check
          %p5746 = pneg %p60
        $region34: #{tpu_custom_call.1} parent=31 // pred_check_branch
          %5748 = sbr.rel (%p5746) target = $region36
        $region35: #{tpu_custom_call.1} parent=31 // pred_region
          %s5749 = sand.u32 %s45, 1
          %s5750 = scalar_lea.sflag [#allocation3], %s5749
          %s5751 = sand.u32 %s45, 1
          %s5752 = smul.addr %s5751, 256
          %s5753 = scalar_lea.vmem [#allocation2], %s5752
          %5755 = dma.done %s5750, 4096
        $region36: #{tpu_custom_call.1} parent=31 // pred_fallthru
          _
      $region32: #{tpu_custom_call.1} parent=5 // pred_fallthru
        _
    $region6: #{tpu_custom_call.1} parent=1 // loop_footer
      %s14 = sadd.s32 1, %s10
    $region7: #{tpu_custom_call.1} parent=1 // loop_footer_branch
      %9 = sbr.rel target = $region3
    $region8: #{tpu_custom_call.1} parent=1 // loop_exit
      _
    %5756 = vsyncpa [#allocation3], 1
    %s5757 = scalar_lea.sflag [#allocation3], 1
    %5758 = vsyncpa %s5757, 1

</llo_original>
